<compile_context>
chip_gen: v7x
topology: tpu7x:2x2x1
jax: 0.10.0
libtpu: 0.0.40
codegen_flags: <defaults>
</compile_context>

<pallas_src>
import functools

import jax
import jax.numpy as jnp
from jax.experimental import pallas as pl
from jax.experimental.pallas import tpu as pltpu


def _conv3x3_im2col(xpad, wmat, H, W):
    """One 3x3 'same' conv as a SINGLE MXU matmul with contraction K = 9*C.

    xpad : (H+2, W+2, C) value with a zero halo already in place.
    wmat : (9*C, C) weight matrix, rows ordered (kh, kw, cin).
    Returns (H, W, C) float32; (H, W) are the M = H*W rows of the matmul.
    """
    taps = [xpad[kh:kh + H, kw:kw + W, :]
            for kh in range(3) for kw in range(3)]
    patches = jnp.concatenate(taps, axis=-1)          # (H, W, 9*C) im2col stack
    return jax.lax.dot_general(
        patches, wmat,
        dimension_numbers=(((2,), (0,)), ((), ())),
        preferred_element_type=jnp.float32)


def resblock_kernel(x_ref, w1_ref, w2_ref, b1_ref, b2_ref, out_ref, pad_ref):
    H, W, C = out_ref.shape
    cdt = pad_ref.dtype

    # --- in-kernel halo: zero ONLY the four 1-px border strips; the interior is
    #     always overwritten below (no full-buffer zero each step).
    zrow = jnp.zeros((1, W + 2, C), cdt)
    zcol = jnp.zeros((H, 1, C), cdt)
    pad_ref[0:1, :, :] = zrow
    pad_ref[H + 1:H + 2, :, :] = zrow
    pad_ref[1:H + 1, 0:1, :] = zcol
    pad_ref[1:H + 1, W + 1:W + 2, :] = zcol

    # Single fetch of the input tile; reused for the halo interior AND residual.
    xv = x_ref[...]
    pad_ref[1:H + 1, 1:W + 1, :] = xv

    # conv1 + bias + ReLU  (one im2col matmul, K = 9*C)
    h1 = _conv3x3_im2col(pad_ref[...], w1_ref[...], H, W) \
        + b1_ref[...].reshape(1, 1, C)
    h1 = jnp.maximum(h1, 0.0)

    # conv2: reuse the SAME halo scratch (borders still zero) -> the
    # intermediate is written to VMEM once and never round-trips through HBM.
    pad_ref[1:H + 1, 1:W + 1, :] = h1.astype(cdt)
    h2 = _conv3x3_im2col(pad_ref[...], w2_ref[...], H, W) \
        + b2_ref[...].reshape(1, 1, C)

    # residual + ReLU
    h2 = h2 + xv.astype(jnp.float32)
    out_ref[...] = jnp.maximum(h2, 0.0).astype(out_ref.dtype)


@functools.partial(jax.jit, static_argnames=("compute_dtype",))
def resblock_forward(x_nchw, w1_oihw, b1, w2_oihw, b2,
                     compute_dtype=jnp.float32):
    """NCHW / OIHW (PyTorch layout) wrapper around the NHWC Pallas kernel.

    compute_dtype=jnp.bfloat16 feeds bf16 operands to the MXU (f32
    accumulation; bias / residual / output stay f32).
    """
    x = jnp.transpose(x_nchw, (0, 2, 3, 1))                 # NCHW -> NHWC
    B, H, W, C = x.shape

    # OIHW -> (kh, kw, cin, cout) -> (9*C, C): row order (kh, kw, cin) matches
    # the kernel's im2col tap order, so each conv is ONE matmul with K = 9*C.
    w1m = jnp.transpose(w1_oihw, (2, 3, 1, 0)).reshape(9 * C, C).astype(compute_dtype)
    w2m = jnp.transpose(w2_oihw, (2, 3, 1, 0)).reshape(9 * C, C).astype(compute_dtype)
    b1_2d = b1.reshape(1, C).astype(jnp.float32)
    b2_2d = b2.reshape(1, C).astype(jnp.float32)
    xin = x.astype(compute_dtype)                           # single, UNPADDED copy

    out = pl.pallas_call(
        resblock_kernel,
        out_shape=jax.ShapeDtypeStruct((B, H, W, C), x.dtype),
        grid_spec=pltpu.PrefetchScalarGridSpec(
            num_scalar_prefetch=0,
            grid=(B,),
            in_specs=[
                pl.BlockSpec((pl.Squeezed(), H, W, C), lambda b: (b, 0, 0, 0)),
                pl.BlockSpec((9 * C, C), lambda b: (0, 0)),
                pl.BlockSpec((9 * C, C), lambda b: (0, 0)),
                pl.BlockSpec((1, C), lambda b: (0, 0)),
                pl.BlockSpec((1, C), lambda b: (0, 0)),
            ],
            out_specs=pl.BlockSpec((pl.Squeezed(), H, W, C),
                                   lambda b: (b, 0, 0, 0)),
            # one reusable halo buffer shared by both convs
            scratch_shapes=[pltpu.VMEM((H + 2, W + 2, C), compute_dtype)],
        ),
        # independent batch images -> shard across v7x's two TensorCores
        compiler_params=pltpu.CompilerParams(
            dimension_semantics=("parallel",)),
    )(xin, w1m, w2m, b1_2d, b2_2d)

    return jnp.transpose(out, (0, 3, 1, 2))                 # back to NCHW


def resblock_ref(x, w1, b1, w2, b2):
    """Plain-JAX reference (NCHW / OIHW), all float32."""
    dn = jax.lax.conv_dimension_numbers(x.shape, w1.shape,
                                        ('NCHW', 'OIHW', 'NCHW'))
    o = jax.lax.conv_general_dilated(x, w1, (1, 1), 'SAME',
                                     dimension_numbers=dn)
    o = jnp.maximum(o + b1[None, :, None, None], 0.0)
    o = jax.lax.conv_general_dilated(o, w2, (1, 1), 'SAME',
                                     dimension_numbers=dn)
    o = o + b2[None, :, None, None] + x
    return jnp.maximum(o, 0.0)


def _make_case(key, B, C, H, W, wscale):
    kx, kw1, kb1, kw2, kb2 = jax.random.split(key, 5)
    x = jax.random.normal(kx, (B, C, H, W), jnp.float32)
    w1 = jax.random.normal(kw1, (C, C, 3, 3), jnp.float32) * wscale
    b1 = jax.random.normal(kb1, (C,), jnp.float32) * 0.1
    w2 = jax.random.normal(kw2, (C, C, 3, 3), jnp.float32) * wscale
    b2 = jax.random.normal(kb2, (C,), jnp.float32) * 0.1
    return x, w1, b1, w2, b2


if __name__ == "__main__":
    key = jax.random.PRNGKey(0)
    k1, k2 = jax.random.split(key)

    # Case 1: the module's I/O channel count (in_channels=out_channels=4), f32.
    x, w1, b1, w2, b2 = _make_case(k1, B=2, C=4, H=16, W=16, wscale=0.1)
    out = jax.block_until_ready(resblock_forward(x, w1, b1, w2, b2))
    ref = jax.block_until_ready(resblock_ref(x, w1, b1, w2, b2))
    assert out.shape == (2, 4, 16, 16)
    assert jnp.allclose(out, ref, atol=2e-4, rtol=2e-4), "f32 mismatch vs reference"

    # Case 2: a UNet-interior channel width (C=128 -> fully lane-dense blocks)
    # on the bf16-operand / f32-accumulate MXU path (v6e/v7x throughput mode).
    x, w1, b1, w2, b2 = _make_case(k2, B=2, C=128, H=16, W=16, wscale=0.03)
    out = jax.block_until_ready(
        resblock_forward(x, w1, b1, w2, b2, compute_dtype=jnp.bfloat16))
    ref = jax.block_until_ready(resblock_ref(x, w1, b1, w2, b2))
    assert out.shape == (2, 128, 16, 16)
    assert jnp.allclose(out, ref, atol=1e-1, rtol=1e-1), "bf16 mismatch vs reference"

    print("KERNEL_OK")
</pallas_src>

<mosaic_0001>
module attributes {stable_mosaic.version = 11 : i64} {
  func.func @resblock_kernel(%arg0: i32, %arg1: memref<1x16x16x4xf32, #tpu.memory_space<vmem>>, %arg2: memref<36x4xf32, #tpu.memory_space<vmem>>, %arg3: memref<36x4xf32, #tpu.memory_space<vmem>>, %arg4: memref<1x4xf32, #tpu.memory_space<vmem>>, %arg5: memref<1x4xf32, #tpu.memory_space<vmem>>, %arg6: memref<1x16x16x4xf32, #tpu.memory_space<vmem>>, %arg7: memref<18x18x4xf32, #tpu.memory_space<vmem>>) attributes {dimension_semantics = [#tpu.dimension_semantics<parallel>], iteration_bounds = array<i64: 2>, scalar_prefetch = 0 : i64, scratch_operands = 1 : i64, tpu.core_type = #tpu.core_type<tc>, window_params = [{transform_indices = @transform_0, window_bounds = array<i64: 1, 16, 16, 4>}, {pipeline_mode = #tpu.pipeline_mode<synchronous>, transform_indices = @transform_1, window_bounds = array<i64: 36, 4>}, {pipeline_mode = #tpu.pipeline_mode<synchronous>, transform_indices = @transform_2, window_bounds = array<i64: 36, 4>}, {pipeline_mode = #tpu.pipeline_mode<synchronous>, transform_indices = @transform_3, window_bounds = array<i64: 1, 4>}, {pipeline_mode = #tpu.pipeline_mode<synchronous>, transform_indices = @transform_4, window_bounds = array<i64: 1, 4>}, {transform_indices = @transform_5, window_bounds = array<i64: 1, 16, 16, 4>}]} {
    %cst = arith.constant 0.000000e+00 : f32
    %0 = vector.broadcast %cst : f32 to vector<1x18x4xf32>
    %cst_0 = arith.constant 0.000000e+00 : f32
    %1 = vector.broadcast %cst_0 : f32 to vector<16x1x4xf32>
    %c0 = arith.constant 0 : index
    %c0_1 = arith.constant 0 : index
    %c0_2 = arith.constant 0 : index
    %2 = vector.load %arg7[%c0, %c0_1, %c0_2] : memref<18x18x4xf32, #tpu.memory_space<vmem>>, vector<1x18x4xf32>
    tpu.vector_store %arg7[%c0, %c0_1, %c0_2], %0 {strides = array<i32>} : memref<18x18x4xf32, #tpu.memory_space<vmem>>, vector<1x18x4xf32>,
    %c17 = arith.constant 17 : index
    %c0_3 = arith.constant 0 : index
    %c0_4 = arith.constant 0 : index
    %3 = vector.load %arg7[%c17, %c0_3, %c0_4] : memref<18x18x4xf32, #tpu.memory_space<vmem>>, vector<1x18x4xf32>
    tpu.vector_store %arg7[%c17, %c0_3, %c0_4], %0 {strides = array<i32>} : memref<18x18x4xf32, #tpu.memory_space<vmem>>, vector<1x18x4xf32>,
    %c1 = arith.constant 1 : index
    %c0_5 = arith.constant 0 : index
    %c0_6 = arith.constant 0 : index
    %4 = vector.load %arg7[%c1, %c0_5, %c0_6] : memref<18x18x4xf32, #tpu.memory_space<vmem>>, vector<16x1x4xf32>
    tpu.vector_store %arg7[%c1, %c0_5, %c0_6], %1 {strides = array<i32>} : memref<18x18x4xf32, #tpu.memory_space<vmem>>, vector<16x1x4xf32>,
    %c1_7 = arith.constant 1 : index
    %c17_8 = arith.constant 17 : index
    %c0_9 = arith.constant 0 : index
    %5 = vector.load %arg7[%c1_7, %c17_8, %c0_9] : memref<18x18x4xf32, #tpu.memory_space<vmem>>, vector<16x1x4xf32>
    tpu.vector_store %arg7[%c1_7, %c17_8, %c0_9], %1 {strides = array<i32>} : memref<18x18x4xf32, #tpu.memory_space<vmem>>, vector<16x1x4xf32>,
    %c0_10 = arith.constant 0 : index
    %c0_11 = arith.constant 0 : index
    %c0_12 = arith.constant 0 : index
    %c0_13 = arith.constant 0 : index
    %6 = vector.load %arg1[%c0_10, %c0_11, %c0_12, %c0_13] : memref<1x16x16x4xf32, #tpu.memory_space<vmem>>, vector<1x16x16x4xf32>
    %7 = vector.shape_cast %6 : vector<1x16x16x4xf32> to vector<16x16x4xf32>
    %c1_14 = arith.constant 1 : index
    %c1_15 = arith.constant 1 : index
    %c0_16 = arith.constant 0 : index
    %8 = vector.load %arg7[%c1_14, %c1_15, %c0_16] : memref<18x18x4xf32, #tpu.memory_space<vmem>>, vector<16x16x4xf32>
    tpu.vector_store %arg7[%c1_14, %c1_15, %c0_16], %7 {strides = array<i32>} : memref<18x18x4xf32, #tpu.memory_space<vmem>>, vector<16x16x4xf32>,
    %c0_17 = arith.constant 0 : index
    %c0_18 = arith.constant 0 : index
    %c0_19 = arith.constant 0 : index
    %9 = vector.load %arg7[%c0_17, %c0_18, %c0_19] : memref<18x18x4xf32, #tpu.memory_space<vmem>>, vector<18x18x4xf32>
    %c0_20 = arith.constant 0 : index
    %c0_21 = arith.constant 0 : index
    %10 = vector.load %arg2[%c0_20, %c0_21] : memref<36x4xf32, #tpu.memory_space<vmem>>, vector<36x4xf32>
    %11 = vector.extract_strided_slice %9 {offsets = [0, 0, 0], sizes = [16, 16, 4], strides = [1, 1, 1]} : vector<18x18x4xf32> to vector<16x16x4xf32>
    %12 = vector.extract_strided_slice %9 {offsets = [0, 1, 0], sizes = [16, 16, 4], strides = [1, 1, 1]} : vector<18x18x4xf32> to vector<16x16x4xf32>
    %13 = vector.extract_strided_slice %9 {offsets = [0, 2, 0], sizes = [16, 16, 4], strides = [1, 1, 1]} : vector<18x18x4xf32> to vector<16x16x4xf32>
    %14 = vector.extract_strided_slice %9 {offsets = [1, 0, 0], sizes = [16, 16, 4], strides = [1, 1, 1]} : vector<18x18x4xf32> to vector<16x16x4xf32>
    %15 = vector.extract_strided_slice %9 {offsets = [1, 1, 0], sizes = [16, 16, 4], strides = [1, 1, 1]} : vector<18x18x4xf32> to vector<16x16x4xf32>
    %16 = vector.extract_strided_slice %9 {offsets = [1, 2, 0], sizes = [16, 16, 4], strides = [1, 1, 1]} : vector<18x18x4xf32> to vector<16x16x4xf32>
    %17 = vector.extract_strided_slice %9 {offsets = [2, 0, 0], sizes = [16, 16, 4], strides = [1, 1, 1]} : vector<18x18x4xf32> to vector<16x16x4xf32>
    %18 = vector.extract_strided_slice %9 {offsets = [2, 1, 0], sizes = [16, 16, 4], strides = [1, 1, 1]} : vector<18x18x4xf32> to vector<16x16x4xf32>
    %19 = vector.extract_strided_slice %9 {offsets = [2, 2, 0], sizes = [16, 16, 4], strides = [1, 1, 1]} : vector<18x18x4xf32> to vector<16x16x4xf32>
    %20 = tpu.concatenate %11, %12, %13, %14, %15, %16, %17, %18, %19 in 2 : vector<16x16x4xf32>, vector<16x16x4xf32>, vector<16x16x4xf32>, vector<16x16x4xf32>, vector<16x16x4xf32>, vector<16x16x4xf32>, vector<16x16x4xf32>, vector<16x16x4xf32>, vector<16x16x4xf32> -> vector<16x16x36xf32>
    %cst_22 = arith.constant dense<0.000000e+00> : vector<16x16x4xf32>
    %21 = tpu.matmul %20, %10, %cst_22 {dimension_numbers = #tpu.dot_dimension_numbers<[2], [0], [0, 1], [1], [0, 0, 0, 1, 1, 1], [], []>} : vector<16x16x36xf32>, vector<36x4xf32>, vector<16x16x4xf32> -> vector<16x16x4xf32>
    %c0_23 = arith.constant 0 : index
    %c0_24 = arith.constant 0 : index
    %22 = vector.load %arg4[%c0_23, %c0_24] : memref<1x4xf32, #tpu.memory_space<vmem>>, vector<1x4xf32>
    %23 = vector.shape_cast %22 : vector<1x4xf32> to vector<1x1x4xf32>
    %24 = vector.broadcast %23 : vector<1x1x4xf32> to vector<16x16x4xf32>
    %25 = arith.addf %21, %24 : vector<16x16x4xf32>
    %cst_25 = arith.constant 0.000000e+00 : f32
    %26 = vector.broadcast %cst_25 : f32 to vector<16x16x4xf32>
    %27 = arith.maximumf %25, %26 : vector<16x16x4xf32>
    %c1_26 = arith.constant 1 : index
    %c1_27 = arith.constant 1 : index
    %c0_28 = arith.constant 0 : index
    %28 = vector.load %arg7[%c1_26, %c1_27, %c0_28] : memref<18x18x4xf32, #tpu.memory_space<vmem>>, vector<16x16x4xf32>
    tpu.vector_store %arg7[%c1_26, %c1_27, %c0_28], %27 {strides = array<i32>} : memref<18x18x4xf32, #tpu.memory_space<vmem>>, vector<16x16x4xf32>,
    %c0_29 = arith.constant 0 : index
    %c0_30 = arith.constant 0 : index
    %c0_31 = arith.constant 0 : index
    %29 = vector.load %arg7[%c0_29, %c0_30, %c0_31] : memref<18x18x4xf32, #tpu.memory_space<vmem>>, vector<18x18x4xf32>
    %c0_32 = arith.constant 0 : index
    %c0_33 = arith.constant 0 : index
    %30 = vector.load %arg3[%c0_32, %c0_33] : memref<36x4xf32, #tpu.memory_space<vmem>>, vector<36x4xf32>
    %31 = vector.extract_strided_slice %29 {offsets = [0, 0, 0], sizes = [16, 16, 4], strides = [1, 1, 1]} : vector<18x18x4xf32> to vector<16x16x4xf32>
    %32 = vector.extract_strided_slice %29 {offsets = [0, 1, 0], sizes = [16, 16, 4], strides = [1, 1, 1]} : vector<18x18x4xf32> to vector<16x16x4xf32>
    %33 = vector.extract_strided_slice %29 {offsets = [0, 2, 0], sizes = [16, 16, 4], strides = [1, 1, 1]} : vector<18x18x4xf32> to vector<16x16x4xf32>
    %34 = vector.extract_strided_slice %29 {offsets = [1, 0, 0], sizes = [16, 16, 4], strides = [1, 1, 1]} : vector<18x18x4xf32> to vector<16x16x4xf32>
    %35 = vector.extract_strided_slice %29 {offsets = [1, 1, 0], sizes = [16, 16, 4], strides = [1, 1, 1]} : vector<18x18x4xf32> to vector<16x16x4xf32>
    %36 = vector.extract_strided_slice %29 {offsets = [1, 2, 0], sizes = [16, 16, 4], strides = [1, 1, 1]} : vector<18x18x4xf32> to vector<16x16x4xf32>
    %37 = vector.extract_strided_slice %29 {offsets = [2, 0, 0], sizes = [16, 16, 4], strides = [1, 1, 1]} : vector<18x18x4xf32> to vector<16x16x4xf32>
    %38 = vector.extract_strided_slice %29 {offsets = [2, 1, 0], sizes = [16, 16, 4], strides = [1, 1, 1]} : vector<18x18x4xf32> to vector<16x16x4xf32>
    %39 = vector.extract_strided_slice %29 {offsets = [2, 2, 0], sizes = [16, 16, 4], strides = [1, 1, 1]} : vector<18x18x4xf32> to vector<16x16x4xf32>
    %40 = tpu.concatenate %31, %32, %33, %34, %35, %36, %37, %38, %39 in 2 : vector<16x16x4xf32>, vector<16x16x4xf32>, vector<16x16x4xf32>, vector<16x16x4xf32>, vector<16x16x4xf32>, vector<16x16x4xf32>, vector<16x16x4xf32>, vector<16x16x4xf32>, vector<16x16x4xf32> -> vector<16x16x36xf32>
    %cst_34 = arith.constant dense<0.000000e+00> : vector<16x16x4xf32>
    %41 = tpu.matmul %40, %30, %cst_34 {dimension_numbers = #tpu.dot_dimension_numbers<[2], [0], [0, 1], [1], [0, 0, 0, 1, 1, 1], [], []>} : vector<16x16x36xf32>, vector<36x4xf32>, vector<16x16x4xf32> -> vector<16x16x4xf32>
    %c0_35 = arith.constant 0 : index
    %c0_36 = arith.constant 0 : index
    %42 = vector.load %arg5[%c0_35, %c0_36] : memref<1x4xf32, #tpu.memory_space<vmem>>, vector<1x4xf32>
    %43 = vector.shape_cast %42 : vector<1x4xf32> to vector<1x1x4xf32>
    %44 = vector.broadcast %43 : vector<1x1x4xf32> to vector<16x16x4xf32>
    %45 = arith.addf %41, %44 : vector<16x16x4xf32>
    %46 = arith.addf %45, %7 : vector<16x16x4xf32>
    %cst_37 = arith.constant 0.000000e+00 : f32
    %47 = vector.broadcast %cst_37 : f32 to vector<16x16x4xf32>
    %48 = arith.maximumf %46, %47 : vector<16x16x4xf32>
    %c0_38 = arith.constant 0 : index
    %c0_39 = arith.constant 0 : index
    %c0_40 = arith.constant 0 : index
    %c0_41 = arith.constant 0 : index
    %49 = vector.load %arg6[%c0_38, %c0_39, %c0_40, %c0_41] : memref<1x16x16x4xf32, #tpu.memory_space<vmem>>, vector<1x16x16x4xf32>
    %50 = vector.shape_cast %49 : vector<1x16x16x4xf32> to vector<16x16x4xf32>
    %51 = vector.shape_cast %48 : vector<16x16x4xf32> to vector<1x16x16x4xf32>
    tpu.vector_store %arg6[%c0_38, %c0_39, %c0_40, %c0_41], %51 {strides = array<i32>} : memref<1x16x16x4xf32, #tpu.memory_space<vmem>>, vector<1x16x16x4xf32>,
    return
  }
  func.func @transform_0(%arg0: i32) -> (i32, i32, i32, i32) {
    %c0_i32 = arith.constant 0 : i32
    %c0_i32_0 = arith.constant 0 : i32
    %c0_i32_1 = arith.constant 0 : i32
    %c0_i32_2 = arith.constant 0 : i32
    return %arg0, %c0_i32, %c0_i32_0, %c0_i32_1 : i32, i32, i32, i32
  }
  func.func @transform_1(%arg0: i32) -> (i32, i32) {
    %c0_i32 = arith.constant 0 : i32
    %c0_i32_0 = arith.constant 0 : i32
    %c0_i32_1 = arith.constant 0 : i32
    return %c0_i32, %c0_i32_0 : i32, i32
  }
  func.func @transform_2(%arg0: i32) -> (i32, i32) {
    %c0_i32 = arith.constant 0 : i32
    %c0_i32_0 = arith.constant 0 : i32
    %c0_i32_1 = arith.constant 0 : i32
    return %c0_i32, %c0_i32_0 : i32, i32
  }
  func.func @transform_3(%arg0: i32) -> (i32, i32) {
    %c0_i32 = arith.constant 0 : i32
    %c0_i32_0 = arith.constant 0 : i32
    %c0_i32_1 = arith.constant 0 : i32
    return %c0_i32, %c0_i32_0 : i32, i32
  }
  func.func @transform_4(%arg0: i32) -> (i32, i32) {
    %c0_i32 = arith.constant 0 : i32
    %c0_i32_0 = arith.constant 0 : i32
    %c0_i32_1 = arith.constant 0 : i32
    return %c0_i32, %c0_i32_0 : i32, i32
  }
  func.func @transform_5(%arg0: i32) -> (i32, i32, i32, i32) {
    %c0_i32 = arith.constant 0 : i32
    %c0_i32_0 = arith.constant 0 : i32
    %c0_i32_1 = arith.constant 0 : i32
    %c0_i32_2 = arith.constant 0 : i32
    return %arg0, %c0_i32, %c0_i32_0, %c0_i32_1 : i32, i32, i32, i32
  }
}

</mosaic_0001>

<llo_original>
// kernel: resblock_forward.1
$region0: #{resblock_forward.1}
  #allocation0 [shape = 'u32[]', space=smem, size = 0x4, offset = 0x4, fixed_abs, tag = 'smem constant byte address 0x4 - core index']
  #allocation1 [shape = 'u32[144,128]{1,0:T(1,128)}', space=vmem, size = 0x12000, scoped, tag = 'internal scratch']
  #allocation2 [shape = 'f32[18,18,4]{2,1,0:T(8,128)}', space=vmem, size = 0x36000, scoped, tag = 'scratch operand']
  %s0 = inlined_call_operand.vmem [shape: f32[2,16,16,4], index: 0, kind: input, shape index: {}]
  %s1 = inlined_call_operand.vmem [shape: f32[36,4], index: 1, kind: input, shape index: {}]
  %s2 = inlined_call_operand.vmem [shape: f32[36,4], index: 2, kind: input, shape index: {}]
  %s3 = inlined_call_operand.vmem [shape: f32[1,4], index: 3, kind: input, shape index: {}]
  %s4 = inlined_call_operand.vmem [shape: f32[1,4], index: 4, kind: input, shape index: {}]
  %s5 = inlined_call_operand.vmem [shape: f32[2,16,16,4], index: 5, kind: output, shape index: {}]
  %s6 = sld [smem:[#allocation0]]
  $region53: #{resblock_forward.1} parent=0
    _
  %s8 = ssub.s32 1, %s6
  %s9 = scalar_select 0, %s8, %s6
  loop: start=0, step=1, limit=4
  $region2: #{resblock_forward.1} parent=0 // loop_pre_header
    _
  $region3: #{resblock_forward.1} parent=0 // loop_header
    %s11 = sphi 0, %s15
    %p12 = scmp.ge.s32.totalorder %s11, 4
    %s21 = sphi 0, %s23
    %s24 = sphi 0, %s21
    %s25 = sphi 0, %s24
    %s41 = sphi 0, %s25
    %s45 = sphi 0, %s45
    %s47 = sphi 0, %s45
    %s48 = sphi 0, %s47
    %s62 = sphi 0, %s48
    %s66 = sphi 0, %s66
    %s68 = sphi 0, %s66
    %s69 = sphi 0, %s68
    %s83 = sphi 0, %s69
    %s87 = sphi 0, %s87
    %s89 = sphi 0, %s87
    %s90 = sphi 0, %s89
    %s104 = sphi 0, %s90
    %s108 = sphi 0, %s108
    %s110 = sphi 0, %s108
    %s111 = sphi 0, %s110
    %s125 = sphi 0, %s111
    %s131 = sphi 0, %s133
    %s134 = sphi 0, %s131
    %s135 = sphi 0, %s134
    %s151 = sphi 0, %s135
  $region4: #{resblock_forward.1} parent=0 // loop_header_branch
    %14 = sbr.rel (%p12) target = $region8
  $region5: #{resblock_forward.1} parent=0 // loop_body
    %s16 = ssub.s32 %s11, 1
    %s17 = ssub.s32 %s11, 2
    %s18 = sadd.s32 %s11, 1
    %s19 = ssub.s32 %s11, %s18
    %p20 = scmp.eq.s32.totalorder %s19, 0
    %s22 = sadd.s32 %s21, 1
    %s23 = scalar_select %p20, %s21, %s22
    %p26 = pneg %p20
    %p27 = scmp.eq.s32.totalorder %s11, 1
    %p28 = por %p26, %p27
    %p29 = scmp.ne.s32.totalorder %s21, %s24
    %p30 = scmp.eq.s32.totalorder %s11, 0
    %p31 = por %p29, %p30
    %p32 = scmp.ne.s32.totalorder %s21, %s24
    %p33 = scmp.eq.s32.totalorder %s16, 1
    %p34 = por %p32, %p33
    %p35 = scmp.ne.s32.totalorder %s24, %s25
    %p36 = scmp.eq.s32.totalorder %s16, 0
    %p37 = por %p35, %p36
    %p38 = scmp.ne.s32.totalorder %s24, %s25
    %p39 = scmp.eq.s32.totalorder %s17, 1
    %p40 = por %p38, %p39
    %p42 = scmp.ne.s32.totalorder %s25, %s41
    %p43 = scmp.eq.s32.totalorder %s17, 0
    %p44 = por %p42, %p43
    %s46 = sadd.s32 %s45, 1
    %p49 = scmp.eq.s32.totalorder %s11, 1
    %p50 = scmp.ne.s32.totalorder %s45, %s47
    %p51 = scmp.eq.s32.totalorder %s11, 0
    %p52 = por %p50, %p51
    %p53 = scmp.ne.s32.totalorder %s45, %s47
    %p54 = scmp.eq.s32.totalorder %s16, 1
    %p55 = por %p53, %p54
    %p56 = scmp.ne.s32.totalorder %s47, %s48
    %p57 = scmp.eq.s32.totalorder %s16, 0
    %p58 = por %p56, %p57
    %p59 = scmp.ne.s32.totalorder %s47, %s48
    %p60 = scmp.eq.s32.totalorder %s17, 1
    %p61 = por %p59, %p60
    %p63 = scmp.ne.s32.totalorder %s48, %s62
    %p64 = scmp.eq.s32.totalorder %s17, 0
    %p65 = por %p63, %p64
    %s67 = sadd.s32 %s66, 1
    %p70 = scmp.eq.s32.totalorder %s11, 1
    %p71 = scmp.ne.s32.totalorder %s66, %s68
    %p72 = scmp.eq.s32.totalorder %s11, 0
    %p73 = por %p71, %p72
    %p74 = scmp.ne.s32.totalorder %s66, %s68
    %p75 = scmp.eq.s32.totalorder %s16, 1
    %p76 = por %p74, %p75
    %p77 = scmp.ne.s32.totalorder %s68, %s69
    %p78 = scmp.eq.s32.totalorder %s16, 0
    %p79 = por %p77, %p78
    %p80 = scmp.ne.s32.totalorder %s68, %s69
    %p81 = scmp.eq.s32.totalorder %s17, 1
    %p82 = por %p80, %p81
    %p84 = scmp.ne.s32.totalorder %s69, %s83
    %p85 = scmp.eq.s32.totalorder %s17, 0
    %p86 = por %p84, %p85
    %s88 = sadd.s32 %s87, 1
    %p91 = scmp.eq.s32.totalorder %s11, 1
    %p92 = scmp.ne.s32.totalorder %s87, %s89
    %p93 = scmp.eq.s32.totalorder %s11, 0
    %p94 = por %p92, %p93
    %p95 = scmp.ne.s32.totalorder %s87, %s89
    %p96 = scmp.eq.s32.totalorder %s16, 1
    %p97 = por %p95, %p96
    %p98 = scmp.ne.s32.totalorder %s89, %s90
    %p99 = scmp.eq.s32.totalorder %s16, 0
    %p100 = por %p98, %p99
    %p101 = scmp.ne.s32.totalorder %s89, %s90
    %p102 = scmp.eq.s32.totalorder %s17, 1
    %p103 = por %p101, %p102
    %p105 = scmp.ne.s32.totalorder %s90, %s104
    %p106 = scmp.eq.s32.totalorder %s17, 0
    %p107 = por %p105, %p106
    %s109 = sadd.s32 %s108, 1
    %p112 = scmp.eq.s32.totalorder %s11, 1
    %p113 = scmp.ne.s32.totalorder %s108, %s110
    %p114 = scmp.eq.s32.totalorder %s11, 0
    %p115 = por %p113, %p114
    %p116 = scmp.ne.s32.totalorder %s108, %s110
    %p117 = scmp.eq.s32.totalorder %s16, 1
    %p118 = por %p116, %p117
    %p119 = scmp.ne.s32.totalorder %s110, %s111
    %p120 = scmp.eq.s32.totalorder %s16, 0
    %p121 = por %p119, %p120
    %p122 = scmp.ne.s32.totalorder %s110, %s111
    %p123 = scmp.eq.s32.totalorder %s17, 1
    %p124 = por %p122, %p123
    %p126 = scmp.ne.s32.totalorder %s111, %s125
    %p127 = scmp.eq.s32.totalorder %s17, 0
    %p128 = por %p126, %p127
    %s129 = ssub.s32 %s11, %s18
    %p130 = scmp.eq.s32.totalorder %s129, 0
    %s132 = sadd.s32 %s131, 1
    %s133 = scalar_select %p130, %s131, %s132
    %p136 = pneg %p130
    %p137 = scmp.eq.s32.totalorder %s11, 1
    %p138 = por %p136, %p137
    %p139 = scmp.ne.s32.totalorder %s131, %s134
    %p140 = scmp.eq.s32.totalorder %s11, 0
    %p141 = por %p139, %p140
    %p142 = scmp.ne.s32.totalorder %s131, %s134
    %p143 = scmp.eq.s32.totalorder %s16, 1
    %p144 = por %p142, %p143
    %p145 = scmp.ne.s32.totalorder %s134, %s135
    %p146 = scmp.eq.s32.totalorder %s16, 0
    %p147 = por %p145, %p146
    %p148 = scmp.ne.s32.totalorder %s134, %s135
    %p149 = scmp.eq.s32.totalorder %s17, 1
    %p150 = por %p148, %p149
    %p152 = scmp.ne.s32.totalorder %s135, %s151
    %p153 = scmp.eq.s32.totalorder %s17, 0
    %p154 = por %p152, %p153
    %p155 = scmp.le.s32.totalorder 1, %s11
    %p156 = scmp.lt.s32.totalorder %s11, 3
    %p157 = pnand %p155, %p156
    %p158 = pneg %p157
    // Predicated region
    $region9: #{resblock_forward.1} parent=5 // pred_check
      _
    $region10: #{resblock_forward.1} parent=5 // pred_check_branch
      %160 = sbr.rel (%p157) target = $region12
    $region11: #{resblock_forward.1} parent=5 // pred_region
      %s161 = ssub.s32 %s11, 1
      // Predicated region
      $region13: #{resblock_forward.1} parent=11 // pred_check
        %p162 = pneg %p58
      $region14: #{resblock_forward.1} parent=11 // pred_check_branch
        %164 = sbr.rel (%p162) target = $region16
      $region15: #{resblock_forward.1} parent=11 // pred_region
        _
      $region16: #{resblock_forward.1} parent=11 // pred_fallthru
        _
      // Predicated region
      $region17: #{resblock_forward.1} parent=11 // pred_check
        %p165 = pneg %p79
      $region18: #{resblock_forward.1} parent=11 // pred_check_branch
        %167 = sbr.rel (%p165) target = $region20
      $region19: #{resblock_forward.1} parent=11 // pred_region
        _
      $region20: #{resblock_forward.1} parent=11 // pred_fallthru
        _
      // Predicated region
      $region21: #{resblock_forward.1} parent=11 // pred_check
        %p168 = pneg %p100
      $region22: #{resblock_forward.1} parent=11 // pred_check_branch
        %170 = sbr.rel (%p168) target = $region24
      $region23: #{resblock_forward.1} parent=11 // pred_region
        _
      $region24: #{resblock_forward.1} parent=11 // pred_fallthru
        _
      // Predicated region
      $region25: #{resblock_forward.1} parent=11 // pred_check
        %p171 = pneg %p121
      $region26: #{resblock_forward.1} parent=11 // pred_check_branch
        %173 = sbr.rel (%p171) target = $region28
      $region27: #{resblock_forward.1} parent=11 // pred_region
        _
      $region28: #{resblock_forward.1} parent=11 // pred_fallthru
        _
    $region12: #{resblock_forward.1} parent=5 // pred_fallthru
      _
    %p174 = scmp.lt.s32.totalorder %s11, 2
    // Predicated region
    $region29: #{resblock_forward.1} parent=5 // pred_check
      %p175 = pneg %p174
    $region30: #{resblock_forward.1} parent=5 // pred_check_branch
      %177 = sbr.rel (%p175) target = $region32
    $region31: #{resblock_forward.1} parent=5 // pred_region
      // Predicated region
      $region33: #{resblock_forward.1} parent=31 // pred_check
        %p178 = pneg %p31
      $region34: #{resblock_forward.1} parent=31 // pred_check_branch
        %180 = sbr.rel (%p178) target = $region36
      $region35: #{resblock_forward.1} parent=31 // pred_region
        %p181 = scmp.lt.s32.totalorder %s11, 1
        %s182 = scalar_select %p181, %s11, 1
        %s183 = smul.addr %s182, 32
        %s184 = smul.addr %s183, 8
        %s185 = scalar_lea.vmem %s0, %s184
      $region36: #{resblock_forward.1} parent=31 // pred_fallthru
        _
    $region32: #{resblock_forward.1} parent=5 // pred_fallthru
      _
    %p186 = scmp.le.s32.totalorder 1, %s11
    %p187 = scmp.lt.s32.totalorder %s11, 3
    %p188 = pnand %p186, %p187
    %p189 = pneg %p188
    // Predicated region
    $region37: #{resblock_forward.1} parent=5 // pred_check
      _
    $region38: #{resblock_forward.1} parent=5 // pred_check_branch
      %191 = sbr.rel (%p188) target = $region40
    $region39: #{resblock_forward.1} parent=5 // pred_region
      %s192 = ssub.s32 %s11, 1
      %p193 = scmp.lt.s32.totalorder %s16, 1
      %s194 = scalar_select %p193, %s16, 1
      %s195 = smul.addr %s194, 32
      %s196 = smul.addr %s195, 8
      %s197 = scalar_lea.vmem %s0, %s196
      %p198 = pneg %p37
      %p199 = pneg %p34
      %p200 = pneg %p58
      %p201 = pneg %p55
      %p202 = pneg %p79
      %p203 = pneg %p76
      %p204 = pneg %p100
      %p205 = pneg %p97
      %p206 = pneg %p121
      %p207 = pneg %p118
      %p208 = pneg %p147
      %p209 = pneg %p144
      %p210 = scmp.lt.s32.totalorder %s16, 1
      %s211 = scalar_select %p210, %s16, 1
      %s212 = smul.addr %s211, 32
      %s213 = smul.addr %s212, 8
      %s214 = scalar_lea.vmem %s5, %s213
      %p215 = scmp.lt.s32.totalorder %s16, 1
      %s216 = scalar_select %p215, %s16, 1
      %s217 = smul.addr %s216, 32
      %s218 = smul.addr %s217, 8
      %s219 = scalar_lea.vmem %s0, %s218
      %p220 = scmp.lt.s32.totalorder %s16, 1
      %s221 = scalar_select %p220, %s16, 1
      %s222 = smul.addr %s221, 32
      %s223 = smul.addr %s222, 8
      %s224 = scalar_lea.vmem %s5, %s223
      %vm225 = vcmask 31744
      %226 = vst.msk [vmem:[#allocation2] sm:$0xff] %vm225, 0.0
      %227 = vst.msk [vmem:[#allocation2 + $0x8] sm:$0xff] %vm225, 0.0
      %vm228 = vcmask 25600
      %229 = vst.msk [vmem:[#allocation2 + $0x10] sm:$0x3] %vm228, 0.0
      %s230 = scalar_lea.vmem [#allocation2], 408
      %231 = vst.msk [vmem:[%s230] sm:$0xff] %vm225, 0.0
      %232 = vst.msk [vmem:[%s230 + $0x8] sm:$0xff] %vm225, 0.0
      %233 = vst.msk [vmem:[%s230 + $0x10] sm:$0x3] %vm228, 0.0
      %s234 = scalar_lea.vmem [#allocation2], 24
      %vm235 = vcmask 24576
      %236 = vst.msk [vmem:[%s234] sm:$0x1] %vm235, 0.0
      %237 = vst.msk [vmem:[%s234 + $0x18] sm:$0x1] %vm235, 0.0
      %238 = vst.msk [vmem:[%s234 + $0x30] sm:$0x1] %vm235, 0.0
      %239 = vst.msk [vmem:[%s234 + $0x48] sm:$0x1] %vm235, 0.0
      %240 = vst.msk [vmem:[%s234 + $0x60] sm:$0x1] %vm235, 0.0
      %241 = vst.msk [vmem:[%s234 + $0x78] sm:$0x1] %vm235, 0.0
      %242 = vst.msk [vmem:[%s234 + $0x90] sm:$0x1] %vm235, 0.0
      %243 = vst.msk [vmem:[%s234 + $0xa8] sm:$0x1] %vm235, 0.0
      %244 = vst.msk [vmem:[%s234 + $0xc0] sm:$0x1] %vm235, 0.0
      %245 = vst.msk [vmem:[%s234 + $0xd8] sm:$0x1] %vm235, 0.0
      %246 = vst.msk [vmem:[%s234 + $0xf0] sm:$0x1] %vm235, 0.0
      %247 = vst.msk [vmem:[%s234 + $0x108] sm:$0x1] %vm235, 0.0
      %248 = vst.msk [vmem:[%s234 + $0x120] sm:$0x1] %vm235, 0.0
      %249 = vst.msk [vmem:[%s234 + $0x138] sm:$0x1] %vm235, 0.0
      %250 = vst.msk [vmem:[%s234 + $0x150] sm:$0x1] %vm235, 0.0
      %251 = vst.msk [vmem:[%s234 + $0x168] sm:$0x1] %vm235, 0.0
      %252 = vst.msk [vmem:[%s234 + $0x11] sm:$0x1] %vm235, 0.0
      %253 = vst.msk [vmem:[%s234 + $0x29] sm:$0x1] %vm235, 0.0
      %254 = vst.msk [vmem:[%s234 + $0x41] sm:$0x1] %vm235, 0.0
      %255 = vst.msk [vmem:[%s234 + $0x59] sm:$0x1] %vm235, 0.0
      %256 = vst.msk [vmem:[%s234 + $0x71] sm:$0x1] %vm235, 0.0
      %257 = vst.msk [vmem:[%s234 + $0x89] sm:$0x1] %vm235, 0.0
      %258 = vst.msk [vmem:[%s234 + $0xa1] sm:$0x1] %vm235, 0.0
      %259 = vst.msk [vmem:[%s234 + $0xb9] sm:$0x1] %vm235, 0.0
      %260 = vst.msk [vmem:[%s234 + $0xd1] sm:$0x1] %vm235, 0.0
      %261 = vst.msk [vmem:[%s234 + $0xe9] sm:$0x1] %vm235, 0.0
      %262 = vst.msk [vmem:[%s234 + $0x101] sm:$0x1] %vm235, 0.0
      %263 = vst.msk [vmem:[%s234 + $0x119] sm:$0x1] %vm235, 0.0
      %264 = vst.msk [vmem:[%s234 + $0x131] sm:$0x1] %vm235, 0.0
      %265 = vst.msk [vmem:[%s234 + $0x149] sm:$0x1] %vm235, 0.0
      %266 = vst.msk [vmem:[%s234 + $0x161] sm:$0x1] %vm235, 0.0
      %267 = vst.msk [vmem:[%s234 + $0x179] sm:$0x1] %vm235, 0.0
      %v268 = vld [vmem:[%s219] sm:$0xff]
      %v269 = vld [vmem:[%s219 + $0x8] sm:$0xff]
      %v270 = vld [vmem:[%s219 + $0x10] sm:$0xff]
      %v271 = vld [vmem:[%s219 + $0x18] sm:$0xff]
      %v272 = vld [vmem:[%s219 + $0x20] sm:$0xff]
      %v273 = vld [vmem:[%s219 + $0x28] sm:$0xff]
      %v274 = vld [vmem:[%s219 + $0x30] sm:$0xff]
      %v275 = vld [vmem:[%s219 + $0x38] sm:$0xff]
      %v276 = vld [vmem:[%s219 + $0x40] sm:$0xff]
      %v277 = vld [vmem:[%s219 + $0x48] sm:$0xff]
      %v278 = vld [vmem:[%s219 + $0x50] sm:$0xff]
      %v279 = vld [vmem:[%s219 + $0x58] sm:$0xff]
      %v280 = vld [vmem:[%s219 + $0x60] sm:$0xff]
      %v281 = vld [vmem:[%s219 + $0x68] sm:$0xff]
      %v282 = vld [vmem:[%s219 + $0x70] sm:$0xff]
      %v283 = vld [vmem:[%s219 + $0x78] sm:$0xff]
      %v284 = vld [vmem:[%s219 + $0x80] sm:$0xff]
      %v285 = vld [vmem:[%s219 + $0x88] sm:$0xff]
      %v286 = vld [vmem:[%s219 + $0x90] sm:$0xff]
      %v287 = vld [vmem:[%s219 + $0x98] sm:$0xff]
      %v288 = vld [vmem:[%s219 + $0xa0] sm:$0xff]
      %v289 = vld [vmem:[%s219 + $0xa8] sm:$0xff]
      %v290 = vld [vmem:[%s219 + $0xb0] sm:$0xff]
      %v291 = vld [vmem:[%s219 + $0xb8] sm:$0xff]
      %v292 = vld [vmem:[%s219 + $0xc0] sm:$0xff]
      %v293 = vld [vmem:[%s219 + $0xc8] sm:$0xff]
      %v294 = vld [vmem:[%s219 + $0xd0] sm:$0xff]
      %v295 = vld [vmem:[%s219 + $0xd8] sm:$0xff]
      %v296 = vld [vmem:[%s219 + $0xe0] sm:$0xff]
      %v297 = vld [vmem:[%s219 + $0xe8] sm:$0xff]
      %v298 = vld [vmem:[%s219 + $0xf0] sm:$0xff]
      %v299 = vld [vmem:[%s219 + $0xf8] sm:$0xff]
      %300 = vst.msk [vmem:[%s234 + $0x1] sm:$0xff] %vm225, %v268
      %301 = vst.msk [vmem:[%s234 + $0x9] sm:$0xff] %vm225, %v269
      %302 = vst.msk [vmem:[%s234 + $0x19] sm:$0xff] %vm225, %v270
      %303 = vst.msk [vmem:[%s234 + $0x21] sm:$0xff] %vm225, %v271
      %304 = vst.msk [vmem:[%s234 + $0x31] sm:$0xff] %vm225, %v272
      %305 = vst.msk [vmem:[%s234 + $0x39] sm:$0xff] %vm225, %v273
      %306 = vst.msk [vmem:[%s234 + $0x49] sm:$0xff] %vm225, %v274
      %307 = vst.msk [vmem:[%s234 + $0x51] sm:$0xff] %vm225, %v275
      %308 = vst.msk [vmem:[%s234 + $0x61] sm:$0xff] %vm225, %v276
      %309 = vst.msk [vmem:[%s234 + $0x69] sm:$0xff] %vm225, %v277
      %310 = vst.msk [vmem:[%s234 + $0x79] sm:$0xff] %vm225, %v278
      %311 = vst.msk [vmem:[%s234 + $0x81] sm:$0xff] %vm225, %v279
      %312 = vst.msk [vmem:[%s234 + $0x91] sm:$0xff] %vm225, %v280
      %313 = vst.msk [vmem:[%s234 + $0x99] sm:$0xff] %vm225, %v281
      %314 = vst.msk [vmem:[%s234 + $0xa9] sm:$0xff] %vm225, %v282
      %315 = vst.msk [vmem:[%s234 + $0xb1] sm:$0xff] %vm225, %v283
      %316 = vst.msk [vmem:[%s234 + $0xc1] sm:$0xff] %vm225, %v284
      %317 = vst.msk [vmem:[%s234 + $0xc9] sm:$0xff] %vm225, %v285
      %318 = vst.msk [vmem:[%s234 + $0xd9] sm:$0xff] %vm225, %v286
      %319 = vst.msk [vmem:[%s234 + $0xe1] sm:$0xff] %vm225, %v287
      %320 = vst.msk [vmem:[%s234 + $0xf1] sm:$0xff] %vm225, %v288
      %321 = vst.msk [vmem:[%s234 + $0xf9] sm:$0xff] %vm225, %v289
      %322 = vst.msk [vmem:[%s234 + $0x109] sm:$0xff] %vm225, %v290
      %323 = vst.msk [vmem:[%s234 + $0x111] sm:$0xff] %vm225, %v291
      %324 = vst.msk [vmem:[%s234 + $0x121] sm:$0xff] %vm225, %v292
      %325 = vst.msk [vmem:[%s234 + $0x129] sm:$0xff] %vm225, %v293
      %326 = vst.msk [vmem:[%s234 + $0x139] sm:$0xff] %vm225, %v294
      %327 = vst.msk [vmem:[%s234 + $0x141] sm:$0xff] %vm225, %v295
      %328 = vst.msk [vmem:[%s234 + $0x151] sm:$0xff] %vm225, %v296
      %329 = vst.msk [vmem:[%s234 + $0x159] sm:$0xff] %vm225, %v297
      %330 = vst.msk [vmem:[%s234 + $0x169] sm:$0xff] %vm225, %v298
      %331 = vst.msk [vmem:[%s234 + $0x171] sm:$0xff] %vm225, %v299
      %v332 = vld [vmem:[#allocation2] sm:$0xff]
      %v333 = vld [vmem:[#allocation2 + $0x8] sm:$0xff]
      %v334 = vld [vmem:[#allocation2 + $0x10] sm:$0x3]
      %v335 = vld [vmem:[#allocation2 + $0x18] sm:$0xff]
      %v336 = vld [vmem:[#allocation2 + $0x20] sm:$0xff]
      %v337 = vld [vmem:[#allocation2 + $0x28] sm:$0x3]
      %v338 = vld [vmem:[#allocation2 + $0x30] sm:$0xff]
      %v339 = vld [vmem:[#allocation2 + $0x38] sm:$0xff]
      %v340 = vld [vmem:[#allocation2 + $0x40] sm:$0x3]
      %v341 = vld [vmem:[#allocation2 + $0x48] sm:$0xff]
      %v342 = vld [vmem:[#allocation2 + $0x50] sm:$0xff]
      %v343 = vld [vmem:[#allocation2 + $0x58] sm:$0x3]
      %v344 = vld [vmem:[#allocation2 + $0x60] sm:$0xff]
      %v345 = vld [vmem:[#allocation2 + $0x68] sm:$0xff]
      %v346 = vld [vmem:[#allocation2 + $0x70] sm:$0x3]
      %v347 = vld [vmem:[#allocation2 + $0x78] sm:$0xff]
      %v348 = vld [vmem:[#allocation2 + $0x80] sm:$0xff]
      %v349 = vld [vmem:[#allocation2 + $0x88] sm:$0x3]
      %v350 = vld [vmem:[#allocation2 + $0x90] sm:$0xff]
      %v351 = vld [vmem:[#allocation2 + $0x98] sm:$0xff]
      %v352 = vld [vmem:[#allocation2 + $0xa0] sm:$0x3]
      %v353 = vld [vmem:[#allocation2 + $0xa8] sm:$0xff]
      %v354 = vld [vmem:[#allocation2 + $0xb0] sm:$0xff]
      %v355 = vld [vmem:[#allocation2 + $0xb8] sm:$0x3]
      %v356 = vld [vmem:[#allocation2 + $0xc0] sm:$0xff]
      %v357 = vld [vmem:[#allocation2 + $0xc8] sm:$0xff]
      %v358 = vld [vmem:[#allocation2 + $0xd0] sm:$0x3]
      %v359 = vld [vmem:[#allocation2 + $0xd8] sm:$0xff]
      %v360 = vld [vmem:[#allocation2 + $0xe0] sm:$0xff]
      %v361 = vld [vmem:[#allocation2 + $0xe8] sm:$0x3]
      %v362 = vld [vmem:[#allocation2 + $0xf0] sm:$0xff]
      %v363 = vld [vmem:[#allocation2 + $0xf8] sm:$0xff]
      %v364 = vld [vmem:[#allocation2 + $0x100] sm:$0x3]
      %v365 = vld [vmem:[#allocation2 + $0x108] sm:$0xff]
      %v366 = vld [vmem:[#allocation2 + $0x110] sm:$0xff]
      %v367 = vld [vmem:[#allocation2 + $0x118] sm:$0x3]
      %v368 = vld [vmem:[#allocation2 + $0x120] sm:$0xff]
      %v369 = vld [vmem:[#allocation2 + $0x128] sm:$0xff]
      %v370 = vld [vmem:[#allocation2 + $0x130] sm:$0x3]
      %v371 = vld [vmem:[#allocation2 + $0x138] sm:$0xff]
      %v372 = vld [vmem:[#allocation2 + $0x140] sm:$0xff]
      %v373 = vld [vmem:[#allocation2 + $0x148] sm:$0x3]
      %v374 = vld [vmem:[#allocation2 + $0x150] sm:$0xff]
      %v375 = vld [vmem:[#allocation2 + $0x158] sm:$0xff]
      %v376 = vld [vmem:[#allocation2 + $0x160] sm:$0x3]
      %v377 = vld [vmem:[#allocation2 + $0x168] sm:$0xff]
      %v378 = vld [vmem:[#allocation2 + $0x170] sm:$0xff]
      %v379 = vld [vmem:[#allocation2 + $0x178] sm:$0x3]
      %v380 = vld [vmem:[#allocation2 + $0x180] sm:$0xff]
      %v381 = vld [vmem:[#allocation2 + $0x188] sm:$0xff]
      %v382 = vld [vmem:[#allocation2 + $0x190] sm:$0x3]
      %v383 = vld [vmem:[#allocation2 + $0x198] sm:$0xff]
      %v384 = vld [vmem:[#allocation2 + $0x1a0] sm:$0xff]
      %v385 = vld [vmem:[#allocation2 + $0x1a8] sm:$0x3]
      %v386 = vld [vmem:[%s1] sm:$0xff]
      %v387 = vld [vmem:[%s1 + $0x8] sm:$0xff]
      %v388 = vld [vmem:[%s1 + $0x10] sm:$0xff]
      %v389 = vld [vmem:[%s1 + $0x18] sm:$0xff]
      %v390 = vld [vmem:[%s1 + $0x20] sm:$0xf]
      %vm439 = vcmask 1046528
      %v440 = vrot.slane %v332, 1
      %v441 = vrot.slane %v333, 1
      %v442 = vsel %vm439, %v440, %v441
      %v443 = vrot.slane %v334, 1
      %v444 = vsel %vm439, %v441, %v443
      %v445 = vrot.slane %v335, 1
      %v446 = vrot.slane %v336, 1
      %v447 = vsel %vm439, %v445, %v446
      %v448 = vrot.slane %v337, 1
      %v449 = vsel %vm439, %v446, %v448
      %v450 = vrot.slane %v338, 1
      %v451 = vrot.slane %v339, 1
      %v452 = vsel %vm439, %v450, %v451
      %v453 = vrot.slane %v340, 1
      %v454 = vsel %vm439, %v451, %v453
      %v455 = vrot.slane %v341, 1
      %v456 = vrot.slane %v342, 1
      %v457 = vsel %vm439, %v455, %v456
      %v458 = vrot.slane %v343, 1
      %v459 = vsel %vm439, %v456, %v458
      %v460 = vrot.slane %v344, 1
      %v461 = vrot.slane %v345, 1
      %v462 = vsel %vm439, %v460, %v461
      %v463 = vrot.slane %v346, 1
      %v464 = vsel %vm439, %v461, %v463
      %v465 = vrot.slane %v347, 1
      %v466 = vrot.slane %v348, 1
      %v467 = vsel %vm439, %v465, %v466
      %v468 = vrot.slane %v349, 1
      %v469 = vsel %vm439, %v466, %v468
      %v470 = vrot.slane %v350, 1
      %v471 = vrot.slane %v351, 1
      %v472 = vsel %vm439, %v470, %v471
      %v473 = vrot.slane %v352, 1
      %v474 = vsel %vm439, %v471, %v473
      %v475 = vrot.slane %v353, 1
      %v476 = vrot.slane %v354, 1
      %v477 = vsel %vm439, %v475, %v476
      %v478 = vrot.slane %v355, 1
      %v479 = vsel %vm439, %v476, %v478
      %v480 = vrot.slane %v356, 1
      %v481 = vrot.slane %v357, 1
      %v482 = vsel %vm439, %v480, %v481
      %v483 = vrot.slane %v358, 1
      %v484 = vsel %vm439, %v481, %v483
      %v485 = vrot.slane %v359, 1
      %v486 = vrot.slane %v360, 1
      %v487 = vsel %vm439, %v485, %v486
      %v488 = vrot.slane %v361, 1
      %v489 = vsel %vm439, %v486, %v488
      %v490 = vrot.slane %v362, 1
      %v491 = vrot.slane %v363, 1
      %v492 = vsel %vm439, %v490, %v491
      %v493 = vrot.slane %v364, 1
      %v494 = vsel %vm439, %v491, %v493
      %v495 = vrot.slane %v365, 1
      %v496 = vrot.slane %v366, 1
      %v497 = vsel %vm439, %v495, %v496
      %v498 = vrot.slane %v367, 1
      %v499 = vsel %vm439, %v496, %v498
      %v500 = vrot.slane %v368, 1
      %v501 = vrot.slane %v369, 1
      %v502 = vsel %vm439, %v500, %v501
      %v503 = vrot.slane %v370, 1
      %v504 = vsel %vm439, %v501, %v503
      %v505 = vrot.slane %v371, 1
      %v506 = vrot.slane %v372, 1
      %v507 = vsel %vm439, %v505, %v506
      %v508 = vrot.slane %v373, 1
      %v509 = vsel %vm439, %v506, %v508
      %v510 = vrot.slane %v374, 1
      %v511 = vrot.slane %v375, 1
      %v512 = vsel %vm439, %v510, %v511
      %v513 = vrot.slane %v376, 1
      %v514 = vsel %vm439, %v511, %v513
      %v515 = vrot.slane %v377, 1
      %v516 = vrot.slane %v378, 1
      %v517 = vsel %vm439, %v515, %v516
      %v518 = vrot.slane %v379, 1
      %v519 = vsel %vm439, %v516, %v518
      %520 = vrot.lane.b32.xlu0 %v442, 4
      %v521 = vpop.permute.xlu0 %520
      %522 = vrot.lane.b32.xlu0 %v444, 4
      %v523 = vpop.permute.xlu0 %522
      %524 = vrot.lane.b32.xlu0 %v447, 4
      %v525 = vpop.permute.xlu0 %524
      %526 = vrot.lane.b32.xlu0 %v449, 4
      %v527 = vpop.permute.xlu0 %526
      %528 = vrot.lane.b32.xlu0 %v452, 4
      %v529 = vpop.permute.xlu0 %528
      %530 = vrot.lane.b32.xlu0 %v454, 4
      %v531 = vpop.permute.xlu0 %530
      %532 = vrot.lane.b32.xlu0 %v457, 4
      %v533 = vpop.permute.xlu0 %532
      %534 = vrot.lane.b32.xlu0 %v459, 4
      %v535 = vpop.permute.xlu0 %534
      %536 = vrot.lane.b32.xlu0 %v462, 4
      %v537 = vpop.permute.xlu0 %536
      %538 = vrot.lane.b32.xlu0 %v464, 4
      %v539 = vpop.permute.xlu0 %538
      %540 = vrot.lane.b32.xlu0 %v467, 4
      %v541 = vpop.permute.xlu0 %540
      %542 = vrot.lane.b32.xlu0 %v469, 4
      %v543 = vpop.permute.xlu0 %542
      %544 = vrot.lane.b32.xlu0 %v472, 4
      %v545 = vpop.permute.xlu0 %544
      %546 = vrot.lane.b32.xlu0 %v474, 4
      %v547 = vpop.permute.xlu0 %546
      %548 = vrot.lane.b32.xlu0 %v477, 4
      %v549 = vpop.permute.xlu0 %548
      %550 = vrot.lane.b32.xlu0 %v479, 4
      %v551 = vpop.permute.xlu0 %550
      %552 = vrot.lane.b32.xlu0 %v482, 4
      %v553 = vpop.permute.xlu0 %552
      %554 = vrot.lane.b32.xlu0 %v484, 4
      %v555 = vpop.permute.xlu0 %554
      %556 = vrot.lane.b32.xlu0 %v487, 4
      %v557 = vpop.permute.xlu0 %556
      %558 = vrot.lane.b32.xlu0 %v489, 4
      %v559 = vpop.permute.xlu0 %558
      %560 = vrot.lane.b32.xlu0 %v492, 4
      %v561 = vpop.permute.xlu0 %560
      %562 = vrot.lane.b32.xlu0 %v494, 4
      %v563 = vpop.permute.xlu0 %562
      %564 = vrot.lane.b32.xlu0 %v497, 4
      %v565 = vpop.permute.xlu0 %564
      %566 = vrot.lane.b32.xlu0 %v499, 4
      %v567 = vpop.permute.xlu0 %566
      %568 = vrot.lane.b32.xlu0 %v502, 4
      %v569 = vpop.permute.xlu0 %568
      %570 = vrot.lane.b32.xlu0 %v504, 4
      %v571 = vpop.permute.xlu0 %570
      %572 = vrot.lane.b32.xlu0 %v507, 4
      %v573 = vpop.permute.xlu0 %572
      %574 = vrot.lane.b32.xlu0 %v509, 4
      %v575 = vpop.permute.xlu0 %574
      %576 = vrot.lane.b32.xlu0 %v512, 4
      %v577 = vpop.permute.xlu0 %576
      %578 = vrot.lane.b32.xlu0 %v514, 4
      %v579 = vpop.permute.xlu0 %578
      %580 = vrot.lane.b32.xlu0 %v517, 4
      %v581 = vpop.permute.xlu0 %580
      %582 = vrot.lane.b32.xlu0 %v519, 4
      %v583 = vpop.permute.xlu0 %582
      %vm616 = vcmask 1045504
      %v617 = vrot.slane %v332, 2
      %v618 = vrot.slane %v333, 2
      %v619 = vsel %vm616, %v617, %v618
      %v620 = vrot.slane %v334, 2
      %v621 = vsel %vm616, %v618, %v620
      %v622 = vrot.slane %v335, 2
      %v623 = vrot.slane %v336, 2
      %v624 = vsel %vm616, %v622, %v623
      %v625 = vrot.slane %v337, 2
      %v626 = vsel %vm616, %v623, %v625
      %v627 = vrot.slane %v338, 2
      %v628 = vrot.slane %v339, 2
      %v629 = vsel %vm616, %v627, %v628
      %v630 = vrot.slane %v340, 2
      %v631 = vsel %vm616, %v628, %v630
      %v632 = vrot.slane %v341, 2
      %v633 = vrot.slane %v342, 2
      %v634 = vsel %vm616, %v632, %v633
      %v635 = vrot.slane %v343, 2
      %v636 = vsel %vm616, %v633, %v635
      %v637 = vrot.slane %v344, 2
      %v638 = vrot.slane %v345, 2
      %v639 = vsel %vm616, %v637, %v638
      %v640 = vrot.slane %v346, 2
      %v641 = vsel %vm616, %v638, %v640
      %v642 = vrot.slane %v347, 2
      %v643 = vrot.slane %v348, 2
      %v644 = vsel %vm616, %v642, %v643
      %v645 = vrot.slane %v349, 2
      %v646 = vsel %vm616, %v643, %v645
      %v647 = vrot.slane %v350, 2
      %v648 = vrot.slane %v351, 2
      %v649 = vsel %vm616, %v647, %v648
      %v650 = vrot.slane %v352, 2
      %v651 = vsel %vm616, %v648, %v650
      %v652 = vrot.slane %v353, 2
      %v653 = vrot.slane %v354, 2
      %v654 = vsel %vm616, %v652, %v653
      %v655 = vrot.slane %v355, 2
      %v656 = vsel %vm616, %v653, %v655
      %v657 = vrot.slane %v356, 2
      %v658 = vrot.slane %v357, 2
      %v659 = vsel %vm616, %v657, %v658
      %v660 = vrot.slane %v358, 2
      %v661 = vsel %vm616, %v658, %v660
      %v662 = vrot.slane %v359, 2
      %v663 = vrot.slane %v360, 2
      %v664 = vsel %vm616, %v662, %v663
      %v665 = vrot.slane %v361, 2
      %v666 = vsel %vm616, %v663, %v665
      %v667 = vrot.slane %v362, 2
      %v668 = vrot.slane %v363, 2
      %v669 = vsel %vm616, %v667, %v668
      %v670 = vrot.slane %v364, 2
      %v671 = vsel %vm616, %v668, %v670
      %v672 = vrot.slane %v365, 2
      %v673 = vrot.slane %v366, 2
      %v674 = vsel %vm616, %v672, %v673
      %v675 = vrot.slane %v367, 2
      %v676 = vsel %vm616, %v673, %v675
      %v677 = vrot.slane %v368, 2
      %v678 = vrot.slane %v369, 2
      %v679 = vsel %vm616, %v677, %v678
      %v680 = vrot.slane %v370, 2
      %v681 = vsel %vm616, %v678, %v680
      %v682 = vrot.slane %v371, 2
      %v683 = vrot.slane %v372, 2
      %v684 = vsel %vm616, %v682, %v683
      %v685 = vrot.slane %v373, 2
      %v686 = vsel %vm616, %v683, %v685
      %v687 = vrot.slane %v374, 2
      %v688 = vrot.slane %v375, 2
      %v689 = vsel %vm616, %v687, %v688
      %v690 = vrot.slane %v376, 2
      %v691 = vsel %vm616, %v688, %v690
      %v692 = vrot.slane %v377, 2
      %v693 = vrot.slane %v378, 2
      %v694 = vsel %vm616, %v692, %v693
      %v695 = vrot.slane %v379, 2
      %v696 = vsel %vm616, %v693, %v695
      %697 = vrot.lane.b32.xlu0 %v619, 8
      %v698 = vpop.permute.xlu0 %697
      %699 = vrot.lane.b32.xlu0 %v621, 8
      %v700 = vpop.permute.xlu0 %699
      %701 = vrot.lane.b32.xlu0 %v624, 8
      %v702 = vpop.permute.xlu0 %701
      %703 = vrot.lane.b32.xlu0 %v626, 8
      %v704 = vpop.permute.xlu0 %703
      %705 = vrot.lane.b32.xlu0 %v629, 8
      %v706 = vpop.permute.xlu0 %705
      %707 = vrot.lane.b32.xlu0 %v631, 8
      %v708 = vpop.permute.xlu0 %707
      %709 = vrot.lane.b32.xlu0 %v634, 8
      %v710 = vpop.permute.xlu0 %709
      %711 = vrot.lane.b32.xlu0 %v636, 8
      %v712 = vpop.permute.xlu0 %711
      %713 = vrot.lane.b32.xlu0 %v639, 8
      %v714 = vpop.permute.xlu0 %713
      %715 = vrot.lane.b32.xlu0 %v641, 8
      %v716 = vpop.permute.xlu0 %715
      %717 = vrot.lane.b32.xlu0 %v644, 8
      %v718 = vpop.permute.xlu0 %717
      %719 = vrot.lane.b32.xlu0 %v646, 8
      %v720 = vpop.permute.xlu0 %719
      %721 = vrot.lane.b32.xlu0 %v649, 8
      %v722 = vpop.permute.xlu0 %721
      %723 = vrot.lane.b32.xlu0 %v651, 8
      %v724 = vpop.permute.xlu0 %723
      %725 = vrot.lane.b32.xlu0 %v654, 8
      %v726 = vpop.permute.xlu0 %725
      %727 = vrot.lane.b32.xlu0 %v656, 8
      %v728 = vpop.permute.xlu0 %727
      %729 = vrot.lane.b32.xlu0 %v659, 8
      %v730 = vpop.permute.xlu0 %729
      %731 = vrot.lane.b32.xlu0 %v661, 8
      %v732 = vpop.permute.xlu0 %731
      %733 = vrot.lane.b32.xlu0 %v664, 8
      %v734 = vpop.permute.xlu0 %733
      %735 = vrot.lane.b32.xlu0 %v666, 8
      %v736 = vpop.permute.xlu0 %735
      %737 = vrot.lane.b32.xlu0 %v669, 8
      %v738 = vpop.permute.xlu0 %737
      %739 = vrot.lane.b32.xlu0 %v671, 8
      %v740 = vpop.permute.xlu0 %739
      %741 = vrot.lane.b32.xlu0 %v674, 8
      %v742 = vpop.permute.xlu0 %741
      %743 = vrot.lane.b32.xlu0 %v676, 8
      %v744 = vpop.permute.xlu0 %743
      %745 = vrot.lane.b32.xlu0 %v679, 8
      %v746 = vpop.permute.xlu0 %745
      %747 = vrot.lane.b32.xlu0 %v681, 8
      %v748 = vpop.permute.xlu0 %747
      %749 = vrot.lane.b32.xlu0 %v684, 8
      %v750 = vpop.permute.xlu0 %749
      %751 = vrot.lane.b32.xlu0 %v686, 8
      %v752 = vpop.permute.xlu0 %751
      %753 = vrot.lane.b32.xlu0 %v689, 8
      %v754 = vpop.permute.xlu0 %753
      %755 = vrot.lane.b32.xlu0 %v691, 8
      %v756 = vpop.permute.xlu0 %755
      %757 = vrot.lane.b32.xlu0 %v694, 8
      %v758 = vpop.permute.xlu0 %757
      %759 = vrot.lane.b32.xlu0 %v696, 8
      %v760 = vpop.permute.xlu0 %759
      %795 = vrot.lane.b32.xlu0 %v335, 12
      %v796 = vpop.permute.xlu0 %795
      %797 = vrot.lane.b32.xlu0 %v336, 12
      %v798 = vpop.permute.xlu0 %797
      %799 = vrot.lane.b32.xlu0 %v338, 12
      %v800 = vpop.permute.xlu0 %799
      %801 = vrot.lane.b32.xlu0 %v339, 12
      %v802 = vpop.permute.xlu0 %801
      %803 = vrot.lane.b32.xlu0 %v341, 12
      %v804 = vpop.permute.xlu0 %803
      %805 = vrot.lane.b32.xlu0 %v342, 12
      %v806 = vpop.permute.xlu0 %805
      %807 = vrot.lane.b32.xlu0 %v344, 12
      %v808 = vpop.permute.xlu0 %807
      %809 = vrot.lane.b32.xlu0 %v345, 12
      %v810 = vpop.permute.xlu0 %809
      %811 = vrot.lane.b32.xlu0 %v347, 12
      %v812 = vpop.permute.xlu0 %811
      %813 = vrot.lane.b32.xlu0 %v348, 12
      %v814 = vpop.permute.xlu0 %813
      %815 = vrot.lane.b32.xlu0 %v350, 12
      %v816 = vpop.permute.xlu0 %815
      %817 = vrot.lane.b32.xlu0 %v351, 12
      %v818 = vpop.permute.xlu0 %817
      %819 = vrot.lane.b32.xlu0 %v353, 12
      %v820 = vpop.permute.xlu0 %819
      %821 = vrot.lane.b32.xlu0 %v354, 12
      %v822 = vpop.permute.xlu0 %821
      %823 = vrot.lane.b32.xlu0 %v356, 12
      %v824 = vpop.permute.xlu0 %823
      %825 = vrot.lane.b32.xlu0 %v357, 12
      %v826 = vpop.permute.xlu0 %825
      %827 = vrot.lane.b32.xlu0 %v359, 12
      %v828 = vpop.permute.xlu0 %827
      %829 = vrot.lane.b32.xlu0 %v360, 12
      %v830 = vpop.permute.xlu0 %829
      %831 = vrot.lane.b32.xlu0 %v362, 12
      %v832 = vpop.permute.xlu0 %831
      %833 = vrot.lane.b32.xlu0 %v363, 12
      %v834 = vpop.permute.xlu0 %833
      %835 = vrot.lane.b32.xlu0 %v365, 12
      %v836 = vpop.permute.xlu0 %835
      %837 = vrot.lane.b32.xlu0 %v366, 12
      %v838 = vpop.permute.xlu0 %837
      %839 = vrot.lane.b32.xlu0 %v368, 12
      %v840 = vpop.permute.xlu0 %839
      %841 = vrot.lane.b32.xlu0 %v369, 12
      %v842 = vpop.permute.xlu0 %841
      %843 = vrot.lane.b32.xlu0 %v371, 12
      %v844 = vpop.permute.xlu0 %843
      %845 = vrot.lane.b32.xlu0 %v372, 12
      %v846 = vpop.permute.xlu0 %845
      %847 = vrot.lane.b32.xlu0 %v374, 12
      %v848 = vpop.permute.xlu0 %847
      %849 = vrot.lane.b32.xlu0 %v375, 12
      %v850 = vpop.permute.xlu0 %849
      %851 = vrot.lane.b32.xlu0 %v377, 12
      %v852 = vpop.permute.xlu0 %851
      %853 = vrot.lane.b32.xlu0 %v378, 12
      %v854 = vpop.permute.xlu0 %853
      %855 = vrot.lane.b32.xlu0 %v380, 12
      %v856 = vpop.permute.xlu0 %855
      %857 = vrot.lane.b32.xlu0 %v381, 12
      %v858 = vpop.permute.xlu0 %857
      %v892 = vrot.slane %v380, 1
      %v893 = vrot.slane %v381, 1
      %v894 = vsel %vm439, %v892, %v893
      %v895 = vrot.slane %v382, 1
      %v896 = vsel %vm439, %v893, %v895
      %897 = vrot.lane.b32.xlu0 %v447, 16
      %v898 = vpop.permute.xlu0 %897
      %899 = vrot.lane.b32.xlu0 %v449, 16
      %v900 = vpop.permute.xlu0 %899
      %901 = vrot.lane.b32.xlu0 %v452, 16
      %v902 = vpop.permute.xlu0 %901
      %903 = vrot.lane.b32.xlu0 %v454, 16
      %v904 = vpop.permute.xlu0 %903
      %905 = vrot.lane.b32.xlu0 %v457, 16
      %v906 = vpop.permute.xlu0 %905
      %907 = vrot.lane.b32.xlu0 %v459, 16
      %v908 = vpop.permute.xlu0 %907
      %909 = vrot.lane.b32.xlu0 %v462, 16
      %v910 = vpop.permute.xlu0 %909
      %911 = vrot.lane.b32.xlu0 %v464, 16
      %v912 = vpop.permute.xlu0 %911
      %913 = vrot.lane.b32.xlu0 %v467, 16
      %v914 = vpop.permute.xlu0 %913
      %915 = vrot.lane.b32.xlu0 %v469, 16
      %v916 = vpop.permute.xlu0 %915
      %917 = vrot.lane.b32.xlu0 %v472, 16
      %v918 = vpop.permute.xlu0 %917
      %919 = vrot.lane.b32.xlu0 %v474, 16
      %v920 = vpop.permute.xlu0 %919
      %921 = vrot.lane.b32.xlu0 %v477, 16
      %v922 = vpop.permute.xlu0 %921
      %923 = vrot.lane.b32.xlu0 %v479, 16
      %v924 = vpop.permute.xlu0 %923
      %925 = vrot.lane.b32.xlu0 %v482, 16
      %v926 = vpop.permute.xlu0 %925
      %927 = vrot.lane.b32.xlu0 %v484, 16
      %v928 = vpop.permute.xlu0 %927
      %929 = vrot.lane.b32.xlu0 %v487, 16
      %v930 = vpop.permute.xlu0 %929
      %931 = vrot.lane.b32.xlu0 %v489, 16
      %v932 = vpop.permute.xlu0 %931
      %933 = vrot.lane.b32.xlu0 %v492, 16
      %v934 = vpop.permute.xlu0 %933
      %935 = vrot.lane.b32.xlu0 %v494, 16
      %v936 = vpop.permute.xlu0 %935
      %937 = vrot.lane.b32.xlu0 %v497, 16
      %v938 = vpop.permute.xlu0 %937
      %939 = vrot.lane.b32.xlu0 %v499, 16
      %v940 = vpop.permute.xlu0 %939
      %941 = vrot.lane.b32.xlu0 %v502, 16
      %v942 = vpop.permute.xlu0 %941
      %943 = vrot.lane.b32.xlu0 %v504, 16
      %v944 = vpop.permute.xlu0 %943
      %945 = vrot.lane.b32.xlu0 %v507, 16
      %v946 = vpop.permute.xlu0 %945
      %947 = vrot.lane.b32.xlu0 %v509, 16
      %v948 = vpop.permute.xlu0 %947
      %949 = vrot.lane.b32.xlu0 %v512, 16
      %v950 = vpop.permute.xlu0 %949
      %951 = vrot.lane.b32.xlu0 %v514, 16
      %v952 = vpop.permute.xlu0 %951
      %953 = vrot.lane.b32.xlu0 %v517, 16
      %v954 = vpop.permute.xlu0 %953
      %955 = vrot.lane.b32.xlu0 %v519, 16
      %v956 = vpop.permute.xlu0 %955
      %957 = vrot.lane.b32.xlu0 %v894, 16
      %v958 = vpop.permute.xlu0 %957
      %959 = vrot.lane.b32.xlu0 %v896, 16
      %v960 = vpop.permute.xlu0 %959
      %v993 = vrot.slane %v380, 2
      %v994 = vrot.slane %v381, 2
      %v995 = vsel %vm616, %v993, %v994
      %v996 = vrot.slane %v382, 2
      %v997 = vsel %vm616, %v994, %v996
      %998 = vrot.lane.b32.xlu0 %v624, 20
      %v999 = vpop.permute.xlu0 %998
      %1000 = vrot.lane.b32.xlu0 %v626, 20
      %v1001 = vpop.permute.xlu0 %1000
      %1002 = vrot.lane.b32.xlu0 %v629, 20
      %v1003 = vpop.permute.xlu0 %1002
      %1004 = vrot.lane.b32.xlu0 %v631, 20
      %v1005 = vpop.permute.xlu0 %1004
      %1006 = vrot.lane.b32.xlu0 %v634, 20
      %v1007 = vpop.permute.xlu0 %1006
      %1008 = vrot.lane.b32.xlu0 %v636, 20
      %v1009 = vpop.permute.xlu0 %1008
      %1010 = vrot.lane.b32.xlu0 %v639, 20
      %v1011 = vpop.permute.xlu0 %1010
      %1012 = vrot.lane.b32.xlu0 %v641, 20
      %v1013 = vpop.permute.xlu0 %1012
      %1014 = vrot.lane.b32.xlu0 %v644, 20
      %v1015 = vpop.permute.xlu0 %1014
      %1016 = vrot.lane.b32.xlu0 %v646, 20
      %v1017 = vpop.permute.xlu0 %1016
      %1018 = vrot.lane.b32.xlu0 %v649, 20
      %v1019 = vpop.permute.xlu0 %1018
      %1020 = vrot.lane.b32.xlu0 %v651, 20
      %v1021 = vpop.permute.xlu0 %1020
      %1022 = vrot.lane.b32.xlu0 %v654, 20
      %v1023 = vpop.permute.xlu0 %1022
      %1024 = vrot.lane.b32.xlu0 %v656, 20
      %v1025 = vpop.permute.xlu0 %1024
      %1026 = vrot.lane.b32.xlu0 %v659, 20
      %v1027 = vpop.permute.xlu0 %1026
      %1028 = vrot.lane.b32.xlu0 %v661, 20
      %v1029 = vpop.permute.xlu0 %1028
      %1030 = vrot.lane.b32.xlu0 %v664, 20
      %v1031 = vpop.permute.xlu0 %1030
      %1032 = vrot.lane.b32.xlu0 %v666, 20
      %v1033 = vpop.permute.xlu0 %1032
      %1034 = vrot.lane.b32.xlu0 %v669, 20
      %v1035 = vpop.permute.xlu0 %1034
      %1036 = vrot.lane.b32.xlu0 %v671, 20
      %v1037 = vpop.permute.xlu0 %1036
      %1038 = vrot.lane.b32.xlu0 %v674, 20
      %v1039 = vpop.permute.xlu0 %1038
      %1040 = vrot.lane.b32.xlu0 %v676, 20
      %v1041 = vpop.permute.xlu0 %1040
      %1042 = vrot.lane.b32.xlu0 %v679, 20
      %v1043 = vpop.permute.xlu0 %1042
      %1044 = vrot.lane.b32.xlu0 %v681, 20
      %v1045 = vpop.permute.xlu0 %1044
      %1046 = vrot.lane.b32.xlu0 %v684, 20
      %v1047 = vpop.permute.xlu0 %1046
      %1048 = vrot.lane.b32.xlu0 %v686, 20
      %v1049 = vpop.permute.xlu0 %1048
      %1050 = vrot.lane.b32.xlu0 %v689, 20
      %v1051 = vpop.permute.xlu0 %1050
      %1052 = vrot.lane.b32.xlu0 %v691, 20
      %v1053 = vpop.permute.xlu0 %1052
      %1054 = vrot.lane.b32.xlu0 %v694, 20
      %v1055 = vpop.permute.xlu0 %1054
      %1056 = vrot.lane.b32.xlu0 %v696, 20
      %v1057 = vpop.permute.xlu0 %1056
      %1058 = vrot.lane.b32.xlu0 %v995, 20
      %v1059 = vpop.permute.xlu0 %1058
      %1060 = vrot.lane.b32.xlu0 %v997, 20
      %v1061 = vpop.permute.xlu0 %1060
      %1096 = vrot.lane.b32.xlu0 %v338, 24
      %v1097 = vpop.permute.xlu0 %1096
      %1098 = vrot.lane.b32.xlu0 %v339, 24
      %v1099 = vpop.permute.xlu0 %1098
      %1100 = vrot.lane.b32.xlu0 %v341, 24
      %v1101 = vpop.permute.xlu0 %1100
      %1102 = vrot.lane.b32.xlu0 %v342, 24
      %v1103 = vpop.permute.xlu0 %1102
      %1104 = vrot.lane.b32.xlu0 %v344, 24
      %v1105 = vpop.permute.xlu0 %1104
      %1106 = vrot.lane.b32.xlu0 %v345, 24
      %v1107 = vpop.permute.xlu0 %1106
      %1108 = vrot.lane.b32.xlu0 %v347, 24
      %v1109 = vpop.permute.xlu0 %1108
      %1110 = vrot.lane.b32.xlu0 %v348, 24
      %v1111 = vpop.permute.xlu0 %1110
      %1112 = vrot.lane.b32.xlu0 %v350, 24
      %v1113 = vpop.permute.xlu0 %1112
      %1114 = vrot.lane.b32.xlu0 %v351, 24
      %v1115 = vpop.permute.xlu0 %1114
      %1116 = vrot.lane.b32.xlu0 %v353, 24
      %v1117 = vpop.permute.xlu0 %1116
      %1118 = vrot.lane.b32.xlu0 %v354, 24
      %v1119 = vpop.permute.xlu0 %1118
      %1120 = vrot.lane.b32.xlu0 %v356, 24
      %v1121 = vpop.permute.xlu0 %1120
      %1122 = vrot.lane.b32.xlu0 %v357, 24
      %v1123 = vpop.permute.xlu0 %1122
      %1124 = vrot.lane.b32.xlu0 %v359, 24
      %v1125 = vpop.permute.xlu0 %1124
      %1126 = vrot.lane.b32.xlu0 %v360, 24
      %v1127 = vpop.permute.xlu0 %1126
      %1128 = vrot.lane.b32.xlu0 %v362, 24
      %v1129 = vpop.permute.xlu0 %1128
      %1130 = vrot.lane.b32.xlu0 %v363, 24
      %v1131 = vpop.permute.xlu0 %1130
      %1132 = vrot.lane.b32.xlu0 %v365, 24
      %v1133 = vpop.permute.xlu0 %1132
      %1134 = vrot.lane.b32.xlu0 %v366, 24
      %v1135 = vpop.permute.xlu0 %1134
      %1136 = vrot.lane.b32.xlu0 %v368, 24
      %v1137 = vpop.permute.xlu0 %1136
      %1138 = vrot.lane.b32.xlu0 %v369, 24
      %v1139 = vpop.permute.xlu0 %1138
      %1140 = vrot.lane.b32.xlu0 %v371, 24
      %v1141 = vpop.permute.xlu0 %1140
      %1142 = vrot.lane.b32.xlu0 %v372, 24
      %v1143 = vpop.permute.xlu0 %1142
      %1144 = vrot.lane.b32.xlu0 %v374, 24
      %v1145 = vpop.permute.xlu0 %1144
      %1146 = vrot.lane.b32.xlu0 %v375, 24
      %v1147 = vpop.permute.xlu0 %1146
      %1148 = vrot.lane.b32.xlu0 %v377, 24
      %v1149 = vpop.permute.xlu0 %1148
      %1150 = vrot.lane.b32.xlu0 %v378, 24
      %v1151 = vpop.permute.xlu0 %1150
      %1152 = vrot.lane.b32.xlu0 %v380, 24
      %v1153 = vpop.permute.xlu0 %1152
      %1154 = vrot.lane.b32.xlu0 %v381, 24
      %v1155 = vpop.permute.xlu0 %1154
      %1156 = vrot.lane.b32.xlu0 %v383, 24
      %v1157 = vpop.permute.xlu0 %1156
      %1158 = vrot.lane.b32.xlu0 %v384, 24
      %v1159 = vpop.permute.xlu0 %1158
      %v1193 = vrot.slane %v383, 1
      %v1194 = vrot.slane %v384, 1
      %v1195 = vsel %vm439, %v1193, %v1194
      %v1196 = vrot.slane %v385, 1
      %v1197 = vsel %vm439, %v1194, %v1196
      %1198 = vrot.lane.b32.xlu0 %v452, 28
      %v1199 = vpop.permute.xlu0 %1198
      %1200 = vrot.lane.b32.xlu0 %v454, 28
      %v1201 = vpop.permute.xlu0 %1200
      %1202 = vrot.lane.b32.xlu0 %v457, 28
      %v1203 = vpop.permute.xlu0 %1202
      %1204 = vrot.lane.b32.xlu0 %v459, 28
      %v1205 = vpop.permute.xlu0 %1204
      %1206 = vrot.lane.b32.xlu0 %v462, 28
      %v1207 = vpop.permute.xlu0 %1206
      %1208 = vrot.lane.b32.xlu0 %v464, 28
      %v1209 = vpop.permute.xlu0 %1208
      %1210 = vrot.lane.b32.xlu0 %v467, 28
      %v1211 = vpop.permute.xlu0 %1210
      %1212 = vrot.lane.b32.xlu0 %v469, 28
      %v1213 = vpop.permute.xlu0 %1212
      %1214 = vrot.lane.b32.xlu0 %v472, 28
      %v1215 = vpop.permute.xlu0 %1214
      %1216 = vrot.lane.b32.xlu0 %v474, 28
      %v1217 = vpop.permute.xlu0 %1216
      %1218 = vrot.lane.b32.xlu0 %v477, 28
      %v1219 = vpop.permute.xlu0 %1218
      %1220 = vrot.lane.b32.xlu0 %v479, 28
      %v1221 = vpop.permute.xlu0 %1220
      %1222 = vrot.lane.b32.xlu0 %v482, 28
      %v1223 = vpop.permute.xlu0 %1222
      %1224 = vrot.lane.b32.xlu0 %v484, 28
      %v1225 = vpop.permute.xlu0 %1224
      %1226 = vrot.lane.b32.xlu0 %v487, 28
      %v1227 = vpop.permute.xlu0 %1226
      %1228 = vrot.lane.b32.xlu0 %v489, 28
      %v1229 = vpop.permute.xlu0 %1228
      %1230 = vrot.lane.b32.xlu0 %v492, 28
      %v1231 = vpop.permute.xlu0 %1230
      %1232 = vrot.lane.b32.xlu0 %v494, 28
      %v1233 = vpop.permute.xlu0 %1232
      %1234 = vrot.lane.b32.xlu0 %v497, 28
      %v1235 = vpop.permute.xlu0 %1234
      %1236 = vrot.lane.b32.xlu0 %v499, 28
      %v1237 = vpop.permute.xlu0 %1236
      %1238 = vrot.lane.b32.xlu0 %v502, 28
      %v1239 = vpop.permute.xlu0 %1238
      %1240 = vrot.lane.b32.xlu0 %v504, 28
      %v1241 = vpop.permute.xlu0 %1240
      %1242 = vrot.lane.b32.xlu0 %v507, 28
      %v1243 = vpop.permute.xlu0 %1242
      %1244 = vrot.lane.b32.xlu0 %v509, 28
      %v1245 = vpop.permute.xlu0 %1244
      %1246 = vrot.lane.b32.xlu0 %v512, 28
      %v1247 = vpop.permute.xlu0 %1246
      %1248 = vrot.lane.b32.xlu0 %v514, 28
      %v1249 = vpop.permute.xlu0 %1248
      %1250 = vrot.lane.b32.xlu0 %v517, 28
      %v1251 = vpop.permute.xlu0 %1250
      %1252 = vrot.lane.b32.xlu0 %v519, 28
      %v1253 = vpop.permute.xlu0 %1252
      %1254 = vrot.lane.b32.xlu0 %v894, 28
      %v1255 = vpop.permute.xlu0 %1254
      %1256 = vrot.lane.b32.xlu0 %v896, 28
      %v1257 = vpop.permute.xlu0 %1256
      %1258 = vrot.lane.b32.xlu0 %v1195, 28
      %v1259 = vpop.permute.xlu0 %1258
      %1260 = vrot.lane.b32.xlu0 %v1197, 28
      %v1261 = vpop.permute.xlu0 %1260
      %v1294 = vrot.slane %v383, 2
      %v1295 = vrot.slane %v384, 2
      %v1296 = vsel %vm616, %v1294, %v1295
      %v1297 = vrot.slane %v385, 2
      %v1298 = vsel %vm616, %v1295, %v1297
      %1299 = vrot.lane.b32.xlu0 %v629, 32
      %v1300 = vpop.permute.xlu0 %1299
      %1301 = vrot.lane.b32.xlu0 %v631, 32
      %v1302 = vpop.permute.xlu0 %1301
      %1303 = vrot.lane.b32.xlu0 %v634, 32
      %v1304 = vpop.permute.xlu0 %1303
      %1305 = vrot.lane.b32.xlu0 %v636, 32
      %v1306 = vpop.permute.xlu0 %1305
      %1307 = vrot.lane.b32.xlu0 %v639, 32
      %v1308 = vpop.permute.xlu0 %1307
      %1309 = vrot.lane.b32.xlu0 %v641, 32
      %v1310 = vpop.permute.xlu0 %1309
      %1311 = vrot.lane.b32.xlu0 %v644, 32
      %v1312 = vpop.permute.xlu0 %1311
      %1313 = vrot.lane.b32.xlu0 %v646, 32
      %v1314 = vpop.permute.xlu0 %1313
      %1315 = vrot.lane.b32.xlu0 %v649, 32
      %v1316 = vpop.permute.xlu0 %1315
      %1317 = vrot.lane.b32.xlu0 %v651, 32
      %v1318 = vpop.permute.xlu0 %1317
      %1319 = vrot.lane.b32.xlu0 %v654, 32
      %v1320 = vpop.permute.xlu0 %1319
      %1321 = vrot.lane.b32.xlu0 %v656, 32
      %v1322 = vpop.permute.xlu0 %1321
      %1323 = vrot.lane.b32.xlu0 %v659, 32
      %v1324 = vpop.permute.xlu0 %1323
      %1325 = vrot.lane.b32.xlu0 %v661, 32
      %v1326 = vpop.permute.xlu0 %1325
      %1327 = vrot.lane.b32.xlu0 %v664, 32
      %v1328 = vpop.permute.xlu0 %1327
      %1329 = vrot.lane.b32.xlu0 %v666, 32
      %v1330 = vpop.permute.xlu0 %1329
      %1331 = vrot.lane.b32.xlu0 %v669, 32
      %v1332 = vpop.permute.xlu0 %1331
      %1333 = vrot.lane.b32.xlu0 %v671, 32
      %v1334 = vpop.permute.xlu0 %1333
      %1335 = vrot.lane.b32.xlu0 %v674, 32
      %v1336 = vpop.permute.xlu0 %1335
      %1337 = vrot.lane.b32.xlu0 %v676, 32
      %v1338 = vpop.permute.xlu0 %1337
      %1339 = vrot.lane.b32.xlu0 %v679, 32
      %v1340 = vpop.permute.xlu0 %1339
      %1341 = vrot.lane.b32.xlu0 %v681, 32
      %v1342 = vpop.permute.xlu0 %1341
      %1343 = vrot.lane.b32.xlu0 %v684, 32
      %v1344 = vpop.permute.xlu0 %1343
      %1345 = vrot.lane.b32.xlu0 %v686, 32
      %v1346 = vpop.permute.xlu0 %1345
      %1347 = vrot.lane.b32.xlu0 %v689, 32
      %v1348 = vpop.permute.xlu0 %1347
      %1349 = vrot.lane.b32.xlu0 %v691, 32
      %v1350 = vpop.permute.xlu0 %1349
      %1351 = vrot.lane.b32.xlu0 %v694, 32
      %v1352 = vpop.permute.xlu0 %1351
      %1353 = vrot.lane.b32.xlu0 %v696, 32
      %v1354 = vpop.permute.xlu0 %1353
      %1355 = vrot.lane.b32.xlu0 %v995, 32
      %v1356 = vpop.permute.xlu0 %1355
      %1357 = vrot.lane.b32.xlu0 %v997, 32
      %v1358 = vpop.permute.xlu0 %1357
      %1359 = vrot.lane.b32.xlu0 %v1296, 32
      %v1360 = vpop.permute.xlu0 %1359
      %1361 = vrot.lane.b32.xlu0 %v1298, 32
      %v1362 = vpop.permute.xlu0 %1361
      %v1395 = vsel %vm225, %v332, %v521
      %v1396 = vsel %vm225, %v333, %v523
      %v1397 = vsel %vm225, %v335, %v525
      %v1398 = vsel %vm225, %v336, %v527
      %v1399 = vsel %vm225, %v338, %v529
      %v1400 = vsel %vm225, %v339, %v531
      %v1401 = vsel %vm225, %v341, %v533
      %v1402 = vsel %vm225, %v342, %v535
      %v1403 = vsel %vm225, %v344, %v537
      %v1404 = vsel %vm225, %v345, %v539
      %v1405 = vsel %vm225, %v347, %v541
      %v1406 = vsel %vm225, %v348, %v543
      %v1407 = vsel %vm225, %v350, %v545
      %v1408 = vsel %vm225, %v351, %v547
      %v1409 = vsel %vm225, %v353, %v549
      %v1410 = vsel %vm225, %v354, %v551
      %v1411 = vsel %vm225, %v356, %v553
      %v1412 = vsel %vm225, %v357, %v555
      %v1413 = vsel %vm225, %v359, %v557
      %v1414 = vsel %vm225, %v360, %v559
      %v1415 = vsel %vm225, %v362, %v561
      %v1416 = vsel %vm225, %v363, %v563
      %v1417 = vsel %vm225, %v365, %v565
      %v1418 = vsel %vm225, %v366, %v567
      %v1419 = vsel %vm225, %v368, %v569
      %v1420 = vsel %vm225, %v369, %v571
      %v1421 = vsel %vm225, %v371, %v573
      %v1422 = vsel %vm225, %v372, %v575
      %v1423 = vsel %vm225, %v374, %v577
      %v1424 = vsel %vm225, %v375, %v579
      %v1425 = vsel %vm225, %v377, %v581
      %v1426 = vsel %vm225, %v378, %v583
      %vm1427 = vcmask 64512
      %v1428 = vsel %vm1427, %v1395, %v698
      %v1429 = vsel %vm1427, %v1396, %v700
      %v1430 = vsel %vm1427, %v1397, %v702
      %v1431 = vsel %vm1427, %v1398, %v704
      %v1432 = vsel %vm1427, %v1399, %v706
      %v1433 = vsel %vm1427, %v1400, %v708
      %v1434 = vsel %vm1427, %v1401, %v710
      %v1435 = vsel %vm1427, %v1402, %v712
      %v1436 = vsel %vm1427, %v1403, %v714
      %v1437 = vsel %vm1427, %v1404, %v716
      %v1438 = vsel %vm1427, %v1405, %v718
      %v1439 = vsel %vm1427, %v1406, %v720
      %v1440 = vsel %vm1427, %v1407, %v722
      %v1441 = vsel %vm1427, %v1408, %v724
      %v1442 = vsel %vm1427, %v1409, %v726
      %v1443 = vsel %vm1427, %v1410, %v728
      %v1444 = vsel %vm1427, %v1411, %v730
      %v1445 = vsel %vm1427, %v1412, %v732
      %v1446 = vsel %vm1427, %v1413, %v734
      %v1447 = vsel %vm1427, %v1414, %v736
      %v1448 = vsel %vm1427, %v1415, %v738
      %v1449 = vsel %vm1427, %v1416, %v740
      %v1450 = vsel %vm1427, %v1417, %v742
      %v1451 = vsel %vm1427, %v1418, %v744
      %v1452 = vsel %vm1427, %v1419, %v746
      %v1453 = vsel %vm1427, %v1420, %v748
      %v1454 = vsel %vm1427, %v1421, %v750
      %v1455 = vsel %vm1427, %v1422, %v752
      %v1456 = vsel %vm1427, %v1423, %v754
      %v1457 = vsel %vm1427, %v1424, %v756
      %v1458 = vsel %vm1427, %v1425, %v758
      %v1459 = vsel %vm1427, %v1426, %v760
      %vm1460 = vcmask 97280
      %v1461 = vsel %vm1460, %v1428, %v796
      %v1462 = vsel %vm1460, %v1429, %v798
      %v1463 = vsel %vm1460, %v1430, %v800
      %v1464 = vsel %vm1460, %v1431, %v802
      %v1465 = vsel %vm1460, %v1432, %v804
      %v1466 = vsel %vm1460, %v1433, %v806
      %v1467 = vsel %vm1460, %v1434, %v808
      %v1468 = vsel %vm1460, %v1435, %v810
      %v1469 = vsel %vm1460, %v1436, %v812
      %v1470 = vsel %vm1460, %v1437, %v814
      %v1471 = vsel %vm1460, %v1438, %v816
      %v1472 = vsel %vm1460, %v1439, %v818
      %v1473 = vsel %vm1460, %v1440, %v820
      %v1474 = vsel %vm1460, %v1441, %v822
      %v1475 = vsel %vm1460, %v1442, %v824
      %v1476 = vsel %vm1460, %v1443, %v826
      %v1477 = vsel %vm1460, %v1444, %v828
      %v1478 = vsel %vm1460, %v1445, %v830
      %v1479 = vsel %vm1460, %v1446, %v832
      %v1480 = vsel %vm1460, %v1447, %v834
      %v1481 = vsel %vm1460, %v1448, %v836
      %v1482 = vsel %vm1460, %v1449, %v838
      %v1483 = vsel %vm1460, %v1450, %v840
      %v1484 = vsel %vm1460, %v1451, %v842
      %v1485 = vsel %vm1460, %v1452, %v844
      %v1486 = vsel %vm1460, %v1453, %v846
      %v1487 = vsel %vm1460, %v1454, %v848
      %v1488 = vsel %vm1460, %v1455, %v850
      %v1489 = vsel %vm1460, %v1456, %v852
      %v1490 = vsel %vm1460, %v1457, %v854
      %v1491 = vsel %vm1460, %v1458, %v856
      %v1492 = vsel %vm1460, %v1459, %v858
      %vm1493 = vcmask 130048
      %v1494 = vsel %vm1493, %v1461, %v898
      %v1495 = vsel %vm1493, %v1462, %v900
      %v1496 = vsel %vm1493, %v1463, %v902
      %v1497 = vsel %vm1493, %v1464, %v904
      %v1498 = vsel %vm1493, %v1465, %v906
      %v1499 = vsel %vm1493, %v1466, %v908
      %v1500 = vsel %vm1493, %v1467, %v910
      %v1501 = vsel %vm1493, %v1468, %v912
      %v1502 = vsel %vm1493, %v1469, %v914
      %v1503 = vsel %vm1493, %v1470, %v916
      %v1504 = vsel %vm1493, %v1471, %v918
      %v1505 = vsel %vm1493, %v1472, %v920
      %v1506 = vsel %vm1493, %v1473, %v922
      %v1507 = vsel %vm1493, %v1474, %v924
      %v1508 = vsel %vm1493, %v1475, %v926
      %v1509 = vsel %vm1493, %v1476, %v928
      %v1510 = vsel %vm1493, %v1477, %v930
      %v1511 = vsel %vm1493, %v1478, %v932
      %v1512 = vsel %vm1493, %v1479, %v934
      %v1513 = vsel %vm1493, %v1480, %v936
      %v1514 = vsel %vm1493, %v1481, %v938
      %v1515 = vsel %vm1493, %v1482, %v940
      %v1516 = vsel %vm1493, %v1483, %v942
      %v1517 = vsel %vm1493, %v1484, %v944
      %v1518 = vsel %vm1493, %v1485, %v946
      %v1519 = vsel %vm1493, %v1486, %v948
      %v1520 = vsel %vm1493, %v1487, %v950
      %v1521 = vsel %vm1493, %v1488, %v952
      %v1522 = vsel %vm1493, %v1489, %v954
      %v1523 = vsel %vm1493, %v1490, %v956
      %v1524 = vsel %vm1493, %v1491, %v958
      %v1525 = vsel %vm1493, %v1492, %v960
      %vm1526 = vcmask 162816
      %v1527 = vsel %vm1526, %v1494, %v999
      %v1528 = vsel %vm1526, %v1495, %v1001
      %v1529 = vsel %vm1526, %v1496, %v1003
      %v1530 = vsel %vm1526, %v1497, %v1005
      %v1531 = vsel %vm1526, %v1498, %v1007
      %v1532 = vsel %vm1526, %v1499, %v1009
      %v1533 = vsel %vm1526, %v1500, %v1011
      %v1534 = vsel %vm1526, %v1501, %v1013
      %v1535 = vsel %vm1526, %v1502, %v1015
      %v1536 = vsel %vm1526, %v1503, %v1017
      %v1537 = vsel %vm1526, %v1504, %v1019
      %v1538 = vsel %vm1526, %v1505, %v1021
      %v1539 = vsel %vm1526, %v1506, %v1023
      %v1540 = vsel %vm1526, %v1507, %v1025
      %v1541 = vsel %vm1526, %v1508, %v1027
      %v1542 = vsel %vm1526, %v1509, %v1029
      %v1543 = vsel %vm1526, %v1510, %v1031
      %v1544 = vsel %vm1526, %v1511, %v1033
      %v1545 = vsel %vm1526, %v1512, %v1035
      %v1546 = vsel %vm1526, %v1513, %v1037
      %v1547 = vsel %vm1526, %v1514, %v1039
      %v1548 = vsel %vm1526, %v1515, %v1041
      %v1549 = vsel %vm1526, %v1516, %v1043
      %v1550 = vsel %vm1526, %v1517, %v1045
      %v1551 = vsel %vm1526, %v1518, %v1047
      %v1552 = vsel %vm1526, %v1519, %v1049
      %v1553 = vsel %vm1526, %v1520, %v1051
      %v1554 = vsel %vm1526, %v1521, %v1053
      %v1555 = vsel %vm1526, %v1522, %v1055
      %v1556 = vsel %vm1526, %v1523, %v1057
      %v1557 = vsel %vm1526, %v1524, %v1059
      %v1558 = vsel %vm1526, %v1525, %v1061
      %vm1559 = vcmask 195584
      %v1560 = vsel %vm1559, %v1527, %v1097
      %v1561 = vsel %vm1559, %v1528, %v1099
      %v1562 = vsel %vm1559, %v1529, %v1101
      %v1563 = vsel %vm1559, %v1530, %v1103
      %v1564 = vsel %vm1559, %v1531, %v1105
      %v1565 = vsel %vm1559, %v1532, %v1107
      %v1566 = vsel %vm1559, %v1533, %v1109
      %v1567 = vsel %vm1559, %v1534, %v1111
      %v1568 = vsel %vm1559, %v1535, %v1113
      %v1569 = vsel %vm1559, %v1536, %v1115
      %v1570 = vsel %vm1559, %v1537, %v1117
      %v1571 = vsel %vm1559, %v1538, %v1119
      %v1572 = vsel %vm1559, %v1539, %v1121
      %v1573 = vsel %vm1559, %v1540, %v1123
      %v1574 = vsel %vm1559, %v1541, %v1125
      %v1575 = vsel %vm1559, %v1542, %v1127
      %v1576 = vsel %vm1559, %v1543, %v1129
      %v1577 = vsel %vm1559, %v1544, %v1131
      %v1578 = vsel %vm1559, %v1545, %v1133
      %v1579 = vsel %vm1559, %v1546, %v1135
      %v1580 = vsel %vm1559, %v1547, %v1137
      %v1581 = vsel %vm1559, %v1548, %v1139
      %v1582 = vsel %vm1559, %v1549, %v1141
      %v1583 = vsel %vm1559, %v1550, %v1143
      %v1584 = vsel %vm1559, %v1551, %v1145
      %v1585 = vsel %vm1559, %v1552, %v1147
      %v1586 = vsel %vm1559, %v1553, %v1149
      %v1587 = vsel %vm1559, %v1554, %v1151
      %v1588 = vsel %vm1559, %v1555, %v1153
      %v1589 = vsel %vm1559, %v1556, %v1155
      %v1590 = vsel %vm1559, %v1557, %v1157
      %v1591 = vsel %vm1559, %v1558, %v1159
      %vm1592 = vcmask 228352
      %v1593 = vsel %vm1592, %v1560, %v1199
      %v1594 = vsel %vm1592, %v1561, %v1201
      %v1595 = vsel %vm1592, %v1562, %v1203
      %v1596 = vsel %vm1592, %v1563, %v1205
      %v1597 = vsel %vm1592, %v1564, %v1207
      %v1598 = vsel %vm1592, %v1565, %v1209
      %v1599 = vsel %vm1592, %v1566, %v1211
      %v1600 = vsel %vm1592, %v1567, %v1213
      %v1601 = vsel %vm1592, %v1568, %v1215
      %v1602 = vsel %vm1592, %v1569, %v1217
      %v1603 = vsel %vm1592, %v1570, %v1219
      %v1604 = vsel %vm1592, %v1571, %v1221
      %v1605 = vsel %vm1592, %v1572, %v1223
      %v1606 = vsel %vm1592, %v1573, %v1225
      %v1607 = vsel %vm1592, %v1574, %v1227
      %v1608 = vsel %vm1592, %v1575, %v1229
      %v1609 = vsel %vm1592, %v1576, %v1231
      %v1610 = vsel %vm1592, %v1577, %v1233
      %v1611 = vsel %vm1592, %v1578, %v1235
      %v1612 = vsel %vm1592, %v1579, %v1237
      %v1613 = vsel %vm1592, %v1580, %v1239
      %v1614 = vsel %vm1592, %v1581, %v1241
      %v1615 = vsel %vm1592, %v1582, %v1243
      %v1616 = vsel %vm1592, %v1583, %v1245
      %v1617 = vsel %vm1592, %v1584, %v1247
      %v1618 = vsel %vm1592, %v1585, %v1249
      %v1619 = vsel %vm1592, %v1586, %v1251
      %v1620 = vsel %vm1592, %v1587, %v1253
      %v1621 = vsel %vm1592, %v1588, %v1255
      %v1622 = vsel %vm1592, %v1589, %v1257
      %v1623 = vsel %vm1592, %v1590, %v1259
      %v1624 = vsel %vm1592, %v1591, %v1261
      %vm1625 = vcmask 261120
      %v1626 = vsel %vm1625, %v1593, %v1300
      %v1627 = vsel %vm1625, %v1594, %v1302
      %v1628 = vsel %vm1625, %v1595, %v1304
      %v1629 = vsel %vm1625, %v1596, %v1306
      %v1630 = vsel %vm1625, %v1597, %v1308
      %v1631 = vsel %vm1625, %v1598, %v1310
      %v1632 = vsel %vm1625, %v1599, %v1312
      %v1633 = vsel %vm1625, %v1600, %v1314
      %v1634 = vsel %vm1625, %v1601, %v1316
      %v1635 = vsel %vm1625, %v1602, %v1318
      %v1636 = vsel %vm1625, %v1603, %v1320
      %v1637 = vsel %vm1625, %v1604, %v1322
      %v1638 = vsel %vm1625, %v1605, %v1324
      %v1639 = vsel %vm1625, %v1606, %v1326
      %v1640 = vsel %vm1625, %v1607, %v1328
      %v1641 = vsel %vm1625, %v1608, %v1330
      %v1642 = vsel %vm1625, %v1609, %v1332
      %v1643 = vsel %vm1625, %v1610, %v1334
      %v1644 = vsel %vm1625, %v1611, %v1336
      %v1645 = vsel %vm1625, %v1612, %v1338
      %v1646 = vsel %vm1625, %v1613, %v1340
      %v1647 = vsel %vm1625, %v1614, %v1342
      %v1648 = vsel %vm1625, %v1615, %v1344
      %v1649 = vsel %vm1625, %v1616, %v1346
      %v1650 = vsel %vm1625, %v1617, %v1348
      %v1651 = vsel %vm1625, %v1618, %v1350
      %v1652 = vsel %vm1625, %v1619, %v1352
      %v1653 = vsel %vm1625, %v1620, %v1354
      %v1654 = vsel %vm1625, %v1621, %v1356
      %v1655 = vsel %vm1625, %v1622, %v1358
      %v1656 = vsel %vm1625, %v1623, %v1360
      %v1657 = vsel %vm1625, %v1624, %v1362
      %v1658 = vld [vmem:[%s3] sm:$0x1]
      %v1660 = vlaneseq
      %v1661 = vshrl.u32 %v1660, 7
      %v1662 = vsub.s32 0, %v1661
      %v1663 = vrot.slane %v1658, %v1662
      %vm1665 = vcmask 293888
      %v1667 = vsel %vm1665, %v1626, 0
      %v1670 = vsel %vm1665, %v1627, 0
      %v1673 = vsel %vm1665, %v1628, 0
      %v1676 = vsel %vm1665, %v1629, 0
      %v1679 = vsel %vm1665, %v1630, 0
      %v1682 = vsel %vm1665, %v1631, 0
      %v1685 = vsel %vm1665, %v1632, 0
      %v1688 = vsel %vm1665, %v1633, 0
      %v1691 = vsel %vm1665, %v1634, 0
      %v1694 = vsel %vm1665, %v1635, 0
      %v1697 = vsel %vm1665, %v1636, 0
      %v1700 = vsel %vm1665, %v1637, 0
      %v1703 = vsel %vm1665, %v1638, 0
      %v1706 = vsel %vm1665, %v1639, 0
      %v1709 = vsel %vm1665, %v1640, 0
      %v1712 = vsel %vm1665, %v1641, 0
      %v1715 = vsel %vm1665, %v1642, 0
      %v1718 = vsel %vm1665, %v1643, 0
      %v1721 = vsel %vm1665, %v1644, 0
      %v1724 = vsel %vm1665, %v1645, 0
      %v1727 = vsel %vm1665, %v1646, 0
      %v1730 = vsel %vm1665, %v1647, 0
      %v1733 = vsel %vm1665, %v1648, 0
      %v1736 = vsel %vm1665, %v1649, 0
      %v1739 = vsel %vm1665, %v1650, 0
      %v1742 = vsel %vm1665, %v1651, 0
      %v1745 = vsel %vm1665, %v1652, 0
      %v1748 = vsel %vm1665, %v1653, 0
      %v1751 = vsel %vm1665, %v1654, 0
      %v1754 = vsel %vm1665, %v1655, 0
      %v1757 = vsel %vm1665, %v1656, 0
      %v1760 = vsel %vm1665, %v1657, 0
      %vm1762 = vcmask 1043456
      %v1764 = vsel %vm1762, %v390, 0
      %1766 = vmatprep.subr.mxu0 0.0
      %1767 = vmatpush1.msra.mxu0 %v386
      %1768 = vmatprep.subr.mxu0 0.0
      %1769 = vmatpush1.msra.mxu0 %v387
      %1770 = vmatprep.subr.mxu0 0.0
      %1771 = vmatpush1.msra.mxu0 %v388
      %1772 = vmatprep.subr.mxu0 0.0
      %1773 = vmatpush1.msra.mxu0 %v389
      %1774 = vmatprep.subr.mxu0 0.0
      %1775 = vmatpush1.msra.mxu0 %v1764
      %1776 = vmatprep.subr.mxu0 0.0
      %1777 = vmatpush1.msra.mxu0 0.0
      %1778 = vmatprep.subr.mxu0 0.0
      %1779 = vmatpush1.msra.mxu0 0.0
      %1780 = vmatprep.subr.mxu0 0.0
      %1781 = vmatpush1.msra.mxu0 0.0
      %1782 = vmatprep.subr.mxu0 0.0
      %1783 = vmatpush1.msra.mxu0 0.0
      %1784 = vmatprep.subr.mxu0 0.0
      %1785 = vmatpush1.msra.mxu0 0.0
      %1786 = vmatprep.subr.mxu0 0.0
      %1787 = vmatpush1.msra.mxu0 0.0
      %1788 = vmatprep.subr.mxu0 0.0
      %1789 = vmatpush1.msra.mxu0 0.0
      %1790 = vmatprep.subr.mxu0 0.0
      %1791 = vmatpush1.msra.mxu0 0.0
      %1792 = vmatprep.subr.mxu0 0.0
      %1793 = vmatpush1.msra.mxu0 0.0
      %1794 = vmatprep.subr.mxu0 0.0
      %1795 = vmatpush1.msra.mxu0 0.0
      %1796 = vmatprep.subr.mxu0 0.0
      %1797 = vmatpush1.msra.mxu0 0.0
      %1798 = vmatprep.subr.mxu0 0.0
      %1799 = vmatpush1.msra.mxu0 0.0
      %1800 = vmatprep.subr.mxu0 0.0
      %1801 = vmatpush1.msra.mxu0 0.0
      %1802 = vmatprep.subr.mxu0 0.0
      %1803 = vmatpush1.msra.mxu0 0.0
      %1804 = vmatprep.subr.mxu0 0.0
      %1805 = vmatpush1.msra.mxu0 0.0
      %1806 = vmatprep.subr.mxu0 0.0
      %1807 = vmatpush1.msra.mxu0 0.0
      %1808 = vmatprep.subr.mxu0 0.0
      %1809 = vmatpush1.msra.mxu0 0.0
      %1810 = vmatprep.subr.mxu0 0.0
      %1811 = vmatpush1.msra.mxu0 0.0
      %1812 = vmatprep.subr.mxu0 0.0
      %1813 = vmatpush1.msra.mxu0 0.0
      %1814 = vmatprep.subr.mxu0 0.0
      %1815 = vmatpush1.msra.mxu0 0.0
      %1816 = vmatprep.subr.mxu0 0.0
      %1817 = vmatpush1.msra.mxu0 0.0
      %1818 = vmatprep.subr.mxu0 0.0
      %1819 = vmatpush1.msra.mxu0 0.0
      %1820 = vmatprep.subr.mxu0 0.0
      %1821 = vmatpush1.msra.mxu0 0.0
      %1822 = vmatprep.subr.mxu0 0.0
      %1823 = vmatpush1.msra.mxu0 0.0
      %1824 = vmatprep.subr.mxu0 0.0
      %1825 = vmatpush1.msra.mxu0 0.0
      %1826 = vmatprep.subr.mxu0 0.0
      %1827 = vmatpush1.msra.mxu0 0.0
      %1828 = vmatprep.subr.mxu0 0.0
      %1829 = vmatpush1.msra.mxu0 0.0
      %1830 = vmatprep.mubr.f32.mxu0 0.0
      %1831 = vmatmul.mubr.f32.gmra.mrb[0].mxu0 %v1667
      %v1832 = vpop.f32.mrb[0].mxu0
      %v1833 = vadd.f32 %v1663, %v1832
      %v1834 = vpop.f32.mrb[0].mxu0
      %1835 = vmatprep.mubr.f32.mxu0 0.0
      %1836 = vmatmul.mubr.f32.gmra.mrb[0].mxu0 %v1670
      %v1837 = vpop.f32.mrb[0].mxu0
      %v1838 = vadd.f32 %v1663, %v1837
      %v1839 = vpop.f32.mrb[0].mxu0
      %1840 = vmatprep.mubr.f32.mxu0 0.0
      %1841 = vmatmul.mubr.f32.gmra.mrb[0].mxu0 %v1673
      %v1842 = vpop.f32.mrb[0].mxu0
      %v1843 = vadd.f32 %v1663, %v1842
      %v1844 = vpop.f32.mrb[0].mxu0
      %1845 = vmatprep.mubr.f32.mxu0 0.0
      %1846 = vmatmul.mubr.f32.gmra.mrb[0].mxu0 %v1676
      %v1847 = vpop.f32.mrb[0].mxu0
      %v1848 = vadd.f32 %v1663, %v1847
      %v1849 = vpop.f32.mrb[0].mxu0
      %1850 = vmatprep.mubr.f32.mxu0 0.0
      %1851 = vmatmul.mubr.f32.gmra.mrb[0].mxu0 %v1679
      %v1852 = vpop.f32.mrb[0].mxu0
      %v1853 = vadd.f32 %v1663, %v1852
      %v1854 = vpop.f32.mrb[0].mxu0
      %1855 = vmatprep.mubr.f32.mxu0 0.0
      %1856 = vmatmul.mubr.f32.gmra.mrb[0].mxu0 %v1682
      %v1857 = vpop.f32.mrb[0].mxu0
      %v1858 = vadd.f32 %v1663, %v1857
      %v1859 = vpop.f32.mrb[0].mxu0
      %1860 = vmatprep.mubr.f32.mxu0 0.0
      %1861 = vmatmul.mubr.f32.gmra.mrb[0].mxu0 %v1685
      %v1862 = vpop.f32.mrb[0].mxu0
      %v1863 = vadd.f32 %v1663, %v1862
      %v1864 = vpop.f32.mrb[0].mxu0
      %1865 = vmatprep.mubr.f32.mxu0 0.0
      %1866 = vmatmul.mubr.f32.gmra.mrb[0].mxu0 %v1688
      %v1867 = vpop.f32.mrb[0].mxu0
      %v1868 = vadd.f32 %v1663, %v1867
      %v1869 = vpop.f32.mrb[0].mxu0
      %1870 = vmatprep.mubr.f32.mxu0 0.0
      %1871 = vmatmul.mubr.f32.gmra.mrb[0].mxu0 %v1691
      %v1872 = vpop.f32.mrb[0].mxu0
      %v1873 = vadd.f32 %v1663, %v1872
      %v1874 = vpop.f32.mrb[0].mxu0
      %1875 = vmatprep.mubr.f32.mxu0 0.0
      %1876 = vmatmul.mubr.f32.gmra.mrb[0].mxu0 %v1694
      %v1877 = vpop.f32.mrb[0].mxu0
      %v1878 = vadd.f32 %v1663, %v1877
      %v1879 = vpop.f32.mrb[0].mxu0
      %1880 = vmatprep.mubr.f32.mxu0 0.0
      %1881 = vmatmul.mubr.f32.gmra.mrb[0].mxu0 %v1697
      %v1882 = vpop.f32.mrb[0].mxu0
      %v1883 = vadd.f32 %v1663, %v1882
      %v1884 = vpop.f32.mrb[0].mxu0
      %1885 = vmatprep.mubr.f32.mxu0 0.0
      %1886 = vmatmul.mubr.f32.gmra.mrb[0].mxu0 %v1700
      %v1887 = vpop.f32.mrb[0].mxu0
      %v1888 = vadd.f32 %v1663, %v1887
      %v1889 = vpop.f32.mrb[0].mxu0
      %1890 = vmatprep.mubr.f32.mxu0 0.0
      %1891 = vmatmul.mubr.f32.gmra.mrb[0].mxu0 %v1703
      %v1892 = vpop.f32.mrb[0].mxu0
      %v1893 = vadd.f32 %v1663, %v1892
      %v1894 = vpop.f32.mrb[0].mxu0
      %1895 = vmatprep.mubr.f32.mxu0 0.0
      %1896 = vmatmul.mubr.f32.gmra.mrb[0].mxu0 %v1706
      %v1897 = vpop.f32.mrb[0].mxu0
      %v1898 = vadd.f32 %v1663, %v1897
      %v1899 = vpop.f32.mrb[0].mxu0
      %1900 = vmatprep.mubr.f32.mxu0 0.0
      %1901 = vmatmul.mubr.f32.gmra.mrb[0].mxu0 %v1709
      %v1902 = vpop.f32.mrb[0].mxu0
      %v1903 = vadd.f32 %v1663, %v1902
      %v1904 = vpop.f32.mrb[0].mxu0
      %1905 = vmatprep.mubr.f32.mxu0 0.0
      %1906 = vmatmul.mubr.f32.gmra.mrb[0].mxu0 %v1712
      %v1907 = vpop.f32.mrb[0].mxu0
      %v1908 = vadd.f32 %v1663, %v1907
      %v1909 = vpop.f32.mrb[0].mxu0
      %1910 = vmatprep.mubr.f32.mxu0 0.0
      %1911 = vmatmul.mubr.f32.gmra.mrb[0].mxu0 %v1715
      %v1912 = vpop.f32.mrb[0].mxu0
      %v1913 = vadd.f32 %v1663, %v1912
      %v1914 = vpop.f32.mrb[0].mxu0
      %1915 = vmatprep.mubr.f32.mxu0 0.0
      %1916 = vmatmul.mubr.f32.gmra.mrb[0].mxu0 %v1718
      %v1917 = vpop.f32.mrb[0].mxu0
      %v1918 = vadd.f32 %v1663, %v1917
      %v1919 = vpop.f32.mrb[0].mxu0
      %1920 = vmatprep.mubr.f32.mxu0 0.0
      %1921 = vmatmul.mubr.f32.gmra.mrb[0].mxu0 %v1721
      %v1922 = vpop.f32.mrb[0].mxu0
      %v1923 = vadd.f32 %v1663, %v1922
      %v1924 = vpop.f32.mrb[0].mxu0
      %1925 = vmatprep.mubr.f32.mxu0 0.0
      %1926 = vmatmul.mubr.f32.gmra.mrb[0].mxu0 %v1724
      %v1927 = vpop.f32.mrb[0].mxu0
      %v1928 = vadd.f32 %v1663, %v1927
      %v1929 = vpop.f32.mrb[0].mxu0
      %1930 = vmatprep.mubr.f32.mxu0 0.0
      %1931 = vmatmul.mubr.f32.gmra.mrb[0].mxu0 %v1727
      %v1932 = vpop.f32.mrb[0].mxu0
      %v1933 = vadd.f32 %v1663, %v1932
      %v1934 = vpop.f32.mrb[0].mxu0
      %1935 = vmatprep.mubr.f32.mxu0 0.0
      %1936 = vmatmul.mubr.f32.gmra.mrb[0].mxu0 %v1730
      %v1937 = vpop.f32.mrb[0].mxu0
      %v1938 = vadd.f32 %v1663, %v1937
      %v1939 = vpop.f32.mrb[0].mxu0
      %1940 = vmatprep.mubr.f32.mxu0 0.0
      %1941 = vmatmul.mubr.f32.gmra.mrb[0].mxu0 %v1733
      %v1942 = vpop.f32.mrb[0].mxu0
      %v1943 = vadd.f32 %v1663, %v1942
      %v1944 = vpop.f32.mrb[0].mxu0
      %1945 = vmatprep.mubr.f32.mxu0 0.0
      %1946 = vmatmul.mubr.f32.gmra.mrb[0].mxu0 %v1736
      %v1947 = vpop.f32.mrb[0].mxu0
      %v1948 = vadd.f32 %v1663, %v1947
      %v1949 = vpop.f32.mrb[0].mxu0
      %1950 = vmatprep.mubr.f32.mxu0 0.0
      %1951 = vmatmul.mubr.f32.gmra.mrb[0].mxu0 %v1739
      %v1952 = vpop.f32.mrb[0].mxu0
      %v1953 = vadd.f32 %v1663, %v1952
      %v1954 = vpop.f32.mrb[0].mxu0
      %1955 = vmatprep.mubr.f32.mxu0 0.0
      %1956 = vmatmul.mubr.f32.gmra.mrb[0].mxu0 %v1742
      %v1957 = vpop.f32.mrb[0].mxu0
      %v1958 = vadd.f32 %v1663, %v1957
      %v1959 = vpop.f32.mrb[0].mxu0
      %1960 = vmatprep.mubr.f32.mxu0 0.0
      %1961 = vmatmul.mubr.f32.gmra.mrb[0].mxu0 %v1745
      %v1962 = vpop.f32.mrb[0].mxu0
      %v1963 = vadd.f32 %v1663, %v1962
      %v1964 = vpop.f32.mrb[0].mxu0
      %1965 = vmatprep.mubr.f32.mxu0 0.0
      %1966 = vmatmul.mubr.f32.gmra.mrb[0].mxu0 %v1748
      %v1967 = vpop.f32.mrb[0].mxu0
      %v1968 = vadd.f32 %v1663, %v1967
      %v1969 = vpop.f32.mrb[0].mxu0
      %1970 = vmatprep.mubr.f32.mxu0 0.0
      %1971 = vmatmul.mubr.f32.gmra.mrb[0].mxu0 %v1751
      %v1972 = vpop.f32.mrb[0].mxu0
      %v1973 = vadd.f32 %v1663, %v1972
      %v1974 = vpop.f32.mrb[0].mxu0
      %1975 = vmatprep.mubr.f32.mxu0 0.0
      %1976 = vmatmul.mubr.f32.gmra.mrb[0].mxu0 %v1754
      %v1977 = vpop.f32.mrb[0].mxu0
      %v1978 = vadd.f32 %v1663, %v1977
      %v1979 = vpop.f32.mrb[0].mxu0
      %1980 = vmatprep.mubr.f32.mxu0 0.0
      %1981 = vmatmul.mubr.f32.gmra.mrb[0].mxu0 %v1757
      %v1982 = vpop.f32.mrb[0].mxu0
      %v1983 = vadd.f32 %v1663, %v1982
      %v1984 = vpop.f32.mrb[0].mxu0
      %1985 = vmatprep.mubr.f32.mxu0 0.0
      %1986 = vmatmul.mubr.f32.gmra.mrb[0].mxu0 %v1760
      %v1987 = vpop.f32.mrb[0].mxu0
      %v1988 = vadd.f32 %v1663, %v1987
      %v1989 = vpop.f32.mrb[0].mxu0
      %1990 = vdwg.mxu0
      %v1991 = vmax.f32 %v1833, 0.0
      %v1992 = vmax.f32 %v1838, 0.0
      %v1993 = vmax.f32 %v1843, 0.0
      %v1994 = vmax.f32 %v1848, 0.0
      %v1995 = vmax.f32 %v1853, 0.0
      %v1996 = vmax.f32 %v1858, 0.0
      %v1997 = vmax.f32 %v1863, 0.0
      %v1998 = vmax.f32 %v1868, 0.0
      %v1999 = vmax.f32 %v1873, 0.0
      %v2000 = vmax.f32 %v1878, 0.0
      %v2001 = vmax.f32 %v1883, 0.0
      %v2002 = vmax.f32 %v1888, 0.0
      %v2003 = vmax.f32 %v1893, 0.0
      %v2004 = vmax.f32 %v1898, 0.0
      %v2005 = vmax.f32 %v1903, 0.0
      %v2006 = vmax.f32 %v1908, 0.0
      %v2007 = vmax.f32 %v1913, 0.0
      %v2008 = vmax.f32 %v1918, 0.0
      %v2009 = vmax.f32 %v1923, 0.0
      %v2010 = vmax.f32 %v1928, 0.0
      %v2011 = vmax.f32 %v1933, 0.0
      %v2012 = vmax.f32 %v1938, 0.0
      %v2013 = vmax.f32 %v1943, 0.0
      %v2014 = vmax.f32 %v1948, 0.0
      %v2015 = vmax.f32 %v1953, 0.0
      %v2016 = vmax.f32 %v1958, 0.0
      %v2017 = vmax.f32 %v1963, 0.0
      %v2018 = vmax.f32 %v1968, 0.0
      %v2019 = vmax.f32 %v1973, 0.0
      %v2020 = vmax.f32 %v1978, 0.0
      %v2021 = vmax.f32 %v1983, 0.0
      %v2022 = vmax.f32 %v1988, 0.0
      %2023 = vst.msk [vmem:[%s234 + $0x1] sm:$0xff] %vm225, %v1991
      %2024 = vst.msk [vmem:[%s234 + $0x9] sm:$0xff] %vm225, %v1992
      %2025 = vst.msk [vmem:[%s234 + $0x19] sm:$0xff] %vm225, %v1993
      %2026 = vst.msk [vmem:[%s234 + $0x21] sm:$0xff] %vm225, %v1994
      %2027 = vst.msk [vmem:[%s234 + $0x31] sm:$0xff] %vm225, %v1995
      %2028 = vst.msk [vmem:[%s234 + $0x39] sm:$0xff] %vm225, %v1996
      %2029 = vst.msk [vmem:[%s234 + $0x49] sm:$0xff] %vm225, %v1997
      %2030 = vst.msk [vmem:[%s234 + $0x51] sm:$0xff] %vm225, %v1998
      %2031 = vst.msk [vmem:[%s234 + $0x61] sm:$0xff] %vm225, %v1999
      %2032 = vst.msk [vmem:[%s234 + $0x69] sm:$0xff] %vm225, %v2000
      %2033 = vst.msk [vmem:[%s234 + $0x79] sm:$0xff] %vm225, %v2001
      %2034 = vst.msk [vmem:[%s234 + $0x81] sm:$0xff] %vm225, %v2002
      %2035 = vst.msk [vmem:[%s234 + $0x91] sm:$0xff] %vm225, %v2003
      %2036 = vst.msk [vmem:[%s234 + $0x99] sm:$0xff] %vm225, %v2004
      %2037 = vst.msk [vmem:[%s234 + $0xa9] sm:$0xff] %vm225, %v2005
      %2038 = vst.msk [vmem:[%s234 + $0xb1] sm:$0xff] %vm225, %v2006
      %2039 = vst.msk [vmem:[%s234 + $0xc1] sm:$0xff] %vm225, %v2007
      %2040 = vst.msk [vmem:[%s234 + $0xc9] sm:$0xff] %vm225, %v2008
      %2041 = vst.msk [vmem:[%s234 + $0xd9] sm:$0xff] %vm225, %v2009
      %2042 = vst.msk [vmem:[%s234 + $0xe1] sm:$0xff] %vm225, %v2010
      %2043 = vst.msk [vmem:[%s234 + $0xf1] sm:$0xff] %vm225, %v2011
      %2044 = vst.msk [vmem:[%s234 + $0xf9] sm:$0xff] %vm225, %v2012
      %2045 = vst.msk [vmem:[%s234 + $0x109] sm:$0xff] %vm225, %v2013
      %2046 = vst.msk [vmem:[%s234 + $0x111] sm:$0xff] %vm225, %v2014
      %2047 = vst.msk [vmem:[%s234 + $0x121] sm:$0xff] %vm225, %v2015
      %2048 = vst.msk [vmem:[%s234 + $0x129] sm:$0xff] %vm225, %v2016
      %2049 = vst.msk [vmem:[%s234 + $0x139] sm:$0xff] %vm225, %v2017
      %2050 = vst.msk [vmem:[%s234 + $0x141] sm:$0xff] %vm225, %v2018
      %2051 = vst.msk [vmem:[%s234 + $0x151] sm:$0xff] %vm225, %v2019
      %2052 = vst.msk [vmem:[%s234 + $0x159] sm:$0xff] %vm225, %v2020
      %2053 = vst.msk [vmem:[%s234 + $0x169] sm:$0xff] %vm225, %v2021
      %2054 = vst.msk [vmem:[%s234 + $0x171] sm:$0xff] %vm225, %v2022
      %v2055 = vld [vmem:[#allocation2] sm:$0xff]
      %v2056 = vld [vmem:[#allocation2 + $0x8] sm:$0xff]
      %v2057 = vld [vmem:[#allocation2 + $0x10] sm:$0x3]
      %v2058 = vld [vmem:[#allocation2 + $0x18] sm:$0xff]
      %v2059 = vld [vmem:[#allocation2 + $0x20] sm:$0xff]
      %v2060 = vld [vmem:[#allocation2 + $0x28] sm:$0x3]
      %v2061 = vld [vmem:[#allocation2 + $0x30] sm:$0xff]
      %v2062 = vld [vmem:[#allocation2 + $0x38] sm:$0xff]
      %v2063 = vld [vmem:[#allocation2 + $0x40] sm:$0x3]
      %v2064 = vld [vmem:[#allocation2 + $0x48] sm:$0xff]
      %v2065 = vld [vmem:[#allocation2 + $0x50] sm:$0xff]
      %v2066 = vld [vmem:[#allocation2 + $0x58] sm:$0x3]
      %v2067 = vld [vmem:[#allocation2 + $0x60] sm:$0xff]
      %v2068 = vld [vmem:[#allocation2 + $0x68] sm:$0xff]
      %v2069 = vld [vmem:[#allocation2 + $0x70] sm:$0x3]
      %v2070 = vld [vmem:[#allocation2 + $0x78] sm:$0xff]
      %v2071 = vld [vmem:[#allocation2 + $0x80] sm:$0xff]
      %v2072 = vld [vmem:[#allocation2 + $0x88] sm:$0x3]
      %v2073 = vld [vmem:[#allocation2 + $0x90] sm:$0xff]
      %v2074 = vld [vmem:[#allocation2 + $0x98] sm:$0xff]
      %v2075 = vld [vmem:[#allocation2 + $0xa0] sm:$0x3]
      %v2076 = vld [vmem:[#allocation2 + $0xa8] sm:$0xff]
      %v2077 = vld [vmem:[#allocation2 + $0xb0] sm:$0xff]
      %v2078 = vld [vmem:[#allocation2 + $0xb8] sm:$0x3]
      %v2079 = vld [vmem:[#allocation2 + $0xc0] sm:$0xff]
      %v2080 = vld [vmem:[#allocation2 + $0xc8] sm:$0xff]
      %v2081 = vld [vmem:[#allocation2 + $0xd0] sm:$0x3]
      %v2082 = vld [vmem:[#allocation2 + $0xd8] sm:$0xff]
      %v2083 = vld [vmem:[#allocation2 + $0xe0] sm:$0xff]
      %v2084 = vld [vmem:[#allocation2 + $0xe8] sm:$0x3]
      %v2085 = vld [vmem:[#allocation2 + $0xf0] sm:$0xff]
      %v2086 = vld [vmem:[#allocation2 + $0xf8] sm:$0xff]
      %v2087 = vld [vmem:[#allocation2 + $0x100] sm:$0x3]
      %v2088 = vld [vmem:[#allocation2 + $0x108] sm:$0xff]
      %v2089 = vld [vmem:[#allocation2 + $0x110] sm:$0xff]
      %v2090 = vld [vmem:[#allocation2 + $0x118] sm:$0x3]
      %v2091 = vld [vmem:[#allocation2 + $0x120] sm:$0xff]
      %v2092 = vld [vmem:[#allocation2 + $0x128] sm:$0xff]
      %v2093 = vld [vmem:[#allocation2 + $0x130] sm:$0x3]
      %v2094 = vld [vmem:[#allocation2 + $0x138] sm:$0xff]
      %v2095 = vld [vmem:[#allocation2 + $0x140] sm:$0xff]
      %v2096 = vld [vmem:[#allocation2 + $0x148] sm:$0x3]
      %v2097 = vld [vmem:[#allocation2 + $0x150] sm:$0xff]
      %v2098 = vld [vmem:[#allocation2 + $0x158] sm:$0xff]
      %v2099 = vld [vmem:[#allocation2 + $0x160] sm:$0x3]
      %v2100 = vld [vmem:[#allocation2 + $0x168] sm:$0xff]
      %v2101 = vld [vmem:[#allocation2 + $0x170] sm:$0xff]
      %v2102 = vld [vmem:[#allocation2 + $0x178] sm:$0x3]
      %v2103 = vld [vmem:[#allocation2 + $0x180] sm:$0xff]
      %v2104 = vld [vmem:[#allocation2 + $0x188] sm:$0xff]
      %v2105 = vld [vmem:[#allocation2 + $0x190] sm:$0x3]
      %v2106 = vld [vmem:[#allocation2 + $0x198] sm:$0xff]
      %v2107 = vld [vmem:[#allocation2 + $0x1a0] sm:$0xff]
      %v2108 = vld [vmem:[#allocation2 + $0x1a8] sm:$0x3]
      %v2109 = vld [vmem:[%s2] sm:$0xff]
      %v2110 = vld [vmem:[%s2 + $0x8] sm:$0xff]
      %v2111 = vld [vmem:[%s2 + $0x10] sm:$0xff]
      %v2112 = vld [vmem:[%s2 + $0x18] sm:$0xff]
      %v2113 = vld [vmem:[%s2 + $0x20] sm:$0xf]
      %v2162 = vrot.slane %v2055, 1
      %v2163 = vrot.slane %v2056, 1
      %v2164 = vsel %vm439, %v2162, %v2163
      %v2165 = vrot.slane %v2057, 1
      %v2166 = vsel %vm439, %v2163, %v2165
      %v2167 = vrot.slane %v2058, 1
      %v2168 = vrot.slane %v2059, 1
      %v2169 = vsel %vm439, %v2167, %v2168
      %v2170 = vrot.slane %v2060, 1
      %v2171 = vsel %vm439, %v2168, %v2170
      %v2172 = vrot.slane %v2061, 1
      %v2173 = vrot.slane %v2062, 1
      %v2174 = vsel %vm439, %v2172, %v2173
      %v2175 = vrot.slane %v2063, 1
      %v2176 = vsel %vm439, %v2173, %v2175
      %v2177 = vrot.slane %v2064, 1
      %v2178 = vrot.slane %v2065, 1
      %v2179 = vsel %vm439, %v2177, %v2178
      %v2180 = vrot.slane %v2066, 1
      %v2181 = vsel %vm439, %v2178, %v2180
      %v2182 = vrot.slane %v2067, 1
      %v2183 = vrot.slane %v2068, 1
      %v2184 = vsel %vm439, %v2182, %v2183
      %v2185 = vrot.slane %v2069, 1
      %v2186 = vsel %vm439, %v2183, %v2185
      %v2187 = vrot.slane %v2070, 1
      %v2188 = vrot.slane %v2071, 1
      %v2189 = vsel %vm439, %v2187, %v2188
      %v2190 = vrot.slane %v2072, 1
      %v2191 = vsel %vm439, %v2188, %v2190
      %v2192 = vrot.slane %v2073, 1
      %v2193 = vrot.slane %v2074, 1
      %v2194 = vsel %vm439, %v2192, %v2193
      %v2195 = vrot.slane %v2075, 1
      %v2196 = vsel %vm439, %v2193, %v2195
      %v2197 = vrot.slane %v2076, 1
      %v2198 = vrot.slane %v2077, 1
      %v2199 = vsel %vm439, %v2197, %v2198
      %v2200 = vrot.slane %v2078, 1
      %v2201 = vsel %vm439, %v2198, %v2200
      %v2202 = vrot.slane %v2079, 1
      %v2203 = vrot.slane %v2080, 1
      %v2204 = vsel %vm439, %v2202, %v2203
      %v2205 = vrot.slane %v2081, 1
      %v2206 = vsel %vm439, %v2203, %v2205
      %v2207 = vrot.slane %v2082, 1
      %v2208 = vrot.slane %v2083, 1
      %v2209 = vsel %vm439, %v2207, %v2208
      %v2210 = vrot.slane %v2084, 1
      %v2211 = vsel %vm439, %v2208, %v2210
      %v2212 = vrot.slane %v2085, 1
      %v2213 = vrot.slane %v2086, 1
      %v2214 = vsel %vm439, %v2212, %v2213
      %v2215 = vrot.slane %v2087, 1
      %v2216 = vsel %vm439, %v2213, %v2215
      %v2217 = vrot.slane %v2088, 1
      %v2218 = vrot.slane %v2089, 1
      %v2219 = vsel %vm439, %v2217, %v2218
      %v2220 = vrot.slane %v2090, 1
      %v2221 = vsel %vm439, %v2218, %v2220
      %v2222 = vrot.slane %v2091, 1
      %v2223 = vrot.slane %v2092, 1
      %v2224 = vsel %vm439, %v2222, %v2223
      %v2225 = vrot.slane %v2093, 1
      %v2226 = vsel %vm439, %v2223, %v2225
      %v2227 = vrot.slane %v2094, 1
      %v2228 = vrot.slane %v2095, 1
      %v2229 = vsel %vm439, %v2227, %v2228
      %v2230 = vrot.slane %v2096, 1
      %v2231 = vsel %vm439, %v2228, %v2230
      %v2232 = vrot.slane %v2097, 1
      %v2233 = vrot.slane %v2098, 1
      %v2234 = vsel %vm439, %v2232, %v2233
      %v2235 = vrot.slane %v2099, 1
      %v2236 = vsel %vm439, %v2233, %v2235
      %v2237 = vrot.slane %v2100, 1
      %v2238 = vrot.slane %v2101, 1
      %v2239 = vsel %vm439, %v2237, %v2238
      %v2240 = vrot.slane %v2102, 1
      %v2241 = vsel %vm439, %v2238, %v2240
      %2242 = vrot.lane.b32.xlu0 %v2164, 4
      %v2243 = vpop.permute.xlu0 %2242
      %2244 = vrot.lane.b32.xlu0 %v2166, 4
      %v2245 = vpop.permute.xlu0 %2244
      %2246 = vrot.lane.b32.xlu0 %v2169, 4
      %v2247 = vpop.permute.xlu0 %2246
      %2248 = vrot.lane.b32.xlu0 %v2171, 4
      %v2249 = vpop.permute.xlu0 %2248
      %2250 = vrot.lane.b32.xlu0 %v2174, 4
      %v2251 = vpop.permute.xlu0 %2250
      %2252 = vrot.lane.b32.xlu0 %v2176, 4
      %v2253 = vpop.permute.xlu0 %2252
      %2254 = vrot.lane.b32.xlu0 %v2179, 4
      %v2255 = vpop.permute.xlu0 %2254
      %2256 = vrot.lane.b32.xlu0 %v2181, 4
      %v2257 = vpop.permute.xlu0 %2256
      %2258 = vrot.lane.b32.xlu0 %v2184, 4
      %v2259 = vpop.permute.xlu0 %2258
      %2260 = vrot.lane.b32.xlu0 %v2186, 4
      %v2261 = vpop.permute.xlu0 %2260
      %2262 = vrot.lane.b32.xlu0 %v2189, 4
      %v2263 = vpop.permute.xlu0 %2262
      %2264 = vrot.lane.b32.xlu0 %v2191, 4
      %v2265 = vpop.permute.xlu0 %2264
      %2266 = vrot.lane.b32.xlu0 %v2194, 4
      %v2267 = vpop.permute.xlu0 %2266
      %2268 = vrot.lane.b32.xlu0 %v2196, 4
      %v2269 = vpop.permute.xlu0 %2268
      %2270 = vrot.lane.b32.xlu0 %v2199, 4
      %v2271 = vpop.permute.xlu0 %2270
      %2272 = vrot.lane.b32.xlu0 %v2201, 4
      %v2273 = vpop.permute.xlu0 %2272
      %2274 = vrot.lane.b32.xlu0 %v2204, 4
      %v2275 = vpop.permute.xlu0 %2274
      %2276 = vrot.lane.b32.xlu0 %v2206, 4
      %v2277 = vpop.permute.xlu0 %2276
      %2278 = vrot.lane.b32.xlu0 %v2209, 4
      %v2279 = vpop.permute.xlu0 %2278
      %2280 = vrot.lane.b32.xlu0 %v2211, 4
      %v2281 = vpop.permute.xlu0 %2280
      %2282 = vrot.lane.b32.xlu0 %v2214, 4
      %v2283 = vpop.permute.xlu0 %2282
      %2284 = vrot.lane.b32.xlu0 %v2216, 4
      %v2285 = vpop.permute.xlu0 %2284
      %2286 = vrot.lane.b32.xlu0 %v2219, 4
      %v2287 = vpop.permute.xlu0 %2286
      %2288 = vrot.lane.b32.xlu0 %v2221, 4
      %v2289 = vpop.permute.xlu0 %2288
      %2290 = vrot.lane.b32.xlu0 %v2224, 4
      %v2291 = vpop.permute.xlu0 %2290
      %2292 = vrot.lane.b32.xlu0 %v2226, 4
      %v2293 = vpop.permute.xlu0 %2292
      %2294 = vrot.lane.b32.xlu0 %v2229, 4
      %v2295 = vpop.permute.xlu0 %2294
      %2296 = vrot.lane.b32.xlu0 %v2231, 4
      %v2297 = vpop.permute.xlu0 %2296
      %2298 = vrot.lane.b32.xlu0 %v2234, 4
      %v2299 = vpop.permute.xlu0 %2298
      %2300 = vrot.lane.b32.xlu0 %v2236, 4
      %v2301 = vpop.permute.xlu0 %2300
      %2302 = vrot.lane.b32.xlu0 %v2239, 4
      %v2303 = vpop.permute.xlu0 %2302
      %2304 = vrot.lane.b32.xlu0 %v2241, 4
      %v2305 = vpop.permute.xlu0 %2304
      %v2338 = vrot.slane %v2055, 2
      %v2339 = vrot.slane %v2056, 2
      %v2340 = vsel %vm616, %v2338, %v2339
      %v2341 = vrot.slane %v2057, 2
      %v2342 = vsel %vm616, %v2339, %v2341
      %v2343 = vrot.slane %v2058, 2
      %v2344 = vrot.slane %v2059, 2
      %v2345 = vsel %vm616, %v2343, %v2344
      %v2346 = vrot.slane %v2060, 2
      %v2347 = vsel %vm616, %v2344, %v2346
      %v2348 = vrot.slane %v2061, 2
      %v2349 = vrot.slane %v2062, 2
      %v2350 = vsel %vm616, %v2348, %v2349
      %v2351 = vrot.slane %v2063, 2
      %v2352 = vsel %vm616, %v2349, %v2351
      %v2353 = vrot.slane %v2064, 2
      %v2354 = vrot.slane %v2065, 2
      %v2355 = vsel %vm616, %v2353, %v2354
      %v2356 = vrot.slane %v2066, 2
      %v2357 = vsel %vm616, %v2354, %v2356
      %v2358 = vrot.slane %v2067, 2
      %v2359 = vrot.slane %v2068, 2
      %v2360 = vsel %vm616, %v2358, %v2359
      %v2361 = vrot.slane %v2069, 2
      %v2362 = vsel %vm616, %v2359, %v2361
      %v2363 = vrot.slane %v2070, 2
      %v2364 = vrot.slane %v2071, 2
      %v2365 = vsel %vm616, %v2363, %v2364
      %v2366 = vrot.slane %v2072, 2
      %v2367 = vsel %vm616, %v2364, %v2366
      %v2368 = vrot.slane %v2073, 2
      %v2369 = vrot.slane %v2074, 2
      %v2370 = vsel %vm616, %v2368, %v2369
      %v2371 = vrot.slane %v2075, 2
      %v2372 = vsel %vm616, %v2369, %v2371
      %v2373 = vrot.slane %v2076, 2
      %v2374 = vrot.slane %v2077, 2
      %v2375 = vsel %vm616, %v2373, %v2374
      %v2376 = vrot.slane %v2078, 2
      %v2377 = vsel %vm616, %v2374, %v2376
      %v2378 = vrot.slane %v2079, 2
      %v2379 = vrot.slane %v2080, 2
      %v2380 = vsel %vm616, %v2378, %v2379
      %v2381 = vrot.slane %v2081, 2
      %v2382 = vsel %vm616, %v2379, %v2381
      %v2383 = vrot.slane %v2082, 2
      %v2384 = vrot.slane %v2083, 2
      %v2385 = vsel %vm616, %v2383, %v2384
      %v2386 = vrot.slane %v2084, 2
      %v2387 = vsel %vm616, %v2384, %v2386
      %v2388 = vrot.slane %v2085, 2
      %v2389 = vrot.slane %v2086, 2
      %v2390 = vsel %vm616, %v2388, %v2389
      %v2391 = vrot.slane %v2087, 2
      %v2392 = vsel %vm616, %v2389, %v2391
      %v2393 = vrot.slane %v2088, 2
      %v2394 = vrot.slane %v2089, 2
      %v2395 = vsel %vm616, %v2393, %v2394
      %v2396 = vrot.slane %v2090, 2
      %v2397 = vsel %vm616, %v2394, %v2396
      %v2398 = vrot.slane %v2091, 2
      %v2399 = vrot.slane %v2092, 2
      %v2400 = vsel %vm616, %v2398, %v2399
      %v2401 = vrot.slane %v2093, 2
      %v2402 = vsel %vm616, %v2399, %v2401
      %v2403 = vrot.slane %v2094, 2
      %v2404 = vrot.slane %v2095, 2
      %v2405 = vsel %vm616, %v2403, %v2404
      %v2406 = vrot.slane %v2096, 2
      %v2407 = vsel %vm616, %v2404, %v2406
      %v2408 = vrot.slane %v2097, 2
      %v2409 = vrot.slane %v2098, 2
      %v2410 = vsel %vm616, %v2408, %v2409
      %v2411 = vrot.slane %v2099, 2
      %v2412 = vsel %vm616, %v2409, %v2411
      %v2413 = vrot.slane %v2100, 2
      %v2414 = vrot.slane %v2101, 2
      %v2415 = vsel %vm616, %v2413, %v2414
      %v2416 = vrot.slane %v2102, 2
      %v2417 = vsel %vm616, %v2414, %v2416
      %2418 = vrot.lane.b32.xlu0 %v2340, 8
      %v2419 = vpop.permute.xlu0 %2418
      %2420 = vrot.lane.b32.xlu0 %v2342, 8
      %v2421 = vpop.permute.xlu0 %2420
      %2422 = vrot.lane.b32.xlu0 %v2345, 8
      %v2423 = vpop.permute.xlu0 %2422
      %2424 = vrot.lane.b32.xlu0 %v2347, 8
      %v2425 = vpop.permute.xlu0 %2424
      %2426 = vrot.lane.b32.xlu0 %v2350, 8
      %v2427 = vpop.permute.xlu0 %2426
      %2428 = vrot.lane.b32.xlu0 %v2352, 8
      %v2429 = vpop.permute.xlu0 %2428
      %2430 = vrot.lane.b32.xlu0 %v2355, 8
      %v2431 = vpop.permute.xlu0 %2430
      %2432 = vrot.lane.b32.xlu0 %v2357, 8
      %v2433 = vpop.permute.xlu0 %2432
      %2434 = vrot.lane.b32.xlu0 %v2360, 8
      %v2435 = vpop.permute.xlu0 %2434
      %2436 = vrot.lane.b32.xlu0 %v2362, 8
      %v2437 = vpop.permute.xlu0 %2436
      %2438 = vrot.lane.b32.xlu0 %v2365, 8
      %v2439 = vpop.permute.xlu0 %2438
      %2440 = vrot.lane.b32.xlu0 %v2367, 8
      %v2441 = vpop.permute.xlu0 %2440
      %2442 = vrot.lane.b32.xlu0 %v2370, 8
      %v2443 = vpop.permute.xlu0 %2442
      %2444 = vrot.lane.b32.xlu0 %v2372, 8
      %v2445 = vpop.permute.xlu0 %2444
      %2446 = vrot.lane.b32.xlu0 %v2375, 8
      %v2447 = vpop.permute.xlu0 %2446
      %2448 = vrot.lane.b32.xlu0 %v2377, 8
      %v2449 = vpop.permute.xlu0 %2448
      %2450 = vrot.lane.b32.xlu0 %v2380, 8
      %v2451 = vpop.permute.xlu0 %2450
      %2452 = vrot.lane.b32.xlu0 %v2382, 8
      %v2453 = vpop.permute.xlu0 %2452
      %2454 = vrot.lane.b32.xlu0 %v2385, 8
      %v2455 = vpop.permute.xlu0 %2454
      %2456 = vrot.lane.b32.xlu0 %v2387, 8
      %v2457 = vpop.permute.xlu0 %2456
      %2458 = vrot.lane.b32.xlu0 %v2390, 8
      %v2459 = vpop.permute.xlu0 %2458
      %2460 = vrot.lane.b32.xlu0 %v2392, 8
      %v2461 = vpop.permute.xlu0 %2460
      %2462 = vrot.lane.b32.xlu0 %v2395, 8
      %v2463 = vpop.permute.xlu0 %2462
      %2464 = vrot.lane.b32.xlu0 %v2397, 8
      %v2465 = vpop.permute.xlu0 %2464
      %2466 = vrot.lane.b32.xlu0 %v2400, 8
      %v2467 = vpop.permute.xlu0 %2466
      %2468 = vrot.lane.b32.xlu0 %v2402, 8
      %v2469 = vpop.permute.xlu0 %2468
      %2470 = vrot.lane.b32.xlu0 %v2405, 8
      %v2471 = vpop.permute.xlu0 %2470
      %2472 = vrot.lane.b32.xlu0 %v2407, 8
      %v2473 = vpop.permute.xlu0 %2472
      %2474 = vrot.lane.b32.xlu0 %v2410, 8
      %v2475 = vpop.permute.xlu0 %2474
      %2476 = vrot.lane.b32.xlu0 %v2412, 8
      %v2477 = vpop.permute.xlu0 %2476
      %2478 = vrot.lane.b32.xlu0 %v2415, 8
      %v2479 = vpop.permute.xlu0 %2478
      %2480 = vrot.lane.b32.xlu0 %v2417, 8
      %v2481 = vpop.permute.xlu0 %2480
      %2516 = vrot.lane.b32.xlu0 %v2058, 12
      %v2517 = vpop.permute.xlu0 %2516
      %2518 = vrot.lane.b32.xlu0 %v2059, 12
      %v2519 = vpop.permute.xlu0 %2518
      %2520 = vrot.lane.b32.xlu0 %v2061, 12
      %v2521 = vpop.permute.xlu0 %2520
      %2522 = vrot.lane.b32.xlu0 %v2062, 12
      %v2523 = vpop.permute.xlu0 %2522
      %2524 = vrot.lane.b32.xlu0 %v2064, 12
      %v2525 = vpop.permute.xlu0 %2524
      %2526 = vrot.lane.b32.xlu0 %v2065, 12
      %v2527 = vpop.permute.xlu0 %2526
      %2528 = vrot.lane.b32.xlu0 %v2067, 12
      %v2529 = vpop.permute.xlu0 %2528
      %2530 = vrot.lane.b32.xlu0 %v2068, 12
      %v2531 = vpop.permute.xlu0 %2530
      %2532 = vrot.lane.b32.xlu0 %v2070, 12
      %v2533 = vpop.permute.xlu0 %2532
      %2534 = vrot.lane.b32.xlu0 %v2071, 12
      %v2535 = vpop.permute.xlu0 %2534
      %2536 = vrot.lane.b32.xlu0 %v2073, 12
      %v2537 = vpop.permute.xlu0 %2536
      %2538 = vrot.lane.b32.xlu0 %v2074, 12
      %v2539 = vpop.permute.xlu0 %2538
      %2540 = vrot.lane.b32.xlu0 %v2076, 12
      %v2541 = vpop.permute.xlu0 %2540
      %2542 = vrot.lane.b32.xlu0 %v2077, 12
      %v2543 = vpop.permute.xlu0 %2542
      %2544 = vrot.lane.b32.xlu0 %v2079, 12
      %v2545 = vpop.permute.xlu0 %2544
      %2546 = vrot.lane.b32.xlu0 %v2080, 12
      %v2547 = vpop.permute.xlu0 %2546
      %2548 = vrot.lane.b32.xlu0 %v2082, 12
      %v2549 = vpop.permute.xlu0 %2548
      %2550 = vrot.lane.b32.xlu0 %v2083, 12
      %v2551 = vpop.permute.xlu0 %2550
      %2552 = vrot.lane.b32.xlu0 %v2085, 12
      %v2553 = vpop.permute.xlu0 %2552
      %2554 = vrot.lane.b32.xlu0 %v2086, 12
      %v2555 = vpop.permute.xlu0 %2554
      %2556 = vrot.lane.b32.xlu0 %v2088, 12
      %v2557 = vpop.permute.xlu0 %2556
      %2558 = vrot.lane.b32.xlu0 %v2089, 12
      %v2559 = vpop.permute.xlu0 %2558
      %2560 = vrot.lane.b32.xlu0 %v2091, 12
      %v2561 = vpop.permute.xlu0 %2560
      %2562 = vrot.lane.b32.xlu0 %v2092, 12
      %v2563 = vpop.permute.xlu0 %2562
      %2564 = vrot.lane.b32.xlu0 %v2094, 12
      %v2565 = vpop.permute.xlu0 %2564
      %2566 = vrot.lane.b32.xlu0 %v2095, 12
      %v2567 = vpop.permute.xlu0 %2566
      %2568 = vrot.lane.b32.xlu0 %v2097, 12
      %v2569 = vpop.permute.xlu0 %2568
      %2570 = vrot.lane.b32.xlu0 %v2098, 12
      %v2571 = vpop.permute.xlu0 %2570
      %2572 = vrot.lane.b32.xlu0 %v2100, 12
      %v2573 = vpop.permute.xlu0 %2572
      %2574 = vrot.lane.b32.xlu0 %v2101, 12
      %v2575 = vpop.permute.xlu0 %2574
      %2576 = vrot.lane.b32.xlu0 %v2103, 12
      %v2577 = vpop.permute.xlu0 %2576
      %2578 = vrot.lane.b32.xlu0 %v2104, 12
      %v2579 = vpop.permute.xlu0 %2578
      %v2613 = vrot.slane %v2103, 1
      %v2614 = vrot.slane %v2104, 1
      %v2615 = vsel %vm439, %v2613, %v2614
      %v2616 = vrot.slane %v2105, 1
      %v2617 = vsel %vm439, %v2614, %v2616
      %2618 = vrot.lane.b32.xlu0 %v2169, 16
      %v2619 = vpop.permute.xlu0 %2618
      %2620 = vrot.lane.b32.xlu0 %v2171, 16
      %v2621 = vpop.permute.xlu0 %2620
      %2622 = vrot.lane.b32.xlu0 %v2174, 16
      %v2623 = vpop.permute.xlu0 %2622
      %2624 = vrot.lane.b32.xlu0 %v2176, 16
      %v2625 = vpop.permute.xlu0 %2624
      %2626 = vrot.lane.b32.xlu0 %v2179, 16
      %v2627 = vpop.permute.xlu0 %2626
      %2628 = vrot.lane.b32.xlu0 %v2181, 16
      %v2629 = vpop.permute.xlu0 %2628
      %2630 = vrot.lane.b32.xlu0 %v2184, 16
      %v2631 = vpop.permute.xlu0 %2630
      %2632 = vrot.lane.b32.xlu0 %v2186, 16
      %v2633 = vpop.permute.xlu0 %2632
      %2634 = vrot.lane.b32.xlu0 %v2189, 16
      %v2635 = vpop.permute.xlu0 %2634
      %2636 = vrot.lane.b32.xlu0 %v2191, 16
      %v2637 = vpop.permute.xlu0 %2636
      %2638 = vrot.lane.b32.xlu0 %v2194, 16
      %v2639 = vpop.permute.xlu0 %2638
      %2640 = vrot.lane.b32.xlu0 %v2196, 16
      %v2641 = vpop.permute.xlu0 %2640
      %2642 = vrot.lane.b32.xlu0 %v2199, 16
      %v2643 = vpop.permute.xlu0 %2642
      %2644 = vrot.lane.b32.xlu0 %v2201, 16
      %v2645 = vpop.permute.xlu0 %2644
      %2646 = vrot.lane.b32.xlu0 %v2204, 16
      %v2647 = vpop.permute.xlu0 %2646
      %2648 = vrot.lane.b32.xlu0 %v2206, 16
      %v2649 = vpop.permute.xlu0 %2648
      %2650 = vrot.lane.b32.xlu0 %v2209, 16
      %v2651 = vpop.permute.xlu0 %2650
      %2652 = vrot.lane.b32.xlu0 %v2211, 16
      %v2653 = vpop.permute.xlu0 %2652
      %2654 = vrot.lane.b32.xlu0 %v2214, 16
      %v2655 = vpop.permute.xlu0 %2654
      %2656 = vrot.lane.b32.xlu0 %v2216, 16
      %v2657 = vpop.permute.xlu0 %2656
      %2658 = vrot.lane.b32.xlu0 %v2219, 16
      %v2659 = vpop.permute.xlu0 %2658
      %2660 = vrot.lane.b32.xlu0 %v2221, 16
      %v2661 = vpop.permute.xlu0 %2660
      %2662 = vrot.lane.b32.xlu0 %v2224, 16
      %v2663 = vpop.permute.xlu0 %2662
      %2664 = vrot.lane.b32.xlu0 %v2226, 16
      %v2665 = vpop.permute.xlu0 %2664
      %2666 = vrot.lane.b32.xlu0 %v2229, 16
      %v2667 = vpop.permute.xlu0 %2666
      %2668 = vrot.lane.b32.xlu0 %v2231, 16
      %v2669 = vpop.permute.xlu0 %2668
      %2670 = vrot.lane.b32.xlu0 %v2234, 16
      %v2671 = vpop.permute.xlu0 %2670
      %2672 = vrot.lane.b32.xlu0 %v2236, 16
      %v2673 = vpop.permute.xlu0 %2672
      %2674 = vrot.lane.b32.xlu0 %v2239, 16
      %v2675 = vpop.permute.xlu0 %2674
      %2676 = vrot.lane.b32.xlu0 %v2241, 16
      %v2677 = vpop.permute.xlu0 %2676
      %2678 = vrot.lane.b32.xlu0 %v2615, 16
      %v2679 = vpop.permute.xlu0 %2678
      %2680 = vrot.lane.b32.xlu0 %v2617, 16
      %v2681 = vpop.permute.xlu0 %2680
      %v2714 = vrot.slane %v2103, 2
      %v2715 = vrot.slane %v2104, 2
      %v2716 = vsel %vm616, %v2714, %v2715
      %v2717 = vrot.slane %v2105, 2
      %v2718 = vsel %vm616, %v2715, %v2717
      %2719 = vrot.lane.b32.xlu0 %v2345, 20
      %v2720 = vpop.permute.xlu0 %2719
      %2721 = vrot.lane.b32.xlu0 %v2347, 20
      %v2722 = vpop.permute.xlu0 %2721
      %2723 = vrot.lane.b32.xlu0 %v2350, 20
      %v2724 = vpop.permute.xlu0 %2723
      %2725 = vrot.lane.b32.xlu0 %v2352, 20
      %v2726 = vpop.permute.xlu0 %2725
      %2727 = vrot.lane.b32.xlu0 %v2355, 20
      %v2728 = vpop.permute.xlu0 %2727
      %2729 = vrot.lane.b32.xlu0 %v2357, 20
      %v2730 = vpop.permute.xlu0 %2729
      %2731 = vrot.lane.b32.xlu0 %v2360, 20
      %v2732 = vpop.permute.xlu0 %2731
      %2733 = vrot.lane.b32.xlu0 %v2362, 20
      %v2734 = vpop.permute.xlu0 %2733
      %2735 = vrot.lane.b32.xlu0 %v2365, 20
      %v2736 = vpop.permute.xlu0 %2735
      %2737 = vrot.lane.b32.xlu0 %v2367, 20
      %v2738 = vpop.permute.xlu0 %2737
      %2739 = vrot.lane.b32.xlu0 %v2370, 20
      %v2740 = vpop.permute.xlu0 %2739
      %2741 = vrot.lane.b32.xlu0 %v2372, 20
      %v2742 = vpop.permute.xlu0 %2741
      %2743 = vrot.lane.b32.xlu0 %v2375, 20
      %v2744 = vpop.permute.xlu0 %2743
      %2745 = vrot.lane.b32.xlu0 %v2377, 20
      %v2746 = vpop.permute.xlu0 %2745
      %2747 = vrot.lane.b32.xlu0 %v2380, 20
      %v2748 = vpop.permute.xlu0 %2747
      %2749 = vrot.lane.b32.xlu0 %v2382, 20
      %v2750 = vpop.permute.xlu0 %2749
      %2751 = vrot.lane.b32.xlu0 %v2385, 20
      %v2752 = vpop.permute.xlu0 %2751
      %2753 = vrot.lane.b32.xlu0 %v2387, 20
      %v2754 = vpop.permute.xlu0 %2753
      %2755 = vrot.lane.b32.xlu0 %v2390, 20
      %v2756 = vpop.permute.xlu0 %2755
      %2757 = vrot.lane.b32.xlu0 %v2392, 20
      %v2758 = vpop.permute.xlu0 %2757
      %2759 = vrot.lane.b32.xlu0 %v2395, 20
      %v2760 = vpop.permute.xlu0 %2759
      %2761 = vrot.lane.b32.xlu0 %v2397, 20
      %v2762 = vpop.permute.xlu0 %2761
      %2763 = vrot.lane.b32.xlu0 %v2400, 20
      %v2764 = vpop.permute.xlu0 %2763
      %2765 = vrot.lane.b32.xlu0 %v2402, 20
      %v2766 = vpop.permute.xlu0 %2765
      %2767 = vrot.lane.b32.xlu0 %v2405, 20
      %v2768 = vpop.permute.xlu0 %2767
      %2769 = vrot.lane.b32.xlu0 %v2407, 20
      %v2770 = vpop.permute.xlu0 %2769
      %2771 = vrot.lane.b32.xlu0 %v2410, 20
      %v2772 = vpop.permute.xlu0 %2771
      %2773 = vrot.lane.b32.xlu0 %v2412, 20
      %v2774 = vpop.permute.xlu0 %2773
      %2775 = vrot.lane.b32.xlu0 %v2415, 20
      %v2776 = vpop.permute.xlu0 %2775
      %2777 = vrot.lane.b32.xlu0 %v2417, 20
      %v2778 = vpop.permute.xlu0 %2777
      %2779 = vrot.lane.b32.xlu0 %v2716, 20
      %v2780 = vpop.permute.xlu0 %2779
      %2781 = vrot.lane.b32.xlu0 %v2718, 20
      %v2782 = vpop.permute.xlu0 %2781
      %2817 = vrot.lane.b32.xlu0 %v2061, 24
      %v2818 = vpop.permute.xlu0 %2817
      %2819 = vrot.lane.b32.xlu0 %v2062, 24
      %v2820 = vpop.permute.xlu0 %2819
      %2821 = vrot.lane.b32.xlu0 %v2064, 24
      %v2822 = vpop.permute.xlu0 %2821
      %2823 = vrot.lane.b32.xlu0 %v2065, 24
      %v2824 = vpop.permute.xlu0 %2823
      %2825 = vrot.lane.b32.xlu0 %v2067, 24
      %v2826 = vpop.permute.xlu0 %2825
      %2827 = vrot.lane.b32.xlu0 %v2068, 24
      %v2828 = vpop.permute.xlu0 %2827
      %2829 = vrot.lane.b32.xlu0 %v2070, 24
      %v2830 = vpop.permute.xlu0 %2829
      %2831 = vrot.lane.b32.xlu0 %v2071, 24
      %v2832 = vpop.permute.xlu0 %2831
      %2833 = vrot.lane.b32.xlu0 %v2073, 24
      %v2834 = vpop.permute.xlu0 %2833
      %2835 = vrot.lane.b32.xlu0 %v2074, 24
      %v2836 = vpop.permute.xlu0 %2835
      %2837 = vrot.lane.b32.xlu0 %v2076, 24
      %v2838 = vpop.permute.xlu0 %2837
      %2839 = vrot.lane.b32.xlu0 %v2077, 24
      %v2840 = vpop.permute.xlu0 %2839
      %2841 = vrot.lane.b32.xlu0 %v2079, 24
      %v2842 = vpop.permute.xlu0 %2841
      %2843 = vrot.lane.b32.xlu0 %v2080, 24
      %v2844 = vpop.permute.xlu0 %2843
      %2845 = vrot.lane.b32.xlu0 %v2082, 24
      %v2846 = vpop.permute.xlu0 %2845
      %2847 = vrot.lane.b32.xlu0 %v2083, 24
      %v2848 = vpop.permute.xlu0 %2847
      %2849 = vrot.lane.b32.xlu0 %v2085, 24
      %v2850 = vpop.permute.xlu0 %2849
      %2851 = vrot.lane.b32.xlu0 %v2086, 24
      %v2852 = vpop.permute.xlu0 %2851
      %2853 = vrot.lane.b32.xlu0 %v2088, 24
      %v2854 = vpop.permute.xlu0 %2853
      %2855 = vrot.lane.b32.xlu0 %v2089, 24
      %v2856 = vpop.permute.xlu0 %2855
      %2857 = vrot.lane.b32.xlu0 %v2091, 24
      %v2858 = vpop.permute.xlu0 %2857
      %2859 = vrot.lane.b32.xlu0 %v2092, 24
      %v2860 = vpop.permute.xlu0 %2859
      %2861 = vrot.lane.b32.xlu0 %v2094, 24
      %v2862 = vpop.permute.xlu0 %2861
      %2863 = vrot.lane.b32.xlu0 %v2095, 24
      %v2864 = vpop.permute.xlu0 %2863
      %2865 = vrot.lane.b32.xlu0 %v2097, 24
      %v2866 = vpop.permute.xlu0 %2865
      %2867 = vrot.lane.b32.xlu0 %v2098, 24
      %v2868 = vpop.permute.xlu0 %2867
      %2869 = vrot.lane.b32.xlu0 %v2100, 24
      %v2870 = vpop.permute.xlu0 %2869
      %2871 = vrot.lane.b32.xlu0 %v2101, 24
      %v2872 = vpop.permute.xlu0 %2871
      %2873 = vrot.lane.b32.xlu0 %v2103, 24
      %v2874 = vpop.permute.xlu0 %2873
      %2875 = vrot.lane.b32.xlu0 %v2104, 24
      %v2876 = vpop.permute.xlu0 %2875
      %2877 = vrot.lane.b32.xlu0 %v2106, 24
      %v2878 = vpop.permute.xlu0 %2877
      %2879 = vrot.lane.b32.xlu0 %v2107, 24
      %v2880 = vpop.permute.xlu0 %2879
      %v2914 = vrot.slane %v2106, 1
      %v2915 = vrot.slane %v2107, 1
      %v2916 = vsel %vm439, %v2914, %v2915
      %v2917 = vrot.slane %v2108, 1
      %v2918 = vsel %vm439, %v2915, %v2917
      %2919 = vrot.lane.b32.xlu0 %v2174, 28
      %v2920 = vpop.permute.xlu0 %2919
      %2921 = vrot.lane.b32.xlu0 %v2176, 28
      %v2922 = vpop.permute.xlu0 %2921
      %2923 = vrot.lane.b32.xlu0 %v2179, 28
      %v2924 = vpop.permute.xlu0 %2923
      %2925 = vrot.lane.b32.xlu0 %v2181, 28
      %v2926 = vpop.permute.xlu0 %2925
      %2927 = vrot.lane.b32.xlu0 %v2184, 28
      %v2928 = vpop.permute.xlu0 %2927
      %2929 = vrot.lane.b32.xlu0 %v2186, 28
      %v2930 = vpop.permute.xlu0 %2929
      %2931 = vrot.lane.b32.xlu0 %v2189, 28
      %v2932 = vpop.permute.xlu0 %2931
      %2933 = vrot.lane.b32.xlu0 %v2191, 28
      %v2934 = vpop.permute.xlu0 %2933
      %2935 = vrot.lane.b32.xlu0 %v2194, 28
      %v2936 = vpop.permute.xlu0 %2935
      %2937 = vrot.lane.b32.xlu0 %v2196, 28
      %v2938 = vpop.permute.xlu0 %2937
      %2939 = vrot.lane.b32.xlu0 %v2199, 28
      %v2940 = vpop.permute.xlu0 %2939
      %2941 = vrot.lane.b32.xlu0 %v2201, 28
      %v2942 = vpop.permute.xlu0 %2941
      %2943 = vrot.lane.b32.xlu0 %v2204, 28
      %v2944 = vpop.permute.xlu0 %2943
      %2945 = vrot.lane.b32.xlu0 %v2206, 28
      %v2946 = vpop.permute.xlu0 %2945
      %2947 = vrot.lane.b32.xlu0 %v2209, 28
      %v2948 = vpop.permute.xlu0 %2947
      %2949 = vrot.lane.b32.xlu0 %v2211, 28
      %v2950 = vpop.permute.xlu0 %2949
      %2951 = vrot.lane.b32.xlu0 %v2214, 28
      %v2952 = vpop.permute.xlu0 %2951
      %2953 = vrot.lane.b32.xlu0 %v2216, 28
      %v2954 = vpop.permute.xlu0 %2953
      %2955 = vrot.lane.b32.xlu0 %v2219, 28
      %v2956 = vpop.permute.xlu0 %2955
      %2957 = vrot.lane.b32.xlu0 %v2221, 28
      %v2958 = vpop.permute.xlu0 %2957
      %2959 = vrot.lane.b32.xlu0 %v2224, 28
      %v2960 = vpop.permute.xlu0 %2959
      %2961 = vrot.lane.b32.xlu0 %v2226, 28
      %v2962 = vpop.permute.xlu0 %2961
      %2963 = vrot.lane.b32.xlu0 %v2229, 28
      %v2964 = vpop.permute.xlu0 %2963
      %2965 = vrot.lane.b32.xlu0 %v2231, 28
      %v2966 = vpop.permute.xlu0 %2965
      %2967 = vrot.lane.b32.xlu0 %v2234, 28
      %v2968 = vpop.permute.xlu0 %2967
      %2969 = vrot.lane.b32.xlu0 %v2236, 28
      %v2970 = vpop.permute.xlu0 %2969
      %2971 = vrot.lane.b32.xlu0 %v2239, 28
      %v2972 = vpop.permute.xlu0 %2971
      %2973 = vrot.lane.b32.xlu0 %v2241, 28
      %v2974 = vpop.permute.xlu0 %2973
      %2975 = vrot.lane.b32.xlu0 %v2615, 28
      %v2976 = vpop.permute.xlu0 %2975
      %2977 = vrot.lane.b32.xlu0 %v2617, 28
      %v2978 = vpop.permute.xlu0 %2977
      %2979 = vrot.lane.b32.xlu0 %v2916, 28
      %v2980 = vpop.permute.xlu0 %2979
      %2981 = vrot.lane.b32.xlu0 %v2918, 28
      %v2982 = vpop.permute.xlu0 %2981
      %v3015 = vrot.slane %v2106, 2
      %v3016 = vrot.slane %v2107, 2
      %v3017 = vsel %vm616, %v3015, %v3016
      %v3018 = vrot.slane %v2108, 2
      %v3019 = vsel %vm616, %v3016, %v3018
      %3020 = vrot.lane.b32.xlu0 %v2350, 32
      %v3021 = vpop.permute.xlu0 %3020
      %3022 = vrot.lane.b32.xlu0 %v2352, 32
      %v3023 = vpop.permute.xlu0 %3022
      %3024 = vrot.lane.b32.xlu0 %v2355, 32
      %v3025 = vpop.permute.xlu0 %3024
      %3026 = vrot.lane.b32.xlu0 %v2357, 32
      %v3027 = vpop.permute.xlu0 %3026
      %3028 = vrot.lane.b32.xlu0 %v2360, 32
      %v3029 = vpop.permute.xlu0 %3028
      %3030 = vrot.lane.b32.xlu0 %v2362, 32
      %v3031 = vpop.permute.xlu0 %3030
      %3032 = vrot.lane.b32.xlu0 %v2365, 32
      %v3033 = vpop.permute.xlu0 %3032
      %3034 = vrot.lane.b32.xlu0 %v2367, 32
      %v3035 = vpop.permute.xlu0 %3034
      %3036 = vrot.lane.b32.xlu0 %v2370, 32
      %v3037 = vpop.permute.xlu0 %3036
      %3038 = vrot.lane.b32.xlu0 %v2372, 32
      %v3039 = vpop.permute.xlu0 %3038
      %3040 = vrot.lane.b32.xlu0 %v2375, 32
      %v3041 = vpop.permute.xlu0 %3040
      %3042 = vrot.lane.b32.xlu0 %v2377, 32
      %v3043 = vpop.permute.xlu0 %3042
      %3044 = vrot.lane.b32.xlu0 %v2380, 32
      %v3045 = vpop.permute.xlu0 %3044
      %3046 = vrot.lane.b32.xlu0 %v2382, 32
      %v3047 = vpop.permute.xlu0 %3046
      %3048 = vrot.lane.b32.xlu0 %v2385, 32
      %v3049 = vpop.permute.xlu0 %3048
      %3050 = vrot.lane.b32.xlu0 %v2387, 32
      %v3051 = vpop.permute.xlu0 %3050
      %3052 = vrot.lane.b32.xlu0 %v2390, 32
      %v3053 = vpop.permute.xlu0 %3052
      %3054 = vrot.lane.b32.xlu0 %v2392, 32
      %v3055 = vpop.permute.xlu0 %3054
      %3056 = vrot.lane.b32.xlu0 %v2395, 32
      %v3057 = vpop.permute.xlu0 %3056
      %3058 = vrot.lane.b32.xlu0 %v2397, 32
      %v3059 = vpop.permute.xlu0 %3058
      %3060 = vrot.lane.b32.xlu0 %v2400, 32
      %v3061 = vpop.permute.xlu0 %3060
      %3062 = vrot.lane.b32.xlu0 %v2402, 32
      %v3063 = vpop.permute.xlu0 %3062
      %3064 = vrot.lane.b32.xlu0 %v2405, 32
      %v3065 = vpop.permute.xlu0 %3064
      %3066 = vrot.lane.b32.xlu0 %v2407, 32
      %v3067 = vpop.permute.xlu0 %3066
      %3068 = vrot.lane.b32.xlu0 %v2410, 32
      %v3069 = vpop.permute.xlu0 %3068
      %3070 = vrot.lane.b32.xlu0 %v2412, 32
      %v3071 = vpop.permute.xlu0 %3070
      %3072 = vrot.lane.b32.xlu0 %v2415, 32
      %v3073 = vpop.permute.xlu0 %3072
      %3074 = vrot.lane.b32.xlu0 %v2417, 32
      %v3075 = vpop.permute.xlu0 %3074
      %3076 = vrot.lane.b32.xlu0 %v2716, 32
      %v3077 = vpop.permute.xlu0 %3076
      %3078 = vrot.lane.b32.xlu0 %v2718, 32
      %v3079 = vpop.permute.xlu0 %3078
      %3080 = vrot.lane.b32.xlu0 %v3017, 32
      %v3081 = vpop.permute.xlu0 %3080
      %3082 = vrot.lane.b32.xlu0 %v3019, 32
      %v3083 = vpop.permute.xlu0 %3082
      %v3116 = vsel %vm225, %v2055, %v2243
      %v3117 = vsel %vm225, %v2056, %v2245
      %v3118 = vsel %vm225, %v2058, %v2247
      %v3119 = vsel %vm225, %v2059, %v2249
      %v3120 = vsel %vm225, %v2061, %v2251
      %v3121 = vsel %vm225, %v2062, %v2253
      %v3122 = vsel %vm225, %v2064, %v2255
      %v3123 = vsel %vm225, %v2065, %v2257
      %v3124 = vsel %vm225, %v2067, %v2259
      %v3125 = vsel %vm225, %v2068, %v2261
      %v3126 = vsel %vm225, %v2070, %v2263
      %v3127 = vsel %vm225, %v2071, %v2265
      %v3128 = vsel %vm225, %v2073, %v2267
      %v3129 = vsel %vm225, %v2074, %v2269
      %v3130 = vsel %vm225, %v2076, %v2271
      %v3131 = vsel %vm225, %v2077, %v2273
      %v3132 = vsel %vm225, %v2079, %v2275
      %v3133 = vsel %vm225, %v2080, %v2277
      %v3134 = vsel %vm225, %v2082, %v2279
      %v3135 = vsel %vm225, %v2083, %v2281
      %v3136 = vsel %vm225, %v2085, %v2283
      %v3137 = vsel %vm225, %v2086, %v2285
      %v3138 = vsel %vm225, %v2088, %v2287
      %v3139 = vsel %vm225, %v2089, %v2289
      %v3140 = vsel %vm225, %v2091, %v2291
      %v3141 = vsel %vm225, %v2092, %v2293
      %v3142 = vsel %vm225, %v2094, %v2295
      %v3143 = vsel %vm225, %v2095, %v2297
      %v3144 = vsel %vm225, %v2097, %v2299
      %v3145 = vsel %vm225, %v2098, %v2301
      %v3146 = vsel %vm225, %v2100, %v2303
      %v3147 = vsel %vm225, %v2101, %v2305
      %v3148 = vsel %vm1427, %v3116, %v2419
      %v3149 = vsel %vm1427, %v3117, %v2421
      %v3150 = vsel %vm1427, %v3118, %v2423
      %v3151 = vsel %vm1427, %v3119, %v2425
      %v3152 = vsel %vm1427, %v3120, %v2427
      %v3153 = vsel %vm1427, %v3121, %v2429
      %v3154 = vsel %vm1427, %v3122, %v2431
      %v3155 = vsel %vm1427, %v3123, %v2433
      %v3156 = vsel %vm1427, %v3124, %v2435
      %v3157 = vsel %vm1427, %v3125, %v2437
      %v3158 = vsel %vm1427, %v3126, %v2439
      %v3159 = vsel %vm1427, %v3127, %v2441
      %v3160 = vsel %vm1427, %v3128, %v2443
      %v3161 = vsel %vm1427, %v3129, %v2445
      %v3162 = vsel %vm1427, %v3130, %v2447
      %v3163 = vsel %vm1427, %v3131, %v2449
      %v3164 = vsel %vm1427, %v3132, %v2451
      %v3165 = vsel %vm1427, %v3133, %v2453
      %v3166 = vsel %vm1427, %v3134, %v2455
      %v3167 = vsel %vm1427, %v3135, %v2457
      %v3168 = vsel %vm1427, %v3136, %v2459
      %v3169 = vsel %vm1427, %v3137, %v2461
      %v3170 = vsel %vm1427, %v3138, %v2463
      %v3171 = vsel %vm1427, %v3139, %v2465
      %v3172 = vsel %vm1427, %v3140, %v2467
      %v3173 = vsel %vm1427, %v3141, %v2469
      %v3174 = vsel %vm1427, %v3142, %v2471
      %v3175 = vsel %vm1427, %v3143, %v2473
      %v3176 = vsel %vm1427, %v3144, %v2475
      %v3177 = vsel %vm1427, %v3145, %v2477
      %v3178 = vsel %vm1427, %v3146, %v2479
      %v3179 = vsel %vm1427, %v3147, %v2481
      %v3180 = vsel %vm1460, %v3148, %v2517
      %v3181 = vsel %vm1460, %v3149, %v2519
      %v3182 = vsel %vm1460, %v3150, %v2521
      %v3183 = vsel %vm1460, %v3151, %v2523
      %v3184 = vsel %vm1460, %v3152, %v2525
      %v3185 = vsel %vm1460, %v3153, %v2527
      %v3186 = vsel %vm1460, %v3154, %v2529
      %v3187 = vsel %vm1460, %v3155, %v2531
      %v3188 = vsel %vm1460, %v3156, %v2533
      %v3189 = vsel %vm1460, %v3157, %v2535
      %v3190 = vsel %vm1460, %v3158, %v2537
      %v3191 = vsel %vm1460, %v3159, %v2539
      %v3192 = vsel %vm1460, %v3160, %v2541
      %v3193 = vsel %vm1460, %v3161, %v2543
      %v3194 = vsel %vm1460, %v3162, %v2545
      %v3195 = vsel %vm1460, %v3163, %v2547
      %v3196 = vsel %vm1460, %v3164, %v2549
      %v3197 = vsel %vm1460, %v3165, %v2551
      %v3198 = vsel %vm1460, %v3166, %v2553
      %v3199 = vsel %vm1460, %v3167, %v2555
      %v3200 = vsel %vm1460, %v3168, %v2557
      %v3201 = vsel %vm1460, %v3169, %v2559
      %v3202 = vsel %vm1460, %v3170, %v2561
      %v3203 = vsel %vm1460, %v3171, %v2563
      %v3204 = vsel %vm1460, %v3172, %v2565
      %v3205 = vsel %vm1460, %v3173, %v2567
      %v3206 = vsel %vm1460, %v3174, %v2569
      %v3207 = vsel %vm1460, %v3175, %v2571
      %v3208 = vsel %vm1460, %v3176, %v2573
      %v3209 = vsel %vm1460, %v3177, %v2575
      %v3210 = vsel %vm1460, %v3178, %v2577
      %v3211 = vsel %vm1460, %v3179, %v2579
      %v3212 = vsel %vm1493, %v3180, %v2619
      %v3213 = vsel %vm1493, %v3181, %v2621
      %v3214 = vsel %vm1493, %v3182, %v2623
      %v3215 = vsel %vm1493, %v3183, %v2625
      %v3216 = vsel %vm1493, %v3184, %v2627
      %v3217 = vsel %vm1493, %v3185, %v2629
      %v3218 = vsel %vm1493, %v3186, %v2631
      %v3219 = vsel %vm1493, %v3187, %v2633
      %v3220 = vsel %vm1493, %v3188, %v2635
      %v3221 = vsel %vm1493, %v3189, %v2637
      %v3222 = vsel %vm1493, %v3190, %v2639
      %v3223 = vsel %vm1493, %v3191, %v2641
      %v3224 = vsel %vm1493, %v3192, %v2643
      %v3225 = vsel %vm1493, %v3193, %v2645
      %v3226 = vsel %vm1493, %v3194, %v2647
      %v3227 = vsel %vm1493, %v3195, %v2649
      %v3228 = vsel %vm1493, %v3196, %v2651
      %v3229 = vsel %vm1493, %v3197, %v2653
      %v3230 = vsel %vm1493, %v3198, %v2655
      %v3231 = vsel %vm1493, %v3199, %v2657
      %v3232 = vsel %vm1493, %v3200, %v2659
      %v3233 = vsel %vm1493, %v3201, %v2661
      %v3234 = vsel %vm1493, %v3202, %v2663
      %v3235 = vsel %vm1493, %v3203, %v2665
      %v3236 = vsel %vm1493, %v3204, %v2667
      %v3237 = vsel %vm1493, %v3205, %v2669
      %v3238 = vsel %vm1493, %v3206, %v2671
      %v3239 = vsel %vm1493, %v3207, %v2673
      %v3240 = vsel %vm1493, %v3208, %v2675
      %v3241 = vsel %vm1493, %v3209, %v2677
      %v3242 = vsel %vm1493, %v3210, %v2679
      %v3243 = vsel %vm1493, %v3211, %v2681
      %v3244 = vsel %vm1526, %v3212, %v2720
      %v3245 = vsel %vm1526, %v3213, %v2722
      %v3246 = vsel %vm1526, %v3214, %v2724
      %v3247 = vsel %vm1526, %v3215, %v2726
      %v3248 = vsel %vm1526, %v3216, %v2728
      %v3249 = vsel %vm1526, %v3217, %v2730
      %v3250 = vsel %vm1526, %v3218, %v2732
      %v3251 = vsel %vm1526, %v3219, %v2734
      %v3252 = vsel %vm1526, %v3220, %v2736
      %v3253 = vsel %vm1526, %v3221, %v2738
      %v3254 = vsel %vm1526, %v3222, %v2740
      %v3255 = vsel %vm1526, %v3223, %v2742
      %v3256 = vsel %vm1526, %v3224, %v2744
      %v3257 = vsel %vm1526, %v3225, %v2746
      %v3258 = vsel %vm1526, %v3226, %v2748
      %v3259 = vsel %vm1526, %v3227, %v2750
      %v3260 = vsel %vm1526, %v3228, %v2752
      %v3261 = vsel %vm1526, %v3229, %v2754
      %v3262 = vsel %vm1526, %v3230, %v2756
      %v3263 = vsel %vm1526, %v3231, %v2758
      %v3264 = vsel %vm1526, %v3232, %v2760
      %v3265 = vsel %vm1526, %v3233, %v2762
      %v3266 = vsel %vm1526, %v3234, %v2764
      %v3267 = vsel %vm1526, %v3235, %v2766
      %v3268 = vsel %vm1526, %v3236, %v2768
      %v3269 = vsel %vm1526, %v3237, %v2770
      %v3270 = vsel %vm1526, %v3238, %v2772
      %v3271 = vsel %vm1526, %v3239, %v2774
      %v3272 = vsel %vm1526, %v3240, %v2776
      %v3273 = vsel %vm1526, %v3241, %v2778
      %v3274 = vsel %vm1526, %v3242, %v2780
      %v3275 = vsel %vm1526, %v3243, %v2782
      %v3276 = vsel %vm1559, %v3244, %v2818
      %v3277 = vsel %vm1559, %v3245, %v2820
      %v3278 = vsel %vm1559, %v3246, %v2822
      %v3279 = vsel %vm1559, %v3247, %v2824
      %v3280 = vsel %vm1559, %v3248, %v2826
      %v3281 = vsel %vm1559, %v3249, %v2828
      %v3282 = vsel %vm1559, %v3250, %v2830
      %v3283 = vsel %vm1559, %v3251, %v2832
      %v3284 = vsel %vm1559, %v3252, %v2834
      %v3285 = vsel %vm1559, %v3253, %v2836
      %v3286 = vsel %vm1559, %v3254, %v2838
      %v3287 = vsel %vm1559, %v3255, %v2840
      %v3288 = vsel %vm1559, %v3256, %v2842
      %v3289 = vsel %vm1559, %v3257, %v2844
      %v3290 = vsel %vm1559, %v3258, %v2846
      %v3291 = vsel %vm1559, %v3259, %v2848
      %v3292 = vsel %vm1559, %v3260, %v2850
      %v3293 = vsel %vm1559, %v3261, %v2852
      %v3294 = vsel %vm1559, %v3262, %v2854
      %v3295 = vsel %vm1559, %v3263, %v2856
      %v3296 = vsel %vm1559, %v3264, %v2858
      %v3297 = vsel %vm1559, %v3265, %v2860
      %v3298 = vsel %vm1559, %v3266, %v2862
      %v3299 = vsel %vm1559, %v3267, %v2864
      %v3300 = vsel %vm1559, %v3268, %v2866
      %v3301 = vsel %vm1559, %v3269, %v2868
      %v3302 = vsel %vm1559, %v3270, %v2870
      %v3303 = vsel %vm1559, %v3271, %v2872
      %v3304 = vsel %vm1559, %v3272, %v2874
      %v3305 = vsel %vm1559, %v3273, %v2876
      %v3306 = vsel %vm1559, %v3274, %v2878
      %v3307 = vsel %vm1559, %v3275, %v2880
      %v3308 = vsel %vm1592, %v3276, %v2920
      %v3309 = vsel %vm1592, %v3277, %v2922
      %v3310 = vsel %vm1592, %v3278, %v2924
      %v3311 = vsel %vm1592, %v3279, %v2926
      %v3312 = vsel %vm1592, %v3280, %v2928
      %v3313 = vsel %vm1592, %v3281, %v2930
      %v3314 = vsel %vm1592, %v3282, %v2932
      %v3315 = vsel %vm1592, %v3283, %v2934
      %v3316 = vsel %vm1592, %v3284, %v2936
      %v3317 = vsel %vm1592, %v3285, %v2938
      %v3318 = vsel %vm1592, %v3286, %v2940
      %v3319 = vsel %vm1592, %v3287, %v2942
      %v3320 = vsel %vm1592, %v3288, %v2944
      %v3321 = vsel %vm1592, %v3289, %v2946
      %v3322 = vsel %vm1592, %v3290, %v2948
      %v3323 = vsel %vm1592, %v3291, %v2950
      %v3324 = vsel %vm1592, %v3292, %v2952
      %v3325 = vsel %vm1592, %v3293, %v2954
      %v3326 = vsel %vm1592, %v3294, %v2956
      %v3327 = vsel %vm1592, %v3295, %v2958
      %v3328 = vsel %vm1592, %v3296, %v2960
      %v3329 = vsel %vm1592, %v3297, %v2962
      %v3330 = vsel %vm1592, %v3298, %v2964
      %v3331 = vsel %vm1592, %v3299, %v2966
      %v3332 = vsel %vm1592, %v3300, %v2968
      %v3333 = vsel %vm1592, %v3301, %v2970
      %v3334 = vsel %vm1592, %v3302, %v2972
      %v3335 = vsel %vm1592, %v3303, %v2974
      %v3336 = vsel %vm1592, %v3304, %v2976
      %v3337 = vsel %vm1592, %v3305, %v2978
      %v3338 = vsel %vm1592, %v3306, %v2980
      %v3339 = vsel %vm1592, %v3307, %v2982
      %v3340 = vsel %vm1625, %v3308, %v3021
      %v3341 = vsel %vm1625, %v3309, %v3023
      %v3342 = vsel %vm1625, %v3310, %v3025
      %v3343 = vsel %vm1625, %v3311, %v3027
      %v3344 = vsel %vm1625, %v3312, %v3029
      %v3345 = vsel %vm1625, %v3313, %v3031
      %v3346 = vsel %vm1625, %v3314, %v3033
      %v3347 = vsel %vm1625, %v3315, %v3035
      %v3348 = vsel %vm1625, %v3316, %v3037
      %v3349 = vsel %vm1625, %v3317, %v3039
      %v3350 = vsel %vm1625, %v3318, %v3041
      %v3351 = vsel %vm1625, %v3319, %v3043
      %v3352 = vsel %vm1625, %v3320, %v3045
      %v3353 = vsel %vm1625, %v3321, %v3047
      %v3354 = vsel %vm1625, %v3322, %v3049
      %v3355 = vsel %vm1625, %v3323, %v3051
      %v3356 = vsel %vm1625, %v3324, %v3053
      %v3357 = vsel %vm1625, %v3325, %v3055
      %v3358 = vsel %vm1625, %v3326, %v3057
      %v3359 = vsel %vm1625, %v3327, %v3059
      %v3360 = vsel %vm1625, %v3328, %v3061
      %v3361 = vsel %vm1625, %v3329, %v3063
      %v3362 = vsel %vm1625, %v3330, %v3065
      %v3363 = vsel %vm1625, %v3331, %v3067
      %v3364 = vsel %vm1625, %v3332, %v3069
      %v3365 = vsel %vm1625, %v3333, %v3071
      %v3366 = vsel %vm1625, %v3334, %v3073
      %v3367 = vsel %vm1625, %v3335, %v3075
      %v3368 = vsel %vm1625, %v3336, %v3077
      %v3369 = vsel %vm1625, %v3337, %v3079
      %v3370 = vsel %vm1625, %v3338, %v3081
      %v3371 = vsel %vm1625, %v3339, %v3083
      %v3372 = vld [vmem:[%s4] sm:$0x1]
      %v3374 = vlaneseq
      %v3375 = vshrl.u32 %v3374, 7
      %v3376 = vsub.s32 0, %v3375
      %v3377 = vrot.slane %v3372, %v3376
      %v3380 = vsel %vm1665, %v3340, 0
      %v3383 = vsel %vm1665, %v3341, 0
      %v3386 = vsel %vm1665, %v3342, 0
      %v3389 = vsel %vm1665, %v3343, 0
      %v3392 = vsel %vm1665, %v3344, 0
      %v3395 = vsel %vm1665, %v3345, 0
      %v3398 = vsel %vm1665, %v3346, 0
      %v3401 = vsel %vm1665, %v3347, 0
      %v3404 = vsel %vm1665, %v3348, 0
      %v3407 = vsel %vm1665, %v3349, 0
      %v3410 = vsel %vm1665, %v3350, 0
      %v3413 = vsel %vm1665, %v3351, 0
      %v3416 = vsel %vm1665, %v3352, 0
      %v3419 = vsel %vm1665, %v3353, 0
      %v3422 = vsel %vm1665, %v3354, 0
      %v3425 = vsel %vm1665, %v3355, 0
      %v3428 = vsel %vm1665, %v3356, 0
      %v3431 = vsel %vm1665, %v3357, 0
      %v3434 = vsel %vm1665, %v3358, 0
      %v3437 = vsel %vm1665, %v3359, 0
      %v3440 = vsel %vm1665, %v3360, 0
      %v3443 = vsel %vm1665, %v3361, 0
      %v3446 = vsel %vm1665, %v3362, 0
      %v3449 = vsel %vm1665, %v3363, 0
      %v3452 = vsel %vm1665, %v3364, 0
      %v3455 = vsel %vm1665, %v3365, 0
      %v3458 = vsel %vm1665, %v3366, 0
      %v3461 = vsel %vm1665, %v3367, 0
      %v3464 = vsel %vm1665, %v3368, 0
      %v3467 = vsel %vm1665, %v3369, 0
      %v3470 = vsel %vm1665, %v3370, 0
      %v3473 = vsel %vm1665, %v3371, 0
      %v3476 = vsel %vm1762, %v2113, 0
      %3478 = vmatprep.subr.mxu0 0.0
      %3479 = vmatpush1.msra.mxu0 %v2109
      %3480 = vmatprep.subr.mxu0 0.0
      %3481 = vmatpush1.msra.mxu0 %v2110
      %3482 = vmatprep.subr.mxu0 0.0
      %3483 = vmatpush1.msra.mxu0 %v2111
      %3484 = vmatprep.subr.mxu0 0.0
      %3485 = vmatpush1.msra.mxu0 %v2112
      %3486 = vmatprep.subr.mxu0 0.0
      %3487 = vmatpush1.msra.mxu0 %v3476
      %3488 = vmatprep.subr.mxu0 0.0
      %3489 = vmatpush1.msra.mxu0 0.0
      %3490 = vmatprep.subr.mxu0 0.0
      %3491 = vmatpush1.msra.mxu0 0.0
      %3492 = vmatprep.subr.mxu0 0.0
      %3493 = vmatpush1.msra.mxu0 0.0
      %3494 = vmatprep.subr.mxu0 0.0
      %3495 = vmatpush1.msra.mxu0 0.0
      %3496 = vmatprep.subr.mxu0 0.0
      %3497 = vmatpush1.msra.mxu0 0.0
      %3498 = vmatprep.subr.mxu0 0.0
      %3499 = vmatpush1.msra.mxu0 0.0
      %3500 = vmatprep.subr.mxu0 0.0
      %3501 = vmatpush1.msra.mxu0 0.0
      %3502 = vmatprep.subr.mxu0 0.0
      %3503 = vmatpush1.msra.mxu0 0.0
      %3504 = vmatprep.subr.mxu0 0.0
      %3505 = vmatpush1.msra.mxu0 0.0
      %3506 = vmatprep.subr.mxu0 0.0
      %3507 = vmatpush1.msra.mxu0 0.0
      %3508 = vmatprep.subr.mxu0 0.0
      %3509 = vmatpush1.msra.mxu0 0.0
      %3510 = vmatprep.subr.mxu0 0.0
      %3511 = vmatpush1.msra.mxu0 0.0
      %3512 = vmatprep.subr.mxu0 0.0
      %3513 = vmatpush1.msra.mxu0 0.0
      %3514 = vmatprep.subr.mxu0 0.0
      %3515 = vmatpush1.msra.mxu0 0.0
      %3516 = vmatprep.subr.mxu0 0.0
      %3517 = vmatpush1.msra.mxu0 0.0
      %3518 = vmatprep.subr.mxu0 0.0
      %3519 = vmatpush1.msra.mxu0 0.0
      %3520 = vmatprep.subr.mxu0 0.0
      %3521 = vmatpush1.msra.mxu0 0.0
      %3522 = vmatprep.subr.mxu0 0.0
      %3523 = vmatpush1.msra.mxu0 0.0
      %3524 = vmatprep.subr.mxu0 0.0
      %3525 = vmatpush1.msra.mxu0 0.0
      %3526 = vmatprep.subr.mxu0 0.0
      %3527 = vmatpush1.msra.mxu0 0.0
      %3528 = vmatprep.subr.mxu0 0.0
      %3529 = vmatpush1.msra.mxu0 0.0
      %3530 = vmatprep.subr.mxu0 0.0
      %3531 = vmatpush1.msra.mxu0 0.0
      %3532 = vmatprep.subr.mxu0 0.0
      %3533 = vmatpush1.msra.mxu0 0.0
      %3534 = vmatprep.subr.mxu0 0.0
      %3535 = vmatpush1.msra.mxu0 0.0
      %3536 = vmatprep.subr.mxu0 0.0
      %3537 = vmatpush1.msra.mxu0 0.0
      %3538 = vmatprep.subr.mxu0 0.0
      %3539 = vmatpush1.msra.mxu0 0.0
      %3540 = vmatprep.subr.mxu0 0.0
      %3541 = vmatpush1.msra.mxu0 0.0
      %3542 = vmatprep.mubr.f32.mxu0 0.0
      %3543 = vmatmul.mubr.f32.gmra.mrb[0].mxu0 %v3380
      %v3544 = vpop.f32.mrb[0].mxu0
      %v3545 = vadd.f32 %v3377, %v3544
      %v3546 = vpop.f32.mrb[0].mxu0
      %3547 = vmatprep.mubr.f32.mxu0 0.0
      %3548 = vmatmul.mubr.f32.gmra.mrb[0].mxu0 %v3383
      %v3549 = vpop.f32.mrb[0].mxu0
      %v3550 = vadd.f32 %v3377, %v3549
      %v3551 = vpop.f32.mrb[0].mxu0
      %3552 = vmatprep.mubr.f32.mxu0 0.0
      %3553 = vmatmul.mubr.f32.gmra.mrb[0].mxu0 %v3386
      %v3554 = vpop.f32.mrb[0].mxu0
      %v3555 = vadd.f32 %v3377, %v3554
      %v3556 = vpop.f32.mrb[0].mxu0
      %3557 = vmatprep.mubr.f32.mxu0 0.0
      %3558 = vmatmul.mubr.f32.gmra.mrb[0].mxu0 %v3389
      %v3559 = vpop.f32.mrb[0].mxu0
      %v3560 = vadd.f32 %v3377, %v3559
      %v3561 = vpop.f32.mrb[0].mxu0
      %3562 = vmatprep.mubr.f32.mxu0 0.0
      %3563 = vmatmul.mubr.f32.gmra.mrb[0].mxu0 %v3392
      %v3564 = vpop.f32.mrb[0].mxu0
      %v3565 = vadd.f32 %v3377, %v3564
      %v3566 = vpop.f32.mrb[0].mxu0
      %3567 = vmatprep.mubr.f32.mxu0 0.0
      %3568 = vmatmul.mubr.f32.gmra.mrb[0].mxu0 %v3395
      %v3569 = vpop.f32.mrb[0].mxu0
      %v3570 = vadd.f32 %v3377, %v3569
      %v3571 = vpop.f32.mrb[0].mxu0
      %3572 = vmatprep.mubr.f32.mxu0 0.0
      %3573 = vmatmul.mubr.f32.gmra.mrb[0].mxu0 %v3398
      %v3574 = vpop.f32.mrb[0].mxu0
      %v3575 = vadd.f32 %v3377, %v3574
      %v3576 = vpop.f32.mrb[0].mxu0
      %3577 = vmatprep.mubr.f32.mxu0 0.0
      %3578 = vmatmul.mubr.f32.gmra.mrb[0].mxu0 %v3401
      %v3579 = vpop.f32.mrb[0].mxu0
      %v3580 = vadd.f32 %v3377, %v3579
      %v3581 = vpop.f32.mrb[0].mxu0
      %3582 = vmatprep.mubr.f32.mxu0 0.0
      %3583 = vmatmul.mubr.f32.gmra.mrb[0].mxu0 %v3404
      %v3584 = vpop.f32.mrb[0].mxu0
      %v3585 = vadd.f32 %v3377, %v3584
      %v3586 = vpop.f32.mrb[0].mxu0
      %3587 = vmatprep.mubr.f32.mxu0 0.0
      %3588 = vmatmul.mubr.f32.gmra.mrb[0].mxu0 %v3407
      %v3589 = vpop.f32.mrb[0].mxu0
      %v3590 = vadd.f32 %v3377, %v3589
      %v3591 = vpop.f32.mrb[0].mxu0
      %3592 = vmatprep.mubr.f32.mxu0 0.0
      %3593 = vmatmul.mubr.f32.gmra.mrb[0].mxu0 %v3410
      %v3594 = vpop.f32.mrb[0].mxu0
      %v3595 = vadd.f32 %v3377, %v3594
      %v3596 = vpop.f32.mrb[0].mxu0
      %3597 = vmatprep.mubr.f32.mxu0 0.0
      %3598 = vmatmul.mubr.f32.gmra.mrb[0].mxu0 %v3413
      %v3599 = vpop.f32.mrb[0].mxu0
      %v3600 = vadd.f32 %v3377, %v3599
      %v3601 = vpop.f32.mrb[0].mxu0
      %3602 = vmatprep.mubr.f32.mxu0 0.0
      %3603 = vmatmul.mubr.f32.gmra.mrb[0].mxu0 %v3416
      %v3604 = vpop.f32.mrb[0].mxu0
      %v3605 = vadd.f32 %v3377, %v3604
      %v3606 = vpop.f32.mrb[0].mxu0
      %3607 = vmatprep.mubr.f32.mxu0 0.0
      %3608 = vmatmul.mubr.f32.gmra.mrb[0].mxu0 %v3419
      %v3609 = vpop.f32.mrb[0].mxu0
      %v3610 = vadd.f32 %v3377, %v3609
      %v3611 = vpop.f32.mrb[0].mxu0
      %3612 = vmatprep.mubr.f32.mxu0 0.0
      %3613 = vmatmul.mubr.f32.gmra.mrb[0].mxu0 %v3422
      %v3614 = vpop.f32.mrb[0].mxu0
      %v3615 = vadd.f32 %v3377, %v3614
      %v3616 = vpop.f32.mrb[0].mxu0
      %3617 = vmatprep.mubr.f32.mxu0 0.0
      %3618 = vmatmul.mubr.f32.gmra.mrb[0].mxu0 %v3425
      %v3619 = vpop.f32.mrb[0].mxu0
      %v3620 = vadd.f32 %v3377, %v3619
      %v3621 = vpop.f32.mrb[0].mxu0
      %3622 = vmatprep.mubr.f32.mxu0 0.0
      %3623 = vmatmul.mubr.f32.gmra.mrb[0].mxu0 %v3428
      %v3624 = vpop.f32.mrb[0].mxu0
      %v3625 = vadd.f32 %v3377, %v3624
      %v3626 = vpop.f32.mrb[0].mxu0
      %3627 = vmatprep.mubr.f32.mxu0 0.0
      %3628 = vmatmul.mubr.f32.gmra.mrb[0].mxu0 %v3431
      %v3629 = vpop.f32.mrb[0].mxu0
      %v3630 = vadd.f32 %v3377, %v3629
      %v3631 = vpop.f32.mrb[0].mxu0
      %3632 = vmatprep.mubr.f32.mxu0 0.0
      %3633 = vmatmul.mubr.f32.gmra.mrb[0].mxu0 %v3434
      %v3634 = vpop.f32.mrb[0].mxu0
      %v3635 = vadd.f32 %v3377, %v3634
      %v3636 = vpop.f32.mrb[0].mxu0
      %3637 = vmatprep.mubr.f32.mxu0 0.0
      %3638 = vmatmul.mubr.f32.gmra.mrb[0].mxu0 %v3437
      %v3639 = vpop.f32.mrb[0].mxu0
      %v3640 = vadd.f32 %v3377, %v3639
      %v3641 = vpop.f32.mrb[0].mxu0
      %3642 = vmatprep.mubr.f32.mxu0 0.0
      %3643 = vmatmul.mubr.f32.gmra.mrb[0].mxu0 %v3440
      %v3644 = vpop.f32.mrb[0].mxu0
      %v3645 = vadd.f32 %v3377, %v3644
      %v3646 = vpop.f32.mrb[0].mxu0
      %3647 = vmatprep.mubr.f32.mxu0 0.0
      %3648 = vmatmul.mubr.f32.gmra.mrb[0].mxu0 %v3443
      %v3649 = vpop.f32.mrb[0].mxu0
      %v3650 = vadd.f32 %v3377, %v3649
      %v3651 = vpop.f32.mrb[0].mxu0
      %3652 = vmatprep.mubr.f32.mxu0 0.0
      %3653 = vmatmul.mubr.f32.gmra.mrb[0].mxu0 %v3446
      %v3654 = vpop.f32.mrb[0].mxu0
      %v3655 = vadd.f32 %v3377, %v3654
      %v3656 = vpop.f32.mrb[0].mxu0
      %3657 = vmatprep.mubr.f32.mxu0 0.0
      %3658 = vmatmul.mubr.f32.gmra.mrb[0].mxu0 %v3449
      %v3659 = vpop.f32.mrb[0].mxu0
      %v3660 = vadd.f32 %v3377, %v3659
      %v3661 = vpop.f32.mrb[0].mxu0
      %3662 = vmatprep.mubr.f32.mxu0 0.0
      %3663 = vmatmul.mubr.f32.gmra.mrb[0].mxu0 %v3452
      %v3664 = vpop.f32.mrb[0].mxu0
      %v3665 = vadd.f32 %v3377, %v3664
      %v3666 = vpop.f32.mrb[0].mxu0
      %3667 = vmatprep.mubr.f32.mxu0 0.0
      %3668 = vmatmul.mubr.f32.gmra.mrb[0].mxu0 %v3455
      %v3669 = vpop.f32.mrb[0].mxu0
      %v3670 = vadd.f32 %v3377, %v3669
      %v3671 = vpop.f32.mrb[0].mxu0
      %3672 = vmatprep.mubr.f32.mxu0 0.0
      %3673 = vmatmul.mubr.f32.gmra.mrb[0].mxu0 %v3458
      %v3674 = vpop.f32.mrb[0].mxu0
      %v3675 = vadd.f32 %v3377, %v3674
      %v3676 = vpop.f32.mrb[0].mxu0
      %3677 = vmatprep.mubr.f32.mxu0 0.0
      %3678 = vmatmul.mubr.f32.gmra.mrb[0].mxu0 %v3461
      %v3679 = vpop.f32.mrb[0].mxu0
      %v3680 = vadd.f32 %v3377, %v3679
      %v3681 = vpop.f32.mrb[0].mxu0
      %3682 = vmatprep.mubr.f32.mxu0 0.0
      %3683 = vmatmul.mubr.f32.gmra.mrb[0].mxu0 %v3464
      %v3684 = vpop.f32.mrb[0].mxu0
      %v3685 = vadd.f32 %v3377, %v3684
      %v3686 = vpop.f32.mrb[0].mxu0
      %3687 = vmatprep.mubr.f32.mxu0 0.0
      %3688 = vmatmul.mubr.f32.gmra.mrb[0].mxu0 %v3467
      %v3689 = vpop.f32.mrb[0].mxu0
      %v3690 = vadd.f32 %v3377, %v3689
      %v3691 = vpop.f32.mrb[0].mxu0
      %3692 = vmatprep.mubr.f32.mxu0 0.0
      %3693 = vmatmul.mubr.f32.gmra.mrb[0].mxu0 %v3470
      %v3694 = vpop.f32.mrb[0].mxu0
      %v3695 = vadd.f32 %v3377, %v3694
      %v3696 = vpop.f32.mrb[0].mxu0
      %3697 = vmatprep.mubr.f32.mxu0 0.0
      %3698 = vmatmul.mubr.f32.gmra.mrb[0].mxu0 %v3473
      %v3699 = vpop.f32.mrb[0].mxu0
      %v3700 = vadd.f32 %v3377, %v3699
      %v3701 = vpop.f32.mrb[0].mxu0
      %3702 = vdwg.mxu0
      %v3703 = vadd.f32 %v3545, %v268
      %v3704 = vadd.f32 %v3550, %v269
      %v3705 = vadd.f32 %v3555, %v270
      %v3706 = vadd.f32 %v3560, %v271
      %v3707 = vadd.f32 %v3565, %v272
      %v3708 = vadd.f32 %v3570, %v273
      %v3709 = vadd.f32 %v3575, %v274
      %v3710 = vadd.f32 %v3580, %v275
      %v3711 = vadd.f32 %v3585, %v276
      %v3712 = vadd.f32 %v3590, %v277
      %v3713 = vadd.f32 %v3595, %v278
      %v3714 = vadd.f32 %v3600, %v279
      %v3715 = vadd.f32 %v3605, %v280
      %v3716 = vadd.f32 %v3610, %v281
      %v3717 = vadd.f32 %v3615, %v282
      %v3718 = vadd.f32 %v3620, %v283
      %v3719 = vadd.f32 %v3625, %v284
      %v3720 = vadd.f32 %v3630, %v285
      %v3721 = vadd.f32 %v3635, %v286
      %v3722 = vadd.f32 %v3640, %v287
      %v3723 = vadd.f32 %v3645, %v288
      %v3724 = vadd.f32 %v3650, %v289
      %v3725 = vadd.f32 %v3655, %v290
      %v3726 = vadd.f32 %v3660, %v291
      %v3727 = vadd.f32 %v3665, %v292
      %v3728 = vadd.f32 %v3670, %v293
      %v3729 = vadd.f32 %v3675, %v294
      %v3730 = vadd.f32 %v3680, %v295
      %v3731 = vadd.f32 %v3685, %v296
      %v3732 = vadd.f32 %v3690, %v297
      %v3733 = vadd.f32 %v3695, %v298
      %v3734 = vadd.f32 %v3700, %v299
      %v3735 = vmax.f32 %v3703, 0.0
      %v3736 = vmax.f32 %v3704, 0.0
      %v3737 = vmax.f32 %v3705, 0.0
      %v3738 = vmax.f32 %v3706, 0.0
      %v3739 = vmax.f32 %v3707, 0.0
      %v3740 = vmax.f32 %v3708, 0.0
      %v3741 = vmax.f32 %v3709, 0.0
      %v3742 = vmax.f32 %v3710, 0.0
      %v3743 = vmax.f32 %v3711, 0.0
      %v3744 = vmax.f32 %v3712, 0.0
      %v3745 = vmax.f32 %v3713, 0.0
      %v3746 = vmax.f32 %v3714, 0.0
      %v3747 = vmax.f32 %v3715, 0.0
      %v3748 = vmax.f32 %v3716, 0.0
      %v3749 = vmax.f32 %v3717, 0.0
      %v3750 = vmax.f32 %v3718, 0.0
      %v3751 = vmax.f32 %v3719, 0.0
      %v3752 = vmax.f32 %v3720, 0.0
      %v3753 = vmax.f32 %v3721, 0.0
      %v3754 = vmax.f32 %v3722, 0.0
      %v3755 = vmax.f32 %v3723, 0.0
      %v3756 = vmax.f32 %v3724, 0.0
      %v3757 = vmax.f32 %v3725, 0.0
      %v3758 = vmax.f32 %v3726, 0.0
      %v3759 = vmax.f32 %v3727, 0.0
      %v3760 = vmax.f32 %v3728, 0.0
      %v3761 = vmax.f32 %v3729, 0.0
      %v3762 = vmax.f32 %v3730, 0.0
      %v3763 = vmax.f32 %v3731, 0.0
      %v3764 = vmax.f32 %v3732, 0.0
      %v3765 = vmax.f32 %v3733, 0.0
      %v3766 = vmax.f32 %v3734, 0.0
      %3767 = vst.msk [vmem:[%s224] sm:$0xff] %vm225, %v3735
      %3768 = vst.msk [vmem:[%s224 + $0x8] sm:$0xff] %vm225, %v3736
      %3769 = vst.msk [vmem:[%s224 + $0x10] sm:$0xff] %vm225, %v3737
      %3770 = vst.msk [vmem:[%s224 + $0x18] sm:$0xff] %vm225, %v3738
      %3771 = vst.msk [vmem:[%s224 + $0x20] sm:$0xff] %vm225, %v3739
      %3772 = vst.msk [vmem:[%s224 + $0x28] sm:$0xff] %vm225, %v3740
      %3773 = vst.msk [vmem:[%s224 + $0x30] sm:$0xff] %vm225, %v3741
      %3774 = vst.msk [vmem:[%s224 + $0x38] sm:$0xff] %vm225, %v3742
      %3775 = vst.msk [vmem:[%s224 + $0x40] sm:$0xff] %vm225, %v3743
      %3776 = vst.msk [vmem:[%s224 + $0x48] sm:$0xff] %vm225, %v3744
      %3777 = vst.msk [vmem:[%s224 + $0x50] sm:$0xff] %vm225, %v3745
      %3778 = vst.msk [vmem:[%s224 + $0x58] sm:$0xff] %vm225, %v3746
      %3779 = vst.msk [vmem:[%s224 + $0x60] sm:$0xff] %vm225, %v3747
      %3780 = vst.msk [vmem:[%s224 + $0x68] sm:$0xff] %vm225, %v3748
      %3781 = vst.msk [vmem:[%s224 + $0x70] sm:$0xff] %vm225, %v3749
      %3782 = vst.msk [vmem:[%s224 + $0x78] sm:$0xff] %vm225, %v3750
      %3783 = vst.msk [vmem:[%s224 + $0x80] sm:$0xff] %vm225, %v3751
      %3784 = vst.msk [vmem:[%s224 + $0x88] sm:$0xff] %vm225, %v3752
      %3785 = vst.msk [vmem:[%s224 + $0x90] sm:$0xff] %vm225, %v3753
      %3786 = vst.msk [vmem:[%s224 + $0x98] sm:$0xff] %vm225, %v3754
      %3787 = vst.msk [vmem:[%s224 + $0xa0] sm:$0xff] %vm225, %v3755
      %3788 = vst.msk [vmem:[%s224 + $0xa8] sm:$0xff] %vm225, %v3756
      %3789 = vst.msk [vmem:[%s224 + $0xb0] sm:$0xff] %vm225, %v3757
      %3790 = vst.msk [vmem:[%s224 + $0xb8] sm:$0xff] %vm225, %v3758
      %3791 = vst.msk [vmem:[%s224 + $0xc0] sm:$0xff] %vm225, %v3759
      %3792 = vst.msk [vmem:[%s224 + $0xc8] sm:$0xff] %vm225, %v3760
      %3793 = vst.msk [vmem:[%s224 + $0xd0] sm:$0xff] %vm225, %v3761
      %3794 = vst.msk [vmem:[%s224 + $0xd8] sm:$0xff] %vm225, %v3762
      %3795 = vst.msk [vmem:[%s224 + $0xe0] sm:$0xff] %vm225, %v3763
      %3796 = vst.msk [vmem:[%s224 + $0xe8] sm:$0xff] %vm225, %v3764
      %3797 = vst.msk [vmem:[%s224 + $0xf0] sm:$0xff] %vm225, %v3765
      %3798 = vst.msk [vmem:[%s224 + $0xf8] sm:$0xff] %vm225, %v3766
      %p3799 = scmp.lt.s32.totalorder %s16, 1
      %s3800 = scalar_select %p3799, %s16, 1
      %s3801 = smul.addr %s3800, 32
      %s3802 = smul.addr %s3801, 8
      %s3803 = scalar_lea.vmem %s5, %s3802
      // Predicated region
      $region41: #{resblock_forward.1} parent=39 // pred_check
        %p3804 = pneg %p144
      $region42: #{resblock_forward.1} parent=39 // pred_check_branch
        %3806 = sbr.rel (%p3804) target = $region44
      $region43: #{resblock_forward.1} parent=39 // pred_region
        _
      $region44: #{resblock_forward.1} parent=39 // pred_fallthru
        _
    $region40: #{resblock_forward.1} parent=5 // pred_fallthru
      _
    %p3807 = scmp.le.s32.totalorder 2, %s11
    // Predicated region
    $region45: #{resblock_forward.1} parent=5 // pred_check
      %p3808 = pneg %p3807
    $region46: #{resblock_forward.1} parent=5 // pred_check_branch
      %3810 = sbr.rel (%p3808) target = $region48
    $region47: #{resblock_forward.1} parent=5 // pred_region
      %s3811 = ssub.s32 %s11, 2
      // Predicated region
      $region49: #{resblock_forward.1} parent=47 // pred_check
        %p3812 = pneg %p150
      $region50: #{resblock_forward.1} parent=47 // pred_check_branch
        %3814 = sbr.rel (%p3812) target = $region52
      $region51: #{resblock_forward.1} parent=47 // pred_region
        %p3815 = scmp.lt.s32.totalorder %s17, 1
        %s3816 = scalar_select %p3815, %s17, 1
        %s3817 = smul.addr %s3816, 32
        %s3818 = smul.addr %s3817, 8
        %s3819 = scalar_lea.vmem %s5, %s3818
      $region52: #{resblock_forward.1} parent=47 // pred_fallthru
        _
    $region48: #{resblock_forward.1} parent=5 // pred_fallthru
      _
  $region6: #{resblock_forward.1} parent=0 // loop_footer
    %s15 = sadd.s32 1, %s11
  $region7: #{resblock_forward.1} parent=0 // loop_footer_branch
    %10 = sbr.rel target = $region3
  $region8: #{resblock_forward.1} parent=0 // loop_exit
    _

</llo_original>
